<compile_context>
chip_gen: v6e
topology: v6e:2x2x1
jax: 0.10.0
libtpu: 0.0.40
codegen_flags: <defaults>
</compile_context>

<pallas_src>
import functools

import jax
import jax.numpy as jnp
import numpy as np
from jax import lax
from jax.experimental import pallas as pl
from jax.experimental.pallas import tpu as pltpu

CIN = 1024       # ArcFace cin  (ViT-H-14 visual embedding dim)
COUT = 9691      # ArcFace cout (number of classes)
S = 30.0         # ArcFace scale
M = 0.3          # ArcFace margin
B_SUBLANE = 8    # batch padded to the 8-sublane granule (unmasked full-vreg stores)


def _select_tiling():
    """Pick (TN, weight-buffer depth) from the local TPU generation."""
    try:
        kind = jax.devices()[0].device_kind.lower()
    except Exception:
        kind = ""
    if "v7" in kind or "7x" in kind:
        # 2 TCs split the grid: 10240/1280 = 8 steps -> 4 per core (balanced);
        # a 3-deep weight buffer (3 x 5 MiB) hides DMA-issue jitter on the fast HBM.
        return 1280, 3
    if "v6" in kind:
        # 10240/2048 = 5 steps; 2 x 8 MiB weight tiles + residents (~16.3 MiB) fit
        # v6e's 32 MiB default scoped VMEM; halves per-step pipeline overhead.
        return 2048, 2
    # v5e (16 MiB default scoped VMEM) and anything unknown: 2 x 4 MiB tiles fit.
    return 1024, 2


TN, WEIGHT_BUFFERS = _select_tiling()


def _arcface_kernel(x_ref, w_ref, inv_wn_ref, inv_xn_ref, lab_ref, o_ref,
                    *, tn, s, cos_m, sin_m, use_label):
    """One grid step computes a (Bp, tn) tile of the (scaled) cosine logits.

    x_ref:      (Bp, CIN)  full feature block (resident every step)
    w_ref:      (CIN, tn)  pre-transposed weight tile (f32 or bf16, streamed)
    inv_wn_ref: (1, tn)    precomputed 1/||W_row|| for this tile (0 on padded classes)
    inv_xn_ref: (Bp, 1)    precomputed 1/||x_row||              (0 on padded rows)
    lab_ref:    (Bp, 1)    int32 labels (-1 on padded rows; only read when use_label)
    o_ref:      (Bp, tn)   output tile
    """
    j = pl.program_id(0)
    x = x_ref[...]                                   # (Bp, CIN) f32
    # Canonical contraction (last dim of x with first dim of w): no weight relayout.
    # bf16 weights are up-cast on the VPU (free under the multi-us DMA slack).
    w = w_ref[...].astype(jnp.float32)               # (CIN, tn)
    logits = jnp.dot(x, w, preferred_element_type=jnp.float32)   # (Bp, tn) on the MXU

    # cosine = logits / (||x|| * ||w||), using precomputed reciprocals (no divides).
    cos = logits * inv_xn_ref[...] * inv_wn_ref[...]

    if use_label:
        bp = x.shape[0]
        col = j * tn + lax.broadcasted_iota(jnp.int32, (bp, tn), 1)  # global class ids
        one_hot = (col == lab_ref[...]).astype(jnp.float32)          # (Bp, tn)
        # clamp for numerical safety of sqrt; semantics match (1 - cos^2)**0.5
        sin = jnp.sqrt(jnp.maximum(1.0 - cos * cos, 0.0))
        angle_sum = cos * cos_m - sin * sin_m
        cos = (angle_sum * one_hot + cos * (1.0 - one_hot)) * s

    o_ref[...] = cos


def prepare_arcface_weight(weight, dtype=jnp.float32):
    """Done ONCE at model-init time:
      - per-class inverse L2 norms in f32 (exact even when streaming dtype is bf16;
        0 on padded classes so their logits are exactly 0),
      - pad cout to a TN multiple,
      - PRE-TRANSPOSE to (CIN, cout_pad) so the kernel streams lane-dense (CIN, TN)
        tiles with the canonical contraction (no per-tile relayout)."""
    cout, cin = weight.shape
    cout_pad = pl.cdiv(cout, TN) * TN
    w_f32 = weight.astype(jnp.float32)
    w_norm = jnp.sqrt(jnp.sum(w_f32 * w_f32, axis=1))                       # (cout,)
    inv_w_norm = jnp.zeros((1, cout_pad), jnp.float32).at[0, :cout].set(
        jnp.where(w_norm == 0.0, 0.0, 1.0 / w_norm))
    w_t = jnp.zeros((cin, cout_pad), dtype).at[:, :cout].set(w_f32.T.astype(dtype))
    return w_t, inv_w_norm


def arcface_forward(x, w_t, inv_w_norm, labels=None):
    """ArcFace head.

    x:           (B, CIN) f32 features from the backbone
    w_t:         (CIN, cout_pad) pre-transposed padded weight (f32 or bf16)
    inv_w_norm:  (1, cout_pad) f32 precomputed inverse class-weight norms
    labels:      (B,) int32 or None
    returns      (B, COUT) f32
    """
    b, cin = x.shape
    cout_pad = w_t.shape[1]
    assert cout_pad % TN == 0

    # Pad batch to the 8-sublane granule for full-vreg VPU work / unmasked stores.
    b_pad = max(B_SUBLANE, pl.cdiv(b, B_SUBLANE) * B_SUBLANE)
    x_pad = jnp.zeros((b_pad, cin), jnp.float32).at[:b].set(x.astype(jnp.float32))

    # Precompute inverse feature norms (grid-invariant; 0 on padded rows).
    x_norm = jnp.sqrt(jnp.sum(x_pad * x_pad, axis=1, keepdims=True))        # (b_pad, 1)
    inv_x_norm = jnp.where(x_norm == 0.0, 0.0, 1.0 / x_norm)

    use_label = labels is not None
    if use_label:
        lab2d = jnp.full((b_pad, 1), -1, jnp.int32).at[:b, 0].set(
            labels.astype(jnp.int32))
    else:
        lab2d = jnp.full((b_pad, 1), -1, jnp.int32)  # dummy (never read inside kernel)

    kernel = functools.partial(
        _arcface_kernel, tn=TN, s=S,
        cos_m=float(np.cos(M)), sin_m=float(np.sin(M)), use_label=use_label)

    w_bytes = cout_pad * cin * jnp.dtype(w_t.dtype).itemsize
    cost = pl.CostEstimate(
        flops=2 * b_pad * cin * cout_pad,
        transcendentals=(b_pad * cout_pad) if use_label else 0,
        bytes_accessed=(w_bytes                      # weight stream (dominant)
                        + b_pad * cin * 4            # features
                        + b_pad * cout_pad * 4       # output
                        + cout_pad * 4               # inv class norms
                        + 2 * b_pad * 4),            # inv x norms + labels
    )

    def build_call(weight_buffers):
        if weight_buffers > 2:
            w_spec = pl.BlockSpec((cin, TN), lambda j: (0, j),
                                  pipeline_mode=pl.Buffered(weight_buffers))
        else:
            w_spec = pl.BlockSpec((cin, TN), lambda j: (0, j))
        return pl.pallas_call(
            kernel,
            out_shape=jax.ShapeDtypeStruct((b_pad, cout_pad), jnp.float32),
            grid_spec=pltpu.PrefetchScalarGridSpec(
                num_scalar_prefetch=0,
                grid=(cout_pad // TN,),
                in_specs=[
                    pl.BlockSpec((b_pad, cin), lambda j: (0, 0)),   # features, resident
                    w_spec,                                         # weight tile, streamed
                    pl.BlockSpec((1, TN), lambda j: (0, j)),        # 1/||w|| tile
                    pl.BlockSpec((b_pad, 1), lambda j: (0, 0)),     # 1/||x||, resident
                    pl.BlockSpec((b_pad, 1), lambda j: (0, 0)),     # labels, resident
                ],
                out_specs=pl.BlockSpec((b_pad, TN), lambda j: (0, j)),
            ),
            compiler_params=pltpu.CompilerParams(dimension_semantics=("parallel",)),
            cost_estimate=cost,
        )

    args = (x_pad, w_t, inv_w_norm, inv_x_norm, lab2d)
    if WEIGHT_BUFFERS > 2:
        try:
            out = build_call(WEIGHT_BUFFERS)(*args)
        except Exception:
            # pipeline_mode / Buffered unsupported on this jax+libtpu: plain 2-deep.
            out = build_call(2)(*args)
    else:
        out = build_call(2)(*args)

    return out[:b, :COUT]


def arcface_reference(x, weight, labels=None):
    """Pure-JAX reference mirroring the PyTorch ArcFace.forward."""
    w_l2 = jnp.linalg.norm(weight, axis=1, keepdims=True).T      # (1, COUT)
    x_l2 = jnp.linalg.norm(x, axis=1, keepdims=True)             # (B, 1)
    cos = (x @ weight.T) / (x_l2 * w_l2)
    if labels is not None:
        one_hot = jax.nn.one_hot(labels, COUT, dtype=cos.dtype)
        sin = jnp.sqrt(jnp.maximum(1.0 - cos**2, 0.0))
        angle_sum = cos * np.cos(M) - sin * np.sin(M)
        cos = angle_sum * one_hot + cos * (1 - one_hot)
        cos = cos * S
    return cos


if __name__ == "__main__":
    key = jax.random.PRNGKey(0)
    k_x, k_w, k_l = jax.random.split(key, 3)

    B = 2
    # Backbone output stand-in: 1024-d feature per image (see TODO(synk) above).
    x = jax.random.normal(k_x, (B, CIN), dtype=jnp.float32)
    # nn.Linear(1024, 9691, bias=False) default init: U(-1/sqrt(cin), 1/sqrt(cin)).
    bound = 1.0 / np.sqrt(CIN)
    weight = jax.random.uniform(k_w, (COUT, CIN), jnp.float32, -bound, bound)
    labels = jax.random.randint(k_l, (B,), 0, COUT, dtype=jnp.int32)

    # One-time weight preparation (model-init cost, not per-call).
    w_t32, inv_w_norm = prepare_arcface_weight(weight, jnp.float32)
    w_t32 = jax.block_until_ready(w_t32)
    inv_w_norm = jax.block_until_ready(inv_w_norm)

    # Labeled (training) path: f32 weights, tight tolerance.
    out = jax.block_until_ready(arcface_forward(x, w_t32, inv_w_norm, labels))
    ref = arcface_reference(x, weight, labels)
    assert out.shape == (B, COUT)
    np.testing.assert_allclose(np.asarray(out), np.asarray(ref), rtol=1e-4, atol=1e-3)

    # Label-free (inference) path with f32 weights.
    out_nolab = jax.block_until_ready(arcface_forward(x, w_t32, inv_w_norm, None))
    ref_nolab = arcface_reference(x, weight, None)
    np.testing.assert_allclose(np.asarray(out_nolab), np.asarray(ref_nolab),
                               rtol=1e-4, atol=1e-3)

    # Label-free inference path with a bf16 weight copy: halves the HBM-bound weight
    # stream (~2x whole-kernel throughput); norms stay f32 so only the dot product
    # sees bf16 rounding (~1e-4 abs error on the unscaled cosine).
    w_t16, inv_w_norm16 = prepare_arcface_weight(weight, jnp.bfloat16)
    out_bf16 = jax.block_until_ready(arcface_forward(x, w_t16, inv_w_norm16, None))
    np.testing.assert_allclose(np.asarray(out_bf16), np.asarray(ref_nolab),
                               rtol=0.0, atol=2e-3)

    print("KERNEL_OK")
</pallas_src>

<mosaic_0001>
module attributes {stable_mosaic.version = 11 : i64} {
  func.func @_arcface_kernel(%arg0: i32, %arg1: memref<8x1024xf32, #tpu.memory_space<vmem>>, %arg2: memref<1024x1024xf32, #tpu.memory_space<vmem>>, %arg3: memref<1x1024xf32, #tpu.memory_space<vmem>>, %arg4: memref<8x1xf32, #tpu.memory_space<vmem>>, %arg5: memref<8x1xi32, #tpu.memory_space<vmem>>, %arg6: memref<8x1024xf32, #tpu.memory_space<vmem>>) attributes {dimension_semantics = [#tpu.dimension_semantics<parallel>], iteration_bounds = array<i64: 10>, scalar_prefetch = 0 : i64, scratch_operands = 0 : i64, tpu.core_type = #tpu.core_type<tc>, window_params = [{pipeline_mode = #tpu.pipeline_mode<synchronous>, transform_indices = @transform_0, window_bounds = array<i64: 8, 1024>}, {transform_indices = @transform_1, window_bounds = array<i64: 1024, 1024>}, {transform_indices = @transform_2, window_bounds = array<i64: 1, 1024>}, {pipeline_mode = #tpu.pipeline_mode<synchronous>, transform_indices = @transform_3, window_bounds = array<i64: 8, 1>}, {pipeline_mode = #tpu.pipeline_mode<synchronous>, transform_indices = @transform_4, window_bounds = array<i64: 8, 1>}, {transform_indices = @transform_5, window_bounds = array<i64: 8, 1024>}]} {
    %c0 = arith.constant 0 : index
    %c0_0 = arith.constant 0 : index
    %0 = vector.load %arg1[%c0, %c0_0] : memref<8x1024xf32, #tpu.memory_space<vmem>>, vector<8x1024xf32>
    %c0_1 = arith.constant 0 : index
    %c0_2 = arith.constant 0 : index
    %1 = vector.load %arg2[%c0_1, %c0_2] : memref<1024x1024xf32, #tpu.memory_space<vmem>>, vector<1024x1024xf32>
    %cst = arith.constant dense<0.000000e+00> : vector<8x1024xf32>
    %2 = tpu.matmul %0, %1, %cst {dimension_numbers = #tpu.dot_dimension_numbers<[1], [0], [0], [1], [0, 0, 1, 1], [], []>} : vector<8x1024xf32>, vector<1024x1024xf32>, vector<8x1024xf32> -> vector<8x1024xf32>
    %c0_3 = arith.constant 0 : index
    %c0_4 = arith.constant 0 : index
    %3 = vector.load %arg4[%c0_3, %c0_4] : memref<8x1xf32, #tpu.memory_space<vmem>>, vector<8x1xf32>
    %4 = vector.broadcast %3 : vector<8x1xf32> to vector<8x1024xf32>
    %5 = arith.mulf %2, %4 : vector<8x1024xf32>
    %c0_5 = arith.constant 0 : index
    %c0_6 = arith.constant 0 : index
    %6 = vector.load %arg3[%c0_5, %c0_6] : memref<1x1024xf32, #tpu.memory_space<vmem>>, vector<1x1024xf32>
    %7 = vector.broadcast %6 : vector<1x1024xf32> to vector<8x1024xf32>
    %8 = arith.mulf %5, %7 : vector<8x1024xf32>
    %c1024_i32 = arith.constant 1024 : i32
    %9 = arith.muli %arg0, %c1024_i32 : i32
    %10 = tpu.iota {dimensions = array<i32: 1>} : vector<8x1024xi32>
    %11 = vector.broadcast %9 : i32 to vector<8x1024xi32>
    %12 = arith.addi %11, %10 : vector<8x1024xi32>
    %c0_7 = arith.constant 0 : index
    %c0_8 = arith.constant 0 : index
    %13 = vector.load %arg5[%c0_7, %c0_8] : memref<8x1xi32, #tpu.memory_space<vmem>>, vector<8x1xi32>
    %14 = vector.broadcast %13 : vector<8x1xi32> to vector<8x1024xi32>
    %15 = arith.cmpi eq, %12, %14 : vector<8x1024xi32>
    %16 = arith.extui %15 : vector<8x1024xi1> to vector<8x1024xi32>
    %17 = arith.sitofp %16 : vector<8x1024xi32> to vector<8x1024xf32>
    %18 = arith.mulf %8, %8 : vector<8x1024xf32>
    %cst_9 = arith.constant 1.000000e+00 : f32
    %19 = vector.broadcast %cst_9 : f32 to vector<8x1024xf32>
    %20 = arith.subf %19, %18 : vector<8x1024xf32>
    %cst_10 = arith.constant 0.000000e+00 : f32
    %21 = vector.broadcast %cst_10 : f32 to vector<8x1024xf32>
    %22 = arith.maximumf %20, %21 : vector<8x1024xf32>
    %23 = math.sqrt %22 : vector<8x1024xf32>
    %cst_11 = arith.constant 0.955336511 : f32
    %24 = vector.broadcast %cst_11 : f32 to vector<8x1024xf32>
    %25 = arith.mulf %8, %24 : vector<8x1024xf32>
    %cst_12 = arith.constant 0.295520216 : f32
    %26 = vector.broadcast %cst_12 : f32 to vector<8x1024xf32>
    %27 = arith.mulf %23, %26 : vector<8x1024xf32>
    %28 = arith.subf %25, %27 : vector<8x1024xf32>
    %29 = arith.mulf %28, %17 : vector<8x1024xf32>
    %cst_13 = arith.constant 1.000000e+00 : f32
    %30 = vector.broadcast %cst_13 : f32 to vector<8x1024xf32>
    %31 = arith.subf %30, %17 : vector<8x1024xf32>
    %32 = arith.mulf %8, %31 : vector<8x1024xf32>
    %33 = arith.addf %29, %32 : vector<8x1024xf32>
    %cst_14 = arith.constant 3.000000e+01 : f32
    %34 = vector.broadcast %cst_14 : f32 to vector<8x1024xf32>
    %35 = arith.mulf %33, %34 : vector<8x1024xf32>
    %c0_15 = arith.constant 0 : index
    %c0_16 = arith.constant 0 : index
    %36 = vector.load %arg6[%c0_15, %c0_16] : memref<8x1024xf32, #tpu.memory_space<vmem>>, vector<8x1024xf32>
    tpu.vector_store %arg6[%c0_15, %c0_16], %35 {strides = array<i32>} : memref<8x1024xf32, #tpu.memory_space<vmem>>, vector<8x1024xf32>,
    return
  }
  func.func @transform_0(%arg0: i32) -> (i32, i32) {
    %c0_i32 = arith.constant 0 : i32
    %c0_i32_0 = arith.constant 0 : i32
    %c0_i32_1 = arith.constant 0 : i32
    return %c0_i32, %c0_i32_0 : i32, i32
  }
  func.func @transform_1(%arg0: i32) -> (i32, i32) {
    %c0_i32 = arith.constant 0 : i32
    %c0_i32_0 = arith.constant 0 : i32
    return %c0_i32, %arg0 : i32, i32
  }
  func.func @transform_2(%arg0: i32) -> (i32, i32) {
    %c0_i32 = arith.constant 0 : i32
    %c0_i32_0 = arith.constant 0 : i32
    return %c0_i32, %arg0 : i32, i32
  }
  func.func @transform_3(%arg0: i32) -> (i32, i32) {
    %c0_i32 = arith.constant 0 : i32
    %c0_i32_0 = arith.constant 0 : i32
    %c0_i32_1 = arith.constant 0 : i32
    return %c0_i32, %c0_i32_0 : i32, i32
  }
  func.func @transform_4(%arg0: i32) -> (i32, i32) {
    %c0_i32 = arith.constant 0 : i32
    %c0_i32_0 = arith.constant 0 : i32
    %c0_i32_1 = arith.constant 0 : i32
    return %c0_i32, %c0_i32_0 : i32, i32
  }
  func.func @transform_5(%arg0: i32) -> (i32, i32) {
    %c0_i32 = arith.constant 0 : i32
    %c0_i32_0 = arith.constant 0 : i32
    return %c0_i32, %arg0 : i32, i32
  }
}

</mosaic_0001>

<llo_original>
// kernel: tpu_custom_call.1
$region0: #{tpu_custom_call.1}
  #allocation0 [shape = 'u32[]', space=smem, size = 0x4, offset = 0x4, fixed_abs, tag = 'smem constant byte address 0x4 - core index']
  #allocation1 [shape = 'u32[144,128]{1,0:T(1,128)}', space=vmem, size = 0x12000, scoped, tag = 'internal scratch']
  %s0 = inlined_call_operand.hbm [shape: f32[8,1024], index: 0, kind: input, shape index: {}]
  %s1 = inlined_call_operand.hbm [shape: f32[1024,10240], index: 1, kind: input, shape index: {}]
  %s2 = inlined_call_operand.hbm [shape: f32[1,10240], index: 2, kind: input, shape index: {}]
  %s3 = inlined_call_operand.vmem [shape: f32[8,1], index: 3, kind: input, shape index: {}]
  %s4 = inlined_call_operand.vmem [shape: s32[8,1], index: 4, kind: input, shape index: {}]
  %s5 = inlined_call_operand.hbm [shape: f32[8,10240], index: 5, kind: output, shape index: {}]
  %s6 = sld [smem:[#allocation0]]
  $region65: #{tpu_custom_call.1} parent=0
    _
  %s8 = ssub.s32 1, %s6
  %s9 = scalar_select 0, %s8, %s6
  $region1: #{tpu_custom_call.1} parent=0
    #allocation2 [shape = 'u8[32768]{0}', space=vmem, size = 0x8000, scoped, tag = 'input window, operand 0, single buffered']
    #allocation3 [shape = 's32[2]{0}', space=sflag, size = 0x8, scoped, tag = 'scoped memory for tpu_custom_call.1']
    #allocation4 [shape = 's32[2]{0}', space=sflag, size = 0x8, scoped, tag = 'scoped memory for tpu_custom_call.1']
    #allocation5 [shape = 'u8[8388608]{0}', space=vmem, size = 0x800000, scoped, tag = 'input window, operand 1']
    #allocation6 [shape = 's32[2]{0}', space=sflag, size = 0x8, scoped, tag = 'scoped memory for tpu_custom_call.1']
    #allocation7 [shape = 'u8[8192]{0}', space=vmem, size = 0x2000, scoped, tag = 'input window, operand 2']
    #allocation8 [shape = 'u8[65536]{0}', space=vmem, size = 0x10000, scoped, tag = 'output window, operand 0']
    %10 = vsyncpa [#allocation3], 0
    %11 = vsyncpa [#allocation6], 0
    %s12 = scalar_lea.sflag [#allocation6], 1
    %13 = vsyncpa %s12, 0
    %14 = vsyncpa [#allocation4], 0
    %s15 = scalar_lea.sflag [#allocation4], 1
    %16 = vsyncpa %s15, 0
    loop: start=0, step=1, limit=12
    $region2: #{tpu_custom_call.1} parent=1 // loop_pre_header
      _
    $region3: #{tpu_custom_call.1} parent=1 // loop_header
      %s18 = sphi 0, %s22
      %p19 = scmp.ge.s32.totalorder %s18, 12
      %s26 = sphi 0, %s26
      %s28 = sphi 0, %s26
      %s29 = sphi 0, %s28
      %s43 = sphi 0, %s29
      %s49 = sphi 0, %s51
      %s52 = sphi 0, %s49
      %s53 = sphi 0, %s52
      %s69 = sphi 0, %s53
      %s75 = sphi 0, %s77
      %s78 = sphi 0, %s75
      %s79 = sphi 0, %s78
      %s95 = sphi 0, %s79
      %s99 = sphi 0, %s99
      %s101 = sphi 0, %s99
      %s102 = sphi 0, %s101
      %s116 = sphi 0, %s102
      %s120 = sphi 0, %s120
      %s122 = sphi 0, %s120
      %s123 = sphi 0, %s122
      %s137 = sphi 0, %s123
      %s143 = sphi 0, %s145
      %s146 = sphi 0, %s143
      %s147 = sphi 0, %s146
      %s163 = sphi 0, %s147
    $region4: #{tpu_custom_call.1} parent=1 // loop_header_branch
      %21 = sbr.rel (%p19) target = $region8
    $region5: #{tpu_custom_call.1} parent=1 // loop_body
      %s23 = ssub.s32 %s18, 1
      %s24 = ssub.s32 %s18, 2
      %s25 = sadd.s32 %s18, 1
      %s27 = sadd.s32 %s26, 1
      %p30 = scmp.eq.s32.totalorder %s18, 9
      %p31 = scmp.ne.s32.totalorder %s26, %s28
      %p32 = scmp.eq.s32.totalorder %s18, 0
      %p33 = por %p31, %p32
      %p34 = scmp.ne.s32.totalorder %s26, %s28
      %p35 = scmp.eq.s32.totalorder %s23, 9
      %p36 = por %p34, %p35
      %p37 = scmp.ne.s32.totalorder %s28, %s29
      %p38 = scmp.eq.s32.totalorder %s23, 0
      %p39 = por %p37, %p38
      %p40 = scmp.ne.s32.totalorder %s28, %s29
      %p41 = scmp.eq.s32.totalorder %s24, 9
      %p42 = por %p40, %p41
      %p44 = scmp.ne.s32.totalorder %s29, %s43
      %p45 = scmp.eq.s32.totalorder %s24, 0
      %p46 = por %p44, %p45
      %s47 = ssub.s32 %s18, %s25
      %p48 = scmp.eq.s32.totalorder %s47, 0
      %s50 = sadd.s32 %s49, 1
      %s51 = scalar_select %p48, %s49, %s50
      %p54 = pneg %p48
      %p55 = scmp.eq.s32.totalorder %s18, 9
      %p56 = por %p54, %p55
      %p57 = scmp.ne.s32.totalorder %s49, %s52
      %p58 = scmp.eq.s32.totalorder %s18, 0
      %p59 = por %p57, %p58
      %p60 = scmp.ne.s32.totalorder %s49, %s52
      %p61 = scmp.eq.s32.totalorder %s23, 9
      %p62 = por %p60, %p61
      %p63 = scmp.ne.s32.totalorder %s52, %s53
      %p64 = scmp.eq.s32.totalorder %s23, 0
      %p65 = por %p63, %p64
      %p66 = scmp.ne.s32.totalorder %s52, %s53
      %p67 = scmp.eq.s32.totalorder %s24, 9
      %p68 = por %p66, %p67
      %p70 = scmp.ne.s32.totalorder %s53, %s69
      %p71 = scmp.eq.s32.totalorder %s24, 0
      %p72 = por %p70, %p71
      %s73 = ssub.s32 %s18, %s25
      %p74 = scmp.eq.s32.totalorder %s73, 0
      %s76 = sadd.s32 %s75, 1
      %s77 = scalar_select %p74, %s75, %s76
      %p80 = pneg %p74
      %p81 = scmp.eq.s32.totalorder %s18, 9
      %p82 = por %p80, %p81
      %p83 = scmp.ne.s32.totalorder %s75, %s78
      %p84 = scmp.eq.s32.totalorder %s18, 0
      %p85 = por %p83, %p84
      %p86 = scmp.ne.s32.totalorder %s75, %s78
      %p87 = scmp.eq.s32.totalorder %s23, 9
      %p88 = por %p86, %p87
      %p89 = scmp.ne.s32.totalorder %s78, %s79
      %p90 = scmp.eq.s32.totalorder %s23, 0
      %p91 = por %p89, %p90
      %p92 = scmp.ne.s32.totalorder %s78, %s79
      %p93 = scmp.eq.s32.totalorder %s24, 9
      %p94 = por %p92, %p93
      %p96 = scmp.ne.s32.totalorder %s79, %s95
      %p97 = scmp.eq.s32.totalorder %s24, 0
      %p98 = por %p96, %p97
      %s100 = sadd.s32 %s99, 1
      %p103 = scmp.eq.s32.totalorder %s18, 9
      %p104 = scmp.ne.s32.totalorder %s99, %s101
      %p105 = scmp.eq.s32.totalorder %s18, 0
      %p106 = por %p104, %p105
      %p107 = scmp.ne.s32.totalorder %s99, %s101
      %p108 = scmp.eq.s32.totalorder %s23, 9
      %p109 = por %p107, %p108
      %p110 = scmp.ne.s32.totalorder %s101, %s102
      %p111 = scmp.eq.s32.totalorder %s23, 0
      %p112 = por %p110, %p111
      %p113 = scmp.ne.s32.totalorder %s101, %s102
      %p114 = scmp.eq.s32.totalorder %s24, 9
      %p115 = por %p113, %p114
      %p117 = scmp.ne.s32.totalorder %s102, %s116
      %p118 = scmp.eq.s32.totalorder %s24, 0
      %p119 = por %p117, %p118
      %s121 = sadd.s32 %s120, 1
      %p124 = scmp.eq.s32.totalorder %s18, 9
      %p125 = scmp.ne.s32.totalorder %s120, %s122
      %p126 = scmp.eq.s32.totalorder %s18, 0
      %p127 = por %p125, %p126
      %p128 = scmp.ne.s32.totalorder %s120, %s122
      %p129 = scmp.eq.s32.totalorder %s23, 9
      %p130 = por %p128, %p129
      %p131 = scmp.ne.s32.totalorder %s122, %s123
      %p132 = scmp.eq.s32.totalorder %s23, 0
      %p133 = por %p131, %p132
      %p134 = scmp.ne.s32.totalorder %s122, %s123
      %p135 = scmp.eq.s32.totalorder %s24, 9
      %p136 = por %p134, %p135
      %p138 = scmp.ne.s32.totalorder %s123, %s137
      %p139 = scmp.eq.s32.totalorder %s24, 0
      %p140 = por %p138, %p139
      %s141 = ssub.s32 %s18, %s25
      %p142 = scmp.eq.s32.totalorder %s141, 0
      %s144 = sadd.s32 %s143, 1
      %s145 = scalar_select %p142, %s143, %s144
      %p148 = pneg %p142
      %p149 = scmp.eq.s32.totalorder %s18, 9
      %p150 = por %p148, %p149
      %p151 = scmp.ne.s32.totalorder %s143, %s146
      %p152 = scmp.eq.s32.totalorder %s18, 0
      %p153 = por %p151, %p152
      %p154 = scmp.ne.s32.totalorder %s143, %s146
      %p155 = scmp.eq.s32.totalorder %s23, 9
      %p156 = por %p154, %p155
      %p157 = scmp.ne.s32.totalorder %s146, %s147
      %p158 = scmp.eq.s32.totalorder %s23, 0
      %p159 = por %p157, %p158
      %p160 = scmp.ne.s32.totalorder %s146, %s147
      %p161 = scmp.eq.s32.totalorder %s24, 9
      %p162 = por %p160, %p161
      %p164 = scmp.ne.s32.totalorder %s147, %s163
      %p165 = scmp.eq.s32.totalorder %s24, 0
      %p166 = por %p164, %p165
      %p167 = scmp.le.s32.totalorder 1, %s18
      %p168 = scmp.lt.s32.totalorder %s18, 11
      %p169 = pnand %p167, %p168
      %p170 = pneg %p169
      // Predicated region
      $region9: #{tpu_custom_call.1} parent=5 // pred_check
        _
      $region10: #{tpu_custom_call.1} parent=5 // pred_check_branch
        %172 = sbr.rel (%p169) target = $region12
      $region11: #{tpu_custom_call.1} parent=5 // pred_region
        %s173 = ssub.s32 %s18, 1
        // Predicated region
        $region13: #{tpu_custom_call.1} parent=11 // pred_check
          %p174 = pneg %p39
        $region14: #{tpu_custom_call.1} parent=11 // pred_check_branch
          %176 = sbr.rel (%p174) target = $region16
        $region15: #{tpu_custom_call.1} parent=11 // pred_region
          %s178 = ssub.s32 1024, 1024
          %179 = vsyncadd [#allocation3], %s178
          %s181 = sshll.u32 [#allocation2], 4
          %s182 = int_to_ptr.vmem [resolvable:$true] %s181
          %184 = dma.hbm_to_vmem [thread:$0]  %s0, 1024, %s182, [#allocation3]
        $region16: #{tpu_custom_call.1} parent=11 // pred_fallthru
          _
        // Predicated region
        $region17: #{tpu_custom_call.1} parent=11 // pred_check
          %p185 = pneg %p112
        $region18: #{tpu_custom_call.1} parent=11 // pred_check_branch
          %187 = sbr.rel (%p185) target = $region20
        $region19: #{tpu_custom_call.1} parent=11 // pred_region
          _
        $region20: #{tpu_custom_call.1} parent=11 // pred_fallthru
          _
        // Predicated region
        $region21: #{tpu_custom_call.1} parent=11 // pred_check
          %p188 = pneg %p133
        $region22: #{tpu_custom_call.1} parent=11 // pred_check_branch
          %190 = sbr.rel (%p188) target = $region24
        $region23: #{tpu_custom_call.1} parent=11 // pred_region
          _
        $region24: #{tpu_custom_call.1} parent=11 // pred_fallthru
          _
      $region12: #{tpu_custom_call.1} parent=5 // pred_fallthru
        _
      %p191 = scmp.lt.s32.totalorder %s18, 10
      // Predicated region
      $region25: #{tpu_custom_call.1} parent=5 // pred_check
        %p192 = pneg %p191
      $region26: #{tpu_custom_call.1} parent=5 // pred_check_branch
        %194 = sbr.rel (%p192) target = $region28
      $region27: #{tpu_custom_call.1} parent=5 // pred_region
        // Predicated region
        $region29: #{tpu_custom_call.1} parent=27 // pred_check
          %p195 = pneg %p59
        $region30: #{tpu_custom_call.1} parent=27 // pred_check_branch
          %197 = sbr.rel (%p195) target = $region32
        $region31: #{tpu_custom_call.1} parent=27 // pred_region
          %s198 = sand.u32 %s18, 1
          %s199 = scalar_lea.sflag [#allocation6], %s198
          %s200 = sand.u32 %s49, 1
          %s201 = smul.addr %s200, 8192
          %s202 = scalar_lea.vmem [#allocation5], %s201
          %s203 = smul.u32 8, %s18
          %s205 = ssub.s32 131072, 131072
          %206 = vsyncadd %s199, %s205
          %s207 = smul.addr %s203, 128
          %s208 = scalar_lea.hbm %s1, %s207
          %s209 = sshll.u32 %s202, 4
          %s210 = int_to_ptr.vmem [resolvable:$true] %s209
          %215 = dma.hbm_to_vmem [thread:$0]  %s208, 131072, %s210, %s199, 10240, 1024, 64
        $region32: #{tpu_custom_call.1} parent=27 // pred_fallthru
          _
        // Predicated region
        $region33: #{tpu_custom_call.1} parent=27 // pred_check
          %p216 = pneg %p85
        $region34: #{tpu_custom_call.1} parent=27 // pred_check_branch
          %218 = sbr.rel (%p216) target = $region36
        $region35: #{tpu_custom_call.1} parent=27 // pred_region
          %s219 = sand.u32 %s18, 1
          %s220 = scalar_lea.sflag [#allocation6], %s219
          %s221 = sand.u32 %s75, 1
          %s222 = smul.addr %s221, 8
          %s223 = scalar_lea.vmem [#allocation7], %s222
          %s224 = smul.u32 8, %s18
          %s226 = ssub.s32 128, 128
          %227 = vsyncadd %s220, %s226
          %s228 = smul.addr %s224, 16
          %s229 = scalar_lea.hbm %s2, %s228
          %s231 = sshll.u32 %s223, 4
          %s232 = int_to_ptr.vmem [resolvable:$true] %s231
          %234 = dma.hbm_to_vmem [thread:$0]  %s229, 128, %s232, %s220
        $region36: #{tpu_custom_call.1} parent=27 // pred_fallthru
          _
      $region28: #{tpu_custom_call.1} parent=5 // pred_fallthru
        _
      %p235 = scmp.le.s32.totalorder 1, %s18
      %p236 = scmp.lt.s32.totalorder %s18, 11
      %p237 = pnand %p235, %p236
      %p238 = pneg %p237
      // Predicated region
      $region37: #{tpu_custom_call.1} parent=5 // pred_check
        _
      $region38: #{tpu_custom_call.1} parent=5 // pred_check_branch
        %240 = sbr.rel (%p237) target = $region40
      $region39: #{tpu_custom_call.1} parent=5 // pred_region
        %s241 = ssub.s32 %s18, 1
        // Predicated region
        $region41: #{tpu_custom_call.1} parent=39 // pred_check
          %p242 = pneg %p39
        $region42: #{tpu_custom_call.1} parent=39 // pred_check_branch
          %244 = sbr.rel (%p242) target = $region44
        $region43: #{tpu_custom_call.1} parent=39 // pred_region
          %245 = dma.done [#allocation3], 1024
        $region44: #{tpu_custom_call.1} parent=39 // pred_fallthru
          _
        %s246 = sand.u32 %s23, 1
        %s247 = scalar_lea.sflag [#allocation6], %s246
        %s248 = sand.u32 %s52, 1
        %s249 = smul.addr %s248, 8192
        %s250 = scalar_lea.vmem [#allocation5], %s249
        // Predicated region
        $region45: #{tpu_custom_call.1} parent=39 // pred_check
          %p251 = pneg %p65
        $region46: #{tpu_custom_call.1} parent=39 // pred_check_branch
          %253 = sbr.rel (%p251) target = $region48
        $region47: #{tpu_custom_call.1} parent=39 // pred_region
          %254 = dma.done %s247, 131072
        $region48: #{tpu_custom_call.1} parent=39 // pred_fallthru
          _
        %s255 = sand.u32 %s23, 1
        %s256 = scalar_lea.sflag [#allocation6], %s255
        %s257 = sand.u32 %s78, 1
        %s258 = smul.addr %s257, 8
        %s259 = scalar_lea.vmem [#allocation7], %s258
        // Predicated region
        $region49: #{tpu_custom_call.1} parent=39 // pred_check
          %p260 = pneg %p91
        $region50: #{tpu_custom_call.1} parent=39 // pred_check_branch
          %262 = sbr.rel (%p260) target = $region52
        $region51: #{tpu_custom_call.1} parent=39 // pred_region
          %263 = dma.done %s256, 128
        $region52: #{tpu_custom_call.1} parent=39 // pred_fallthru
          _
        %p264 = pneg %p39
        %p265 = pneg %p36
        %s266 = sand.u32 %s23, 1
        %s267 = scalar_lea.sflag [#allocation6], %s266
        %s268 = sand.u32 %s52, 1
        %s269 = smul.addr %s268, 8192
        %s270 = scalar_lea.vmem [#allocation5], %s269
        %p271 = pneg %p65
        %p272 = pneg %p62
        %s273 = sand.u32 %s23, 1
        %s274 = scalar_lea.sflag [#allocation6], %s273
        %s275 = sand.u32 %s78, 1
        %s276 = smul.addr %s275, 8
        %s277 = scalar_lea.vmem [#allocation7], %s276
        %p278 = pneg %p91
        %p279 = pneg %p88
        %p280 = pneg %p112
        %p281 = pneg %p109
        %p282 = pneg %p133
        %p283 = pneg %p130
        %p284 = pneg %p159
        %p285 = pneg %p156
        %s286 = sand.u32 %s146, 1
        %s287 = scalar_lea.sflag [#allocation4], %s286
        %s288 = sand.u32 %s146, 1
        %s289 = smul.addr %s288, 64
        %s290 = scalar_lea.vmem [#allocation8], %s289
        %s291 = smul.u32 8, %s23
        %s292 = smul.u32 8, %s23
        %s293 = smul.u32 8, %s23
        %v294 = vld [vmem:[#allocation2] sm:$0xff]
        %v295 = vld [vmem:[#allocation2 + $0x8] sm:$0xff]
        %v296 = vld [vmem:[#allocation2 + $0x10] sm:$0xff]
        %v297 = vld [vmem:[#allocation2 + $0x18] sm:$0xff]
        %v298 = vld [vmem:[#allocation2 + $0x20] sm:$0xff]
        %v299 = vld [vmem:[#allocation2 + $0x28] sm:$0xff]
        %v300 = vld [vmem:[#allocation2 + $0x30] sm:$0xff]
        %v301 = vld [vmem:[#allocation2 + $0x38] sm:$0xff]
        %v302 = vld [vmem:[%s250] sm:$0xff]
        %v303 = vld [vmem:[%s250 + $0x8] sm:$0xff]
        %v304 = vld [vmem:[%s250 + $0x10] sm:$0xff]
        %v305 = vld [vmem:[%s250 + $0x18] sm:$0xff]
        %v306 = vld [vmem:[%s250 + $0x20] sm:$0xff]
        %v307 = vld [vmem:[%s250 + $0x28] sm:$0xff]
        %v308 = vld [vmem:[%s250 + $0x30] sm:$0xff]
        %v309 = vld [vmem:[%s250 + $0x38] sm:$0xff]
        %v310 = vld [vmem:[%s250 + $0x40] sm:$0xff]
        %v311 = vld [vmem:[%s250 + $0x48] sm:$0xff]
        %v312 = vld [vmem:[%s250 + $0x50] sm:$0xff]
        %v313 = vld [vmem:[%s250 + $0x58] sm:$0xff]
        %v314 = vld [vmem:[%s250 + $0x60] sm:$0xff]
        %v315 = vld [vmem:[%s250 + $0x68] sm:$0xff]
        %v316 = vld [vmem:[%s250 + $0x70] sm:$0xff]
        %v317 = vld [vmem:[%s250 + $0x78] sm:$0xff]
        %v318 = vld [vmem:[%s250 + $0x80] sm:$0xff]
        %v319 = vld [vmem:[%s250 + $0x88] sm:$0xff]
        %v320 = vld [vmem:[%s250 + $0x90] sm:$0xff]
        %v321 = vld [vmem:[%s250 + $0x98] sm:$0xff]
        %v322 = vld [vmem:[%s250 + $0xa0] sm:$0xff]
        %v323 = vld [vmem:[%s250 + $0xa8] sm:$0xff]
        %v324 = vld [vmem:[%s250 + $0xb0] sm:$0xff]
        %v325 = vld [vmem:[%s250 + $0xb8] sm:$0xff]
        %v326 = vld [vmem:[%s250 + $0xc0] sm:$0xff]
        %v327 = vld [vmem:[%s250 + $0xc8] sm:$0xff]
        %v328 = vld [vmem:[%s250 + $0xd0] sm:$0xff]
        %v329 = vld [vmem:[%s250 + $0xd8] sm:$0xff]
        %v330 = vld [vmem:[%s250 + $0xe0] sm:$0xff]
        %v331 = vld [vmem:[%s250 + $0xe8] sm:$0xff]
        %v332 = vld [vmem:[%s250 + $0xf0] sm:$0xff]
        %v333 = vld [vmem:[%s250 + $0xf8] sm:$0xff]
        %v334 = vld [vmem:[%s250 + $0x100] sm:$0xff]
        %v335 = vld [vmem:[%s250 + $0x108] sm:$0xff]
        %v336 = vld [vmem:[%s250 + $0x110] sm:$0xff]
        %v337 = vld [vmem:[%s250 + $0x118] sm:$0xff]
        %v338 = vld [vmem:[%s250 + $0x120] sm:$0xff]
        %v339 = vld [vmem:[%s250 + $0x128] sm:$0xff]
        %v340 = vld [vmem:[%s250 + $0x130] sm:$0xff]
        %v341 = vld [vmem:[%s250 + $0x138] sm:$0xff]
        %v342 = vld [vmem:[%s250 + $0x140] sm:$0xff]
        %v343 = vld [vmem:[%s250 + $0x148] sm:$0xff]
        %v344 = vld [vmem:[%s250 + $0x150] sm:$0xff]
        %v345 = vld [vmem:[%s250 + $0x158] sm:$0xff]
        %v346 = vld [vmem:[%s250 + $0x160] sm:$0xff]
        %v347 = vld [vmem:[%s250 + $0x168] sm:$0xff]
        %v348 = vld [vmem:[%s250 + $0x170] sm:$0xff]
        %v349 = vld [vmem:[%s250 + $0x178] sm:$0xff]
        %v350 = vld [vmem:[%s250 + $0x180] sm:$0xff]
        %v351 = vld [vmem:[%s250 + $0x188] sm:$0xff]
        %v352 = vld [vmem:[%s250 + $0x190] sm:$0xff]
        %v353 = vld [vmem:[%s250 + $0x198] sm:$0xff]
        %v354 = vld [vmem:[%s250 + $0x1a0] sm:$0xff]
        %v355 = vld [vmem:[%s250 + $0x1a8] sm:$0xff]
        %v356 = vld [vmem:[%s250 + $0x1b0] sm:$0xff]
        %v357 = vld [vmem:[%s250 + $0x1b8] sm:$0xff]
        %v358 = vld [vmem:[%s250 + $0x1c0] sm:$0xff]
        %v359 = vld [vmem:[%s250 + $0x1c8] sm:$0xff]
        %v360 = vld [vmem:[%s250 + $0x1d0] sm:$0xff]
        %v361 = vld [vmem:[%s250 + $0x1d8] sm:$0xff]
        %v362 = vld [vmem:[%s250 + $0x1e0] sm:$0xff]
        %v363 = vld [vmem:[%s250 + $0x1e8] sm:$0xff]
        %v364 = vld [vmem:[%s250 + $0x1f0] sm:$0xff]
        %v365 = vld [vmem:[%s250 + $0x1f8] sm:$0xff]
        %v366 = vld [vmem:[%s250 + $0x200] sm:$0xff]
        %v367 = vld [vmem:[%s250 + $0x208] sm:$0xff]
        %v368 = vld [vmem:[%s250 + $0x210] sm:$0xff]
        %v369 = vld [vmem:[%s250 + $0x218] sm:$0xff]
        %v370 = vld [vmem:[%s250 + $0x220] sm:$0xff]
        %v371 = vld [vmem:[%s250 + $0x228] sm:$0xff]
        %v372 = vld [vmem:[%s250 + $0x230] sm:$0xff]
        %v373 = vld [vmem:[%s250 + $0x238] sm:$0xff]
        %v374 = vld [vmem:[%s250 + $0x240] sm:$0xff]
        %v375 = vld [vmem:[%s250 + $0x248] sm:$0xff]
        %v376 = vld [vmem:[%s250 + $0x250] sm:$0xff]
        %v377 = vld [vmem:[%s250 + $0x258] sm:$0xff]
        %v378 = vld [vmem:[%s250 + $0x260] sm:$0xff]
        %v379 = vld [vmem:[%s250 + $0x268] sm:$0xff]
        %v380 = vld [vmem:[%s250 + $0x270] sm:$0xff]
        %v381 = vld [vmem:[%s250 + $0x278] sm:$0xff]
        %v382 = vld [vmem:[%s250 + $0x280] sm:$0xff]
        %v383 = vld [vmem:[%s250 + $0x288] sm:$0xff]
        %v384 = vld [vmem:[%s250 + $0x290] sm:$0xff]
        %v385 = vld [vmem:[%s250 + $0x298] sm:$0xff]
        %v386 = vld [vmem:[%s250 + $0x2a0] sm:$0xff]
        %v387 = vld [vmem:[%s250 + $0x2a8] sm:$0xff]
        %v388 = vld [vmem:[%s250 + $0x2b0] sm:$0xff]
        %v389 = vld [vmem:[%s250 + $0x2b8] sm:$0xff]
        %v390 = vld [vmem:[%s250 + $0x2c0] sm:$0xff]
        %v391 = vld [vmem:[%s250 + $0x2c8] sm:$0xff]
        %v392 = vld [vmem:[%s250 + $0x2d0] sm:$0xff]
        %v393 = vld [vmem:[%s250 + $0x2d8] sm:$0xff]
        %v394 = vld [vmem:[%s250 + $0x2e0] sm:$0xff]
        %v395 = vld [vmem:[%s250 + $0x2e8] sm:$0xff]
        %v396 = vld [vmem:[%s250 + $0x2f0] sm:$0xff]
        %v397 = vld [vmem:[%s250 + $0x2f8] sm:$0xff]
        %v398 = vld [vmem:[%s250 + $0x300] sm:$0xff]
        %v399 = vld [vmem:[%s250 + $0x308] sm:$0xff]
        %v400 = vld [vmem:[%s250 + $0x310] sm:$0xff]
        %v401 = vld [vmem:[%s250 + $0x318] sm:$0xff]
        %v402 = vld [vmem:[%s250 + $0x320] sm:$0xff]
        %v403 = vld [vmem:[%s250 + $0x328] sm:$0xff]
        %v404 = vld [vmem:[%s250 + $0x330] sm:$0xff]
        %v405 = vld [vmem:[%s250 + $0x338] sm:$0xff]
        %v406 = vld [vmem:[%s250 + $0x340] sm:$0xff]
        %v407 = vld [vmem:[%s250 + $0x348] sm:$0xff]
        %v408 = vld [vmem:[%s250 + $0x350] sm:$0xff]
        %v409 = vld [vmem:[%s250 + $0x358] sm:$0xff]
        %v410 = vld [vmem:[%s250 + $0x360] sm:$0xff]
        %v411 = vld [vmem:[%s250 + $0x368] sm:$0xff]
        %v412 = vld [vmem:[%s250 + $0x370] sm:$0xff]
        %v413 = vld [vmem:[%s250 + $0x378] sm:$0xff]
        %v414 = vld [vmem:[%s250 + $0x380] sm:$0xff]
        %v415 = vld [vmem:[%s250 + $0x388] sm:$0xff]
        %v416 = vld [vmem:[%s250 + $0x390] sm:$0xff]
        %v417 = vld [vmem:[%s250 + $0x398] sm:$0xff]
        %v418 = vld [vmem:[%s250 + $0x3a0] sm:$0xff]
        %v419 = vld [vmem:[%s250 + $0x3a8] sm:$0xff]
        %v420 = vld [vmem:[%s250 + $0x3b0] sm:$0xff]
        %v421 = vld [vmem:[%s250 + $0x3b8] sm:$0xff]
        %v422 = vld [vmem:[%s250 + $0x3c0] sm:$0xff]
        %v423 = vld [vmem:[%s250 + $0x3c8] sm:$0xff]
        %v424 = vld [vmem:[%s250 + $0x3d0] sm:$0xff]
        %v425 = vld [vmem:[%s250 + $0x3d8] sm:$0xff]
        %v426 = vld [vmem:[%s250 + $0x3e0] sm:$0xff]
        %v427 = vld [vmem:[%s250 + $0x3e8] sm:$0xff]
        %v428 = vld [vmem:[%s250 + $0x3f0] sm:$0xff]
        %v429 = vld [vmem:[%s250 + $0x3f8] sm:$0xff]
        %v430 = vld [vmem:[%s250 + $0x400] sm:$0xff]
        %v431 = vld [vmem:[%s250 + $0x408] sm:$0xff]
        %v432 = vld [vmem:[%s250 + $0x410] sm:$0xff]
        %v433 = vld [vmem:[%s250 + $0x418] sm:$0xff]
        %v434 = vld [vmem:[%s250 + $0x420] sm:$0xff]
        %v435 = vld [vmem:[%s250 + $0x428] sm:$0xff]
        %v436 = vld [vmem:[%s250 + $0x430] sm:$0xff]
        %v437 = vld [vmem:[%s250 + $0x438] sm:$0xff]
        %v438 = vld [vmem:[%s250 + $0x440] sm:$0xff]
        %v439 = vld [vmem:[%s250 + $0x448] sm:$0xff]
        %v440 = vld [vmem:[%s250 + $0x450] sm:$0xff]
        %v441 = vld [vmem:[%s250 + $0x458] sm:$0xff]
        %v442 = vld [vmem:[%s250 + $0x460] sm:$0xff]
        %v443 = vld [vmem:[%s250 + $0x468] sm:$0xff]
        %v444 = vld [vmem:[%s250 + $0x470] sm:$0xff]
        %v445 = vld [vmem:[%s250 + $0x478] sm:$0xff]
        %v446 = vld [vmem:[%s250 + $0x480] sm:$0xff]
        %v447 = vld [vmem:[%s250 + $0x488] sm:$0xff]
        %v448 = vld [vmem:[%s250 + $0x490] sm:$0xff]
        %v449 = vld [vmem:[%s250 + $0x498] sm:$0xff]
        %v450 = vld [vmem:[%s250 + $0x4a0] sm:$0xff]
        %v451 = vld [vmem:[%s250 + $0x4a8] sm:$0xff]
        %v452 = vld [vmem:[%s250 + $0x4b0] sm:$0xff]
        %v453 = vld [vmem:[%s250 + $0x4b8] sm:$0xff]
        %v454 = vld [vmem:[%s250 + $0x4c0] sm:$0xff]
        %v455 = vld [vmem:[%s250 + $0x4c8] sm:$0xff]
        %v456 = vld [vmem:[%s250 + $0x4d0] sm:$0xff]
        %v457 = vld [vmem:[%s250 + $0x4d8] sm:$0xff]
        %v458 = vld [vmem:[%s250 + $0x4e0] sm:$0xff]
        %v459 = vld [vmem:[%s250 + $0x4e8] sm:$0xff]
        %v460 = vld [vmem:[%s250 + $0x4f0] sm:$0xff]
        %v461 = vld [vmem:[%s250 + $0x4f8] sm:$0xff]
        %v462 = vld [vmem:[%s250 + $0x500] sm:$0xff]
        %v463 = vld [vmem:[%s250 + $0x508] sm:$0xff]
        %v464 = vld [vmem:[%s250 + $0x510] sm:$0xff]
        %v465 = vld [vmem:[%s250 + $0x518] sm:$0xff]
        %v466 = vld [vmem:[%s250 + $0x520] sm:$0xff]
        %v467 = vld [vmem:[%s250 + $0x528] sm:$0xff]
        %v468 = vld [vmem:[%s250 + $0x530] sm:$0xff]
        %v469 = vld [vmem:[%s250 + $0x538] sm:$0xff]
        %v470 = vld [vmem:[%s250 + $0x540] sm:$0xff]
        %v471 = vld [vmem:[%s250 + $0x548] sm:$0xff]
        %v472 = vld [vmem:[%s250 + $0x550] sm:$0xff]
        %v473 = vld [vmem:[%s250 + $0x558] sm:$0xff]
        %v474 = vld [vmem:[%s250 + $0x560] sm:$0xff]
        %v475 = vld [vmem:[%s250 + $0x568] sm:$0xff]
        %v476 = vld [vmem:[%s250 + $0x570] sm:$0xff]
        %v477 = vld [vmem:[%s250 + $0x578] sm:$0xff]
        %v478 = vld [vmem:[%s250 + $0x580] sm:$0xff]
        %v479 = vld [vmem:[%s250 + $0x588] sm:$0xff]
        %v480 = vld [vmem:[%s250 + $0x590] sm:$0xff]
        %v481 = vld [vmem:[%s250 + $0x598] sm:$0xff]
        %v482 = vld [vmem:[%s250 + $0x5a0] sm:$0xff]
        %v483 = vld [vmem:[%s250 + $0x5a8] sm:$0xff]
        %v484 = vld [vmem:[%s250 + $0x5b0] sm:$0xff]
        %v485 = vld [vmem:[%s250 + $0x5b8] sm:$0xff]
        %v486 = vld [vmem:[%s250 + $0x5c0] sm:$0xff]
        %v487 = vld [vmem:[%s250 + $0x5c8] sm:$0xff]
        %v488 = vld [vmem:[%s250 + $0x5d0] sm:$0xff]
        %v489 = vld [vmem:[%s250 + $0x5d8] sm:$0xff]
        %v490 = vld [vmem:[%s250 + $0x5e0] sm:$0xff]
        %v491 = vld [vmem:[%s250 + $0x5e8] sm:$0xff]
        %v492 = vld [vmem:[%s250 + $0x5f0] sm:$0xff]
        %v493 = vld [vmem:[%s250 + $0x5f8] sm:$0xff]
        %v494 = vld [vmem:[%s250 + $0x600] sm:$0xff]
        %v495 = vld [vmem:[%s250 + $0x608] sm:$0xff]
        %v496 = vld [vmem:[%s250 + $0x610] sm:$0xff]
        %v497 = vld [vmem:[%s250 + $0x618] sm:$0xff]
        %v498 = vld [vmem:[%s250 + $0x620] sm:$0xff]
        %v499 = vld [vmem:[%s250 + $0x628] sm:$0xff]
        %v500 = vld [vmem:[%s250 + $0x630] sm:$0xff]
        %v501 = vld [vmem:[%s250 + $0x638] sm:$0xff]
        %v502 = vld [vmem:[%s250 + $0x640] sm:$0xff]
        %v503 = vld [vmem:[%s250 + $0x648] sm:$0xff]
        %v504 = vld [vmem:[%s250 + $0x650] sm:$0xff]
        %v505 = vld [vmem:[%s250 + $0x658] sm:$0xff]
        %v506 = vld [vmem:[%s250 + $0x660] sm:$0xff]
        %v507 = vld [vmem:[%s250 + $0x668] sm:$0xff]
        %v508 = vld [vmem:[%s250 + $0x670] sm:$0xff]
        %v509 = vld [vmem:[%s250 + $0x678] sm:$0xff]
        %v510 = vld [vmem:[%s250 + $0x680] sm:$0xff]
        %v511 = vld [vmem:[%s250 + $0x688] sm:$0xff]
        %v512 = vld [vmem:[%s250 + $0x690] sm:$0xff]
        %v513 = vld [vmem:[%s250 + $0x698] sm:$0xff]
        %v514 = vld [vmem:[%s250 + $0x6a0] sm:$0xff]
        %v515 = vld [vmem:[%s250 + $0x6a8] sm:$0xff]
        %v516 = vld [vmem:[%s250 + $0x6b0] sm:$0xff]
        %v517 = vld [vmem:[%s250 + $0x6b8] sm:$0xff]
        %v518 = vld [vmem:[%s250 + $0x6c0] sm:$0xff]
        %v519 = vld [vmem:[%s250 + $0x6c8] sm:$0xff]
        %v520 = vld [vmem:[%s250 + $0x6d0] sm:$0xff]
        %v521 = vld [vmem:[%s250 + $0x6d8] sm:$0xff]
        %v522 = vld [vmem:[%s250 + $0x6e0] sm:$0xff]
        %v523 = vld [vmem:[%s250 + $0x6e8] sm:$0xff]
        %v524 = vld [vmem:[%s250 + $0x6f0] sm:$0xff]
        %v525 = vld [vmem:[%s250 + $0x6f8] sm:$0xff]
        %v526 = vld [vmem:[%s250 + $0x700] sm:$0xff]
        %v527 = vld [vmem:[%s250 + $0x708] sm:$0xff]
        %v528 = vld [vmem:[%s250 + $0x710] sm:$0xff]
        %v529 = vld [vmem:[%s250 + $0x718] sm:$0xff]
        %v530 = vld [vmem:[%s250 + $0x720] sm:$0xff]
        %v531 = vld [vmem:[%s250 + $0x728] sm:$0xff]
        %v532 = vld [vmem:[%s250 + $0x730] sm:$0xff]
        %v533 = vld [vmem:[%s250 + $0x738] sm:$0xff]
        %v534 = vld [vmem:[%s250 + $0x740] sm:$0xff]
        %v535 = vld [vmem:[%s250 + $0x748] sm:$0xff]
        %v536 = vld [vmem:[%s250 + $0x750] sm:$0xff]
        %v537 = vld [vmem:[%s250 + $0x758] sm:$0xff]
        %v538 = vld [vmem:[%s250 + $0x760] sm:$0xff]
        %v539 = vld [vmem:[%s250 + $0x768] sm:$0xff]
        %v540 = vld [vmem:[%s250 + $0x770] sm:$0xff]
        %v541 = vld [vmem:[%s250 + $0x778] sm:$0xff]
        %v542 = vld [vmem:[%s250 + $0x780] sm:$0xff]
        %v543 = vld [vmem:[%s250 + $0x788] sm:$0xff]
        %v544 = vld [vmem:[%s250 + $0x790] sm:$0xff]
        %v545 = vld [vmem:[%s250 + $0x798] sm:$0xff]
        %v546 = vld [vmem:[%s250 + $0x7a0] sm:$0xff]
        %v547 = vld [vmem:[%s250 + $0x7a8] sm:$0xff]
        %v548 = vld [vmem:[%s250 + $0x7b0] sm:$0xff]
        %v549 = vld [vmem:[%s250 + $0x7b8] sm:$0xff]
        %v550 = vld [vmem:[%s250 + $0x7c0] sm:$0xff]
        %v551 = vld [vmem:[%s250 + $0x7c8] sm:$0xff]
        %v552 = vld [vmem:[%s250 + $0x7d0] sm:$0xff]
        %v553 = vld [vmem:[%s250 + $0x7d8] sm:$0xff]
        %v554 = vld [vmem:[%s250 + $0x7e0] sm:$0xff]
        %v555 = vld [vmem:[%s250 + $0x7e8] sm:$0xff]
        %v556 = vld [vmem:[%s250 + $0x7f0] sm:$0xff]
        %v557 = vld [vmem:[%s250 + $0x7f8] sm:$0xff]
        %v558 = vld [vmem:[%s250 + $0x800] sm:$0xff]
        %v559 = vld [vmem:[%s250 + $0x808] sm:$0xff]
        %v560 = vld [vmem:[%s250 + $0x810] sm:$0xff]
        %v561 = vld [vmem:[%s250 + $0x818] sm:$0xff]
        %v562 = vld [vmem:[%s250 + $0x820] sm:$0xff]
        %v563 = vld [vmem:[%s250 + $0x828] sm:$0xff]
        %v564 = vld [vmem:[%s250 + $0x830] sm:$0xff]
        %v565 = vld [vmem:[%s250 + $0x838] sm:$0xff]
        %v566 = vld [vmem:[%s250 + $0x840] sm:$0xff]
        %v567 = vld [vmem:[%s250 + $0x848] sm:$0xff]
        %v568 = vld [vmem:[%s250 + $0x850] sm:$0xff]
        %v569 = vld [vmem:[%s250 + $0x858] sm:$0xff]
        %v570 = vld [vmem:[%s250 + $0x860] sm:$0xff]
        %v571 = vld [vmem:[%s250 + $0x868] sm:$0xff]
        %v572 = vld [vmem:[%s250 + $0x870] sm:$0xff]
        %v573 = vld [vmem:[%s250 + $0x878] sm:$0xff]
        %v574 = vld [vmem:[%s250 + $0x880] sm:$0xff]
        %v575 = vld [vmem:[%s250 + $0x888] sm:$0xff]
        %v576 = vld [vmem:[%s250 + $0x890] sm:$0xff]
        %v577 = vld [vmem:[%s250 + $0x898] sm:$0xff]
        %v578 = vld [vmem:[%s250 + $0x8a0] sm:$0xff]
        %v579 = vld [vmem:[%s250 + $0x8a8] sm:$0xff]
        %v580 = vld [vmem:[%s250 + $0x8b0] sm:$0xff]
        %v581 = vld [vmem:[%s250 + $0x8b8] sm:$0xff]
        %v582 = vld [vmem:[%s250 + $0x8c0] sm:$0xff]
        %v583 = vld [vmem:[%s250 + $0x8c8] sm:$0xff]
        %v584 = vld [vmem:[%s250 + $0x8d0] sm:$0xff]
        %v585 = vld [vmem:[%s250 + $0x8d8] sm:$0xff]
        %v586 = vld [vmem:[%s250 + $0x8e0] sm:$0xff]
        %v587 = vld [vmem:[%s250 + $0x8e8] sm:$0xff]
        %v588 = vld [vmem:[%s250 + $0x8f0] sm:$0xff]
        %v589 = vld [vmem:[%s250 + $0x8f8] sm:$0xff]
        %v590 = vld [vmem:[%s250 + $0x900] sm:$0xff]
        %v591 = vld [vmem:[%s250 + $0x908] sm:$0xff]
        %v592 = vld [vmem:[%s250 + $0x910] sm:$0xff]
        %v593 = vld [vmem:[%s250 + $0x918] sm:$0xff]
        %v594 = vld [vmem:[%s250 + $0x920] sm:$0xff]
        %v595 = vld [vmem:[%s250 + $0x928] sm:$0xff]
        %v596 = vld [vmem:[%s250 + $0x930] sm:$0xff]
        %v597 = vld [vmem:[%s250 + $0x938] sm:$0xff]
        %v598 = vld [vmem:[%s250 + $0x940] sm:$0xff]
        %v599 = vld [vmem:[%s250 + $0x948] sm:$0xff]
        %v600 = vld [vmem:[%s250 + $0x950] sm:$0xff]
        %v601 = vld [vmem:[%s250 + $0x958] sm:$0xff]
        %v602 = vld [vmem:[%s250 + $0x960] sm:$0xff]
        %v603 = vld [vmem:[%s250 + $0x968] sm:$0xff]
        %v604 = vld [vmem:[%s250 + $0x970] sm:$0xff]
        %v605 = vld [vmem:[%s250 + $0x978] sm:$0xff]
        %v606 = vld [vmem:[%s250 + $0x980] sm:$0xff]
        %v607 = vld [vmem:[%s250 + $0x988] sm:$0xff]
        %v608 = vld [vmem:[%s250 + $0x990] sm:$0xff]
        %v609 = vld [vmem:[%s250 + $0x998] sm:$0xff]
        %v610 = vld [vmem:[%s250 + $0x9a0] sm:$0xff]
        %v611 = vld [vmem:[%s250 + $0x9a8] sm:$0xff]
        %v612 = vld [vmem:[%s250 + $0x9b0] sm:$0xff]
        %v613 = vld [vmem:[%s250 + $0x9b8] sm:$0xff]
        %v614 = vld [vmem:[%s250 + $0x9c0] sm:$0xff]
        %v615 = vld [vmem:[%s250 + $0x9c8] sm:$0xff]
        %v616 = vld [vmem:[%s250 + $0x9d0] sm:$0xff]
        %v617 = vld [vmem:[%s250 + $0x9d8] sm:$0xff]
        %v618 = vld [vmem:[%s250 + $0x9e0] sm:$0xff]
        %v619 = vld [vmem:[%s250 + $0x9e8] sm:$0xff]
        %v620 = vld [vmem:[%s250 + $0x9f0] sm:$0xff]
        %v621 = vld [vmem:[%s250 + $0x9f8] sm:$0xff]
        %v622 = vld [vmem:[%s250 + $0xa00] sm:$0xff]
        %v623 = vld [vmem:[%s250 + $0xa08] sm:$0xff]
        %v624 = vld [vmem:[%s250 + $0xa10] sm:$0xff]
        %v625 = vld [vmem:[%s250 + $0xa18] sm:$0xff]
        %v626 = vld [vmem:[%s250 + $0xa20] sm:$0xff]
        %v627 = vld [vmem:[%s250 + $0xa28] sm:$0xff]
        %v628 = vld [vmem:[%s250 + $0xa30] sm:$0xff]
        %v629 = vld [vmem:[%s250 + $0xa38] sm:$0xff]
        %v630 = vld [vmem:[%s250 + $0xa40] sm:$0xff]
        %v631 = vld [vmem:[%s250 + $0xa48] sm:$0xff]
        %v632 = vld [vmem:[%s250 + $0xa50] sm:$0xff]
        %v633 = vld [vmem:[%s250 + $0xa58] sm:$0xff]
        %v634 = vld [vmem:[%s250 + $0xa60] sm:$0xff]
        %v635 = vld [vmem:[%s250 + $0xa68] sm:$0xff]
        %v636 = vld [vmem:[%s250 + $0xa70] sm:$0xff]
        %v637 = vld [vmem:[%s250 + $0xa78] sm:$0xff]
        %v638 = vld [vmem:[%s250 + $0xa80] sm:$0xff]
        %v639 = vld [vmem:[%s250 + $0xa88] sm:$0xff]
        %v640 = vld [vmem:[%s250 + $0xa90] sm:$0xff]
        %v641 = vld [vmem:[%s250 + $0xa98] sm:$0xff]
        %v642 = vld [vmem:[%s250 + $0xaa0] sm:$0xff]
        %v643 = vld [vmem:[%s250 + $0xaa8] sm:$0xff]
        %v644 = vld [vmem:[%s250 + $0xab0] sm:$0xff]
        %v645 = vld [vmem:[%s250 + $0xab8] sm:$0xff]
        %v646 = vld [vmem:[%s250 + $0xac0] sm:$0xff]
        %v647 = vld [vmem:[%s250 + $0xac8] sm:$0xff]
        %v648 = vld [vmem:[%s250 + $0xad0] sm:$0xff]
        %v649 = vld [vmem:[%s250 + $0xad8] sm:$0xff]
        %v650 = vld [vmem:[%s250 + $0xae0] sm:$0xff]
        %v651 = vld [vmem:[%s250 + $0xae8] sm:$0xff]
        %v652 = vld [vmem:[%s250 + $0xaf0] sm:$0xff]
        %v653 = vld [vmem:[%s250 + $0xaf8] sm:$0xff]
        %v654 = vld [vmem:[%s250 + $0xb00] sm:$0xff]
        %v655 = vld [vmem:[%s250 + $0xb08] sm:$0xff]
        %v656 = vld [vmem:[%s250 + $0xb10] sm:$0xff]
        %v657 = vld [vmem:[%s250 + $0xb18] sm:$0xff]
        %v658 = vld [vmem:[%s250 + $0xb20] sm:$0xff]
        %v659 = vld [vmem:[%s250 + $0xb28] sm:$0xff]
        %v660 = vld [vmem:[%s250 + $0xb30] sm:$0xff]
        %v661 = vld [vmem:[%s250 + $0xb38] sm:$0xff]
        %v662 = vld [vmem:[%s250 + $0xb40] sm:$0xff]
        %v663 = vld [vmem:[%s250 + $0xb48] sm:$0xff]
        %v664 = vld [vmem:[%s250 + $0xb50] sm:$0xff]
        %v665 = vld [vmem:[%s250 + $0xb58] sm:$0xff]
        %v666 = vld [vmem:[%s250 + $0xb60] sm:$0xff]
        %v667 = vld [vmem:[%s250 + $0xb68] sm:$0xff]
        %v668 = vld [vmem:[%s250 + $0xb70] sm:$0xff]
        %v669 = vld [vmem:[%s250 + $0xb78] sm:$0xff]
        %v670 = vld [vmem:[%s250 + $0xb80] sm:$0xff]
        %v671 = vld [vmem:[%s250 + $0xb88] sm:$0xff]
        %v672 = vld [vmem:[%s250 + $0xb90] sm:$0xff]
        %v673 = vld [vmem:[%s250 + $0xb98] sm:$0xff]
        %v674 = vld [vmem:[%s250 + $0xba0] sm:$0xff]
        %v675 = vld [vmem:[%s250 + $0xba8] sm:$0xff]
        %v676 = vld [vmem:[%s250 + $0xbb0] sm:$0xff]
        %v677 = vld [vmem:[%s250 + $0xbb8] sm:$0xff]
        %v678 = vld [vmem:[%s250 + $0xbc0] sm:$0xff]
        %v679 = vld [vmem:[%s250 + $0xbc8] sm:$0xff]
        %v680 = vld [vmem:[%s250 + $0xbd0] sm:$0xff]
        %v681 = vld [vmem:[%s250 + $0xbd8] sm:$0xff]
        %v682 = vld [vmem:[%s250 + $0xbe0] sm:$0xff]
        %v683 = vld [vmem:[%s250 + $0xbe8] sm:$0xff]
        %v684 = vld [vmem:[%s250 + $0xbf0] sm:$0xff]
        %v685 = vld [vmem:[%s250 + $0xbf8] sm:$0xff]
        %v686 = vld [vmem:[%s250 + $0xc00] sm:$0xff]
        %v687 = vld [vmem:[%s250 + $0xc08] sm:$0xff]
        %v688 = vld [vmem:[%s250 + $0xc10] sm:$0xff]
        %v689 = vld [vmem:[%s250 + $0xc18] sm:$0xff]
        %v690 = vld [vmem:[%s250 + $0xc20] sm:$0xff]
        %v691 = vld [vmem:[%s250 + $0xc28] sm:$0xff]
        %v692 = vld [vmem:[%s250 + $0xc30] sm:$0xff]
        %v693 = vld [vmem:[%s250 + $0xc38] sm:$0xff]
        %v694 = vld [vmem:[%s250 + $0xc40] sm:$0xff]
        %v695 = vld [vmem:[%s250 + $0xc48] sm:$0xff]
        %v696 = vld [vmem:[%s250 + $0xc50] sm:$0xff]
        %v697 = vld [vmem:[%s250 + $0xc58] sm:$0xff]
        %v698 = vld [vmem:[%s250 + $0xc60] sm:$0xff]
        %v699 = vld [vmem:[%s250 + $0xc68] sm:$0xff]
        %v700 = vld [vmem:[%s250 + $0xc70] sm:$0xff]
        %v701 = vld [vmem:[%s250 + $0xc78] sm:$0xff]
        %v702 = vld [vmem:[%s250 + $0xc80] sm:$0xff]
        %v703 = vld [vmem:[%s250 + $0xc88] sm:$0xff]
        %v704 = vld [vmem:[%s250 + $0xc90] sm:$0xff]
        %v705 = vld [vmem:[%s250 + $0xc98] sm:$0xff]
        %v706 = vld [vmem:[%s250 + $0xca0] sm:$0xff]
        %v707 = vld [vmem:[%s250 + $0xca8] sm:$0xff]
        %v708 = vld [vmem:[%s250 + $0xcb0] sm:$0xff]
        %v709 = vld [vmem:[%s250 + $0xcb8] sm:$0xff]
        %v710 = vld [vmem:[%s250 + $0xcc0] sm:$0xff]
        %v711 = vld [vmem:[%s250 + $0xcc8] sm:$0xff]
        %v712 = vld [vmem:[%s250 + $0xcd0] sm:$0xff]
        %v713 = vld [vmem:[%s250 + $0xcd8] sm:$0xff]
        %v714 = vld [vmem:[%s250 + $0xce0] sm:$0xff]
        %v715 = vld [vmem:[%s250 + $0xce8] sm:$0xff]
        %v716 = vld [vmem:[%s250 + $0xcf0] sm:$0xff]
        %v717 = vld [vmem:[%s250 + $0xcf8] sm:$0xff]
        %v718 = vld [vmem:[%s250 + $0xd00] sm:$0xff]
        %v719 = vld [vmem:[%s250 + $0xd08] sm:$0xff]
        %v720 = vld [vmem:[%s250 + $0xd10] sm:$0xff]
        %v721 = vld [vmem:[%s250 + $0xd18] sm:$0xff]
        %v722 = vld [vmem:[%s250 + $0xd20] sm:$0xff]
        %v723 = vld [vmem:[%s250 + $0xd28] sm:$0xff]
        %v724 = vld [vmem:[%s250 + $0xd30] sm:$0xff]
        %v725 = vld [vmem:[%s250 + $0xd38] sm:$0xff]
        %v726 = vld [vmem:[%s250 + $0xd40] sm:$0xff]
        %v727 = vld [vmem:[%s250 + $0xd48] sm:$0xff]
        %v728 = vld [vmem:[%s250 + $0xd50] sm:$0xff]
        %v729 = vld [vmem:[%s250 + $0xd58] sm:$0xff]
        %v730 = vld [vmem:[%s250 + $0xd60] sm:$0xff]
        %v731 = vld [vmem:[%s250 + $0xd68] sm:$0xff]
        %v732 = vld [vmem:[%s250 + $0xd70] sm:$0xff]
        %v733 = vld [vmem:[%s250 + $0xd78] sm:$0xff]
        %v734 = vld [vmem:[%s250 + $0xd80] sm:$0xff]
        %v735 = vld [vmem:[%s250 + $0xd88] sm:$0xff]
        %v736 = vld [vmem:[%s250 + $0xd90] sm:$0xff]
        %v737 = vld [vmem:[%s250 + $0xd98] sm:$0xff]
        %v738 = vld [vmem:[%s250 + $0xda0] sm:$0xff]
        %v739 = vld [vmem:[%s250 + $0xda8] sm:$0xff]
        %v740 = vld [vmem:[%s250 + $0xdb0] sm:$0xff]
        %v741 = vld [vmem:[%s250 + $0xdb8] sm:$0xff]
        %v742 = vld [vmem:[%s250 + $0xdc0] sm:$0xff]
        %v743 = vld [vmem:[%s250 + $0xdc8] sm:$0xff]
        %v744 = vld [vmem:[%s250 + $0xdd0] sm:$0xff]
        %v745 = vld [vmem:[%s250 + $0xdd8] sm:$0xff]
        %v746 = vld [vmem:[%s250 + $0xde0] sm:$0xff]
        %v747 = vld [vmem:[%s250 + $0xde8] sm:$0xff]
        %v748 = vld [vmem:[%s250 + $0xdf0] sm:$0xff]
        %v749 = vld [vmem:[%s250 + $0xdf8] sm:$0xff]
        %v750 = vld [vmem:[%s250 + $0xe00] sm:$0xff]
        %v751 = vld [vmem:[%s250 + $0xe08] sm:$0xff]
        %v752 = vld [vmem:[%s250 + $0xe10] sm:$0xff]
        %v753 = vld [vmem:[%s250 + $0xe18] sm:$0xff]
        %v754 = vld [vmem:[%s250 + $0xe20] sm:$0xff]
        %v755 = vld [vmem:[%s250 + $0xe28] sm:$0xff]
        %v756 = vld [vmem:[%s250 + $0xe30] sm:$0xff]
        %v757 = vld [vmem:[%s250 + $0xe38] sm:$0xff]
        %v758 = vld [vmem:[%s250 + $0xe40] sm:$0xff]
        %v759 = vld [vmem:[%s250 + $0xe48] sm:$0xff]
        %v760 = vld [vmem:[%s250 + $0xe50] sm:$0xff]
        %v761 = vld [vmem:[%s250 + $0xe58] sm:$0xff]
        %v762 = vld [vmem:[%s250 + $0xe60] sm:$0xff]
        %v763 = vld [vmem:[%s250 + $0xe68] sm:$0xff]
        %v764 = vld [vmem:[%s250 + $0xe70] sm:$0xff]
        %v765 = vld [vmem:[%s250 + $0xe78] sm:$0xff]
        %v766 = vld [vmem:[%s250 + $0xe80] sm:$0xff]
        %v767 = vld [vmem:[%s250 + $0xe88] sm:$0xff]
        %v768 = vld [vmem:[%s250 + $0xe90] sm:$0xff]
        %v769 = vld [vmem:[%s250 + $0xe98] sm:$0xff]
        %v770 = vld [vmem:[%s250 + $0xea0] sm:$0xff]
        %v771 = vld [vmem:[%s250 + $0xea8] sm:$0xff]
        %v772 = vld [vmem:[%s250 + $0xeb0] sm:$0xff]
        %v773 = vld [vmem:[%s250 + $0xeb8] sm:$0xff]
        %v774 = vld [vmem:[%s250 + $0xec0] sm:$0xff]
        %v775 = vld [vmem:[%s250 + $0xec8] sm:$0xff]
        %v776 = vld [vmem:[%s250 + $0xed0] sm:$0xff]
        %v777 = vld [vmem:[%s250 + $0xed8] sm:$0xff]
        %v778 = vld [vmem:[%s250 + $0xee0] sm:$0xff]
        %v779 = vld [vmem:[%s250 + $0xee8] sm:$0xff]
        %v780 = vld [vmem:[%s250 + $0xef0] sm:$0xff]
        %v781 = vld [vmem:[%s250 + $0xef8] sm:$0xff]
        %v782 = vld [vmem:[%s250 + $0xf00] sm:$0xff]
        %v783 = vld [vmem:[%s250 + $0xf08] sm:$0xff]
        %v784 = vld [vmem:[%s250 + $0xf10] sm:$0xff]
        %v785 = vld [vmem:[%s250 + $0xf18] sm:$0xff]
        %v786 = vld [vmem:[%s250 + $0xf20] sm:$0xff]
        %v787 = vld [vmem:[%s250 + $0xf28] sm:$0xff]
        %v788 = vld [vmem:[%s250 + $0xf30] sm:$0xff]
        %v789 = vld [vmem:[%s250 + $0xf38] sm:$0xff]
        %v790 = vld [vmem:[%s250 + $0xf40] sm:$0xff]
        %v791 = vld [vmem:[%s250 + $0xf48] sm:$0xff]
        %v792 = vld [vmem:[%s250 + $0xf50] sm:$0xff]
        %v793 = vld [vmem:[%s250 + $0xf58] sm:$0xff]
        %v794 = vld [vmem:[%s250 + $0xf60] sm:$0xff]
        %v795 = vld [vmem:[%s250 + $0xf68] sm:$0xff]
        %v796 = vld [vmem:[%s250 + $0xf70] sm:$0xff]
        %v797 = vld [vmem:[%s250 + $0xf78] sm:$0xff]
        %v798 = vld [vmem:[%s250 + $0xf80] sm:$0xff]
        %v799 = vld [vmem:[%s250 + $0xf88] sm:$0xff]
        %v800 = vld [vmem:[%s250 + $0xf90] sm:$0xff]
        %v801 = vld [vmem:[%s250 + $0xf98] sm:$0xff]
        %v802 = vld [vmem:[%s250 + $0xfa0] sm:$0xff]
        %v803 = vld [vmem:[%s250 + $0xfa8] sm:$0xff]
        %v804 = vld [vmem:[%s250 + $0xfb0] sm:$0xff]
        %v805 = vld [vmem:[%s250 + $0xfb8] sm:$0xff]
        %v806 = vld [vmem:[%s250 + $0xfc0] sm:$0xff]
        %v807 = vld [vmem:[%s250 + $0xfc8] sm:$0xff]
        %v808 = vld [vmem:[%s250 + $0xfd0] sm:$0xff]
        %v809 = vld [vmem:[%s250 + $0xfd8] sm:$0xff]
        %v810 = vld [vmem:[%s250 + $0xfe0] sm:$0xff]
        %v811 = vld [vmem:[%s250 + $0xfe8] sm:$0xff]
        %v812 = vld [vmem:[%s250 + $0xff0] sm:$0xff]
        %v813 = vld [vmem:[%s250 + $0xff8] sm:$0xff]
        %v814 = vld [vmem:[%s250 + $0x1000] sm:$0xff]
        %v815 = vld [vmem:[%s250 + $0x1008] sm:$0xff]
        %v816 = vld [vmem:[%s250 + $0x1010] sm:$0xff]
        %v817 = vld [vmem:[%s250 + $0x1018] sm:$0xff]
        %v818 = vld [vmem:[%s250 + $0x1020] sm:$0xff]
        %v819 = vld [vmem:[%s250 + $0x1028] sm:$0xff]
        %v820 = vld [vmem:[%s250 + $0x1030] sm:$0xff]
        %v821 = vld [vmem:[%s250 + $0x1038] sm:$0xff]
        %v822 = vld [vmem:[%s250 + $0x1040] sm:$0xff]
        %v823 = vld [vmem:[%s250 + $0x1048] sm:$0xff]
        %v824 = vld [vmem:[%s250 + $0x1050] sm:$0xff]
        %v825 = vld [vmem:[%s250 + $0x1058] sm:$0xff]
        %v826 = vld [vmem:[%s250 + $0x1060] sm:$0xff]
        %v827 = vld [vmem:[%s250 + $0x1068] sm:$0xff]
        %v828 = vld [vmem:[%s250 + $0x1070] sm:$0xff]
        %v829 = vld [vmem:[%s250 + $0x1078] sm:$0xff]
        %v830 = vld [vmem:[%s250 + $0x1080] sm:$0xff]
        %v831 = vld [vmem:[%s250 + $0x1088] sm:$0xff]
        %v832 = vld [vmem:[%s250 + $0x1090] sm:$0xff]
        %v833 = vld [vmem:[%s250 + $0x1098] sm:$0xff]
        %v834 = vld [vmem:[%s250 + $0x10a0] sm:$0xff]
        %v835 = vld [vmem:[%s250 + $0x10a8] sm:$0xff]
        %v836 = vld [vmem:[%s250 + $0x10b0] sm:$0xff]
        %v837 = vld [vmem:[%s250 + $0x10b8] sm:$0xff]
        %v838 = vld [vmem:[%s250 + $0x10c0] sm:$0xff]
        %v839 = vld [vmem:[%s250 + $0x10c8] sm:$0xff]
        %v840 = vld [vmem:[%s250 + $0x10d0] sm:$0xff]
        %v841 = vld [vmem:[%s250 + $0x10d8] sm:$0xff]
        %v842 = vld [vmem:[%s250 + $0x10e0] sm:$0xff]
        %v843 = vld [vmem:[%s250 + $0x10e8] sm:$0xff]
        %v844 = vld [vmem:[%s250 + $0x10f0] sm:$0xff]
        %v845 = vld [vmem:[%s250 + $0x10f8] sm:$0xff]
        %v846 = vld [vmem:[%s250 + $0x1100] sm:$0xff]
        %v847 = vld [vmem:[%s250 + $0x1108] sm:$0xff]
        %v848 = vld [vmem:[%s250 + $0x1110] sm:$0xff]
        %v849 = vld [vmem:[%s250 + $0x1118] sm:$0xff]
        %v850 = vld [vmem:[%s250 + $0x1120] sm:$0xff]
        %v851 = vld [vmem:[%s250 + $0x1128] sm:$0xff]
        %v852 = vld [vmem:[%s250 + $0x1130] sm:$0xff]
        %v853 = vld [vmem:[%s250 + $0x1138] sm:$0xff]
        %v854 = vld [vmem:[%s250 + $0x1140] sm:$0xff]
        %v855 = vld [vmem:[%s250 + $0x1148] sm:$0xff]
        %v856 = vld [vmem:[%s250 + $0x1150] sm:$0xff]
        %v857 = vld [vmem:[%s250 + $0x1158] sm:$0xff]
        %v858 = vld [vmem:[%s250 + $0x1160] sm:$0xff]
        %v859 = vld [vmem:[%s250 + $0x1168] sm:$0xff]
        %v860 = vld [vmem:[%s250 + $0x1170] sm:$0xff]
        %v861 = vld [vmem:[%s250 + $0x1178] sm:$0xff]
        %v862 = vld [vmem:[%s250 + $0x1180] sm:$0xff]
        %v863 = vld [vmem:[%s250 + $0x1188] sm:$0xff]
        %v864 = vld [vmem:[%s250 + $0x1190] sm:$0xff]
        %v865 = vld [vmem:[%s250 + $0x1198] sm:$0xff]
        %v866 = vld [vmem:[%s250 + $0x11a0] sm:$0xff]
        %v867 = vld [vmem:[%s250 + $0x11a8] sm:$0xff]
        %v868 = vld [vmem:[%s250 + $0x11b0] sm:$0xff]
        %v869 = vld [vmem:[%s250 + $0x11b8] sm:$0xff]
        %v870 = vld [vmem:[%s250 + $0x11c0] sm:$0xff]
        %v871 = vld [vmem:[%s250 + $0x11c8] sm:$0xff]
        %v872 = vld [vmem:[%s250 + $0x11d0] sm:$0xff]
        %v873 = vld [vmem:[%s250 + $0x11d8] sm:$0xff]
        %v874 = vld [vmem:[%s250 + $0x11e0] sm:$0xff]
        %v875 = vld [vmem:[%s250 + $0x11e8] sm:$0xff]
        %v876 = vld [vmem:[%s250 + $0x11f0] sm:$0xff]
        %v877 = vld [vmem:[%s250 + $0x11f8] sm:$0xff]
        %v878 = vld [vmem:[%s250 + $0x1200] sm:$0xff]
        %v879 = vld [vmem:[%s250 + $0x1208] sm:$0xff]
        %v880 = vld [vmem:[%s250 + $0x1210] sm:$0xff]
        %v881 = vld [vmem:[%s250 + $0x1218] sm:$0xff]
        %v882 = vld [vmem:[%s250 + $0x1220] sm:$0xff]
        %v883 = vld [vmem:[%s250 + $0x1228] sm:$0xff]
        %v884 = vld [vmem:[%s250 + $0x1230] sm:$0xff]
        %v885 = vld [vmem:[%s250 + $0x1238] sm:$0xff]
        %v886 = vld [vmem:[%s250 + $0x1240] sm:$0xff]
        %v887 = vld [vmem:[%s250 + $0x1248] sm:$0xff]
        %v888 = vld [vmem:[%s250 + $0x1250] sm:$0xff]
        %v889 = vld [vmem:[%s250 + $0x1258] sm:$0xff]
        %v890 = vld [vmem:[%s250 + $0x1260] sm:$0xff]
        %v891 = vld [vmem:[%s250 + $0x1268] sm:$0xff]
        %v892 = vld [vmem:[%s250 + $0x1270] sm:$0xff]
        %v893 = vld [vmem:[%s250 + $0x1278] sm:$0xff]
        %v894 = vld [vmem:[%s250 + $0x1280] sm:$0xff]
        %v895 = vld [vmem:[%s250 + $0x1288] sm:$0xff]
        %v896 = vld [vmem:[%s250 + $0x1290] sm:$0xff]
        %v897 = vld [vmem:[%s250 + $0x1298] sm:$0xff]
        %v898 = vld [vmem:[%s250 + $0x12a0] sm:$0xff]
        %v899 = vld [vmem:[%s250 + $0x12a8] sm:$0xff]
        %v900 = vld [vmem:[%s250 + $0x12b0] sm:$0xff]
        %v901 = vld [vmem:[%s250 + $0x12b8] sm:$0xff]
        %v902 = vld [vmem:[%s250 + $0x12c0] sm:$0xff]
        %v903 = vld [vmem:[%s250 + $0x12c8] sm:$0xff]
        %v904 = vld [vmem:[%s250 + $0x12d0] sm:$0xff]
        %v905 = vld [vmem:[%s250 + $0x12d8] sm:$0xff]
        %v906 = vld [vmem:[%s250 + $0x12e0] sm:$0xff]
        %v907 = vld [vmem:[%s250 + $0x12e8] sm:$0xff]
        %v908 = vld [vmem:[%s250 + $0x12f0] sm:$0xff]
        %v909 = vld [vmem:[%s250 + $0x12f8] sm:$0xff]
        %v910 = vld [vmem:[%s250 + $0x1300] sm:$0xff]
        %v911 = vld [vmem:[%s250 + $0x1308] sm:$0xff]
        %v912 = vld [vmem:[%s250 + $0x1310] sm:$0xff]
        %v913 = vld [vmem:[%s250 + $0x1318] sm:$0xff]
        %v914 = vld [vmem:[%s250 + $0x1320] sm:$0xff]
        %v915 = vld [vmem:[%s250 + $0x1328] sm:$0xff]
        %v916 = vld [vmem:[%s250 + $0x1330] sm:$0xff]
        %v917 = vld [vmem:[%s250 + $0x1338] sm:$0xff]
        %v918 = vld [vmem:[%s250 + $0x1340] sm:$0xff]
        %v919 = vld [vmem:[%s250 + $0x1348] sm:$0xff]
        %v920 = vld [vmem:[%s250 + $0x1350] sm:$0xff]
        %v921 = vld [vmem:[%s250 + $0x1358] sm:$0xff]
        %v922 = vld [vmem:[%s250 + $0x1360] sm:$0xff]
        %v923 = vld [vmem:[%s250 + $0x1368] sm:$0xff]
        %v924 = vld [vmem:[%s250 + $0x1370] sm:$0xff]
        %v925 = vld [vmem:[%s250 + $0x1378] sm:$0xff]
        %v926 = vld [vmem:[%s250 + $0x1380] sm:$0xff]
        %v927 = vld [vmem:[%s250 + $0x1388] sm:$0xff]
        %v928 = vld [vmem:[%s250 + $0x1390] sm:$0xff]
        %v929 = vld [vmem:[%s250 + $0x1398] sm:$0xff]
        %v930 = vld [vmem:[%s250 + $0x13a0] sm:$0xff]
        %v931 = vld [vmem:[%s250 + $0x13a8] sm:$0xff]
        %v932 = vld [vmem:[%s250 + $0x13b0] sm:$0xff]
        %v933 = vld [vmem:[%s250 + $0x13b8] sm:$0xff]
        %v934 = vld [vmem:[%s250 + $0x13c0] sm:$0xff]
        %v935 = vld [vmem:[%s250 + $0x13c8] sm:$0xff]
        %v936 = vld [vmem:[%s250 + $0x13d0] sm:$0xff]
        %v937 = vld [vmem:[%s250 + $0x13d8] sm:$0xff]
        %v938 = vld [vmem:[%s250 + $0x13e0] sm:$0xff]
        %v939 = vld [vmem:[%s250 + $0x13e8] sm:$0xff]
        %v940 = vld [vmem:[%s250 + $0x13f0] sm:$0xff]
        %v941 = vld [vmem:[%s250 + $0x13f8] sm:$0xff]
        %v942 = vld [vmem:[%s250 + $0x1400] sm:$0xff]
        %v943 = vld [vmem:[%s250 + $0x1408] sm:$0xff]
        %v944 = vld [vmem:[%s250 + $0x1410] sm:$0xff]
        %v945 = vld [vmem:[%s250 + $0x1418] sm:$0xff]
        %v946 = vld [vmem:[%s250 + $0x1420] sm:$0xff]
        %v947 = vld [vmem:[%s250 + $0x1428] sm:$0xff]
        %v948 = vld [vmem:[%s250 + $0x1430] sm:$0xff]
        %v949 = vld [vmem:[%s250 + $0x1438] sm:$0xff]
        %v950 = vld [vmem:[%s250 + $0x1440] sm:$0xff]
        %v951 = vld [vmem:[%s250 + $0x1448] sm:$0xff]
        %v952 = vld [vmem:[%s250 + $0x1450] sm:$0xff]
        %v953 = vld [vmem:[%s250 + $0x1458] sm:$0xff]
        %v954 = vld [vmem:[%s250 + $0x1460] sm:$0xff]
        %v955 = vld [vmem:[%s250 + $0x1468] sm:$0xff]
        %v956 = vld [vmem:[%s250 + $0x1470] sm:$0xff]
        %v957 = vld [vmem:[%s250 + $0x1478] sm:$0xff]
        %v958 = vld [vmem:[%s250 + $0x1480] sm:$0xff]
        %v959 = vld [vmem:[%s250 + $0x1488] sm:$0xff]
        %v960 = vld [vmem:[%s250 + $0x1490] sm:$0xff]
        %v961 = vld [vmem:[%s250 + $0x1498] sm:$0xff]
        %v962 = vld [vmem:[%s250 + $0x14a0] sm:$0xff]
        %v963 = vld [vmem:[%s250 + $0x14a8] sm:$0xff]
        %v964 = vld [vmem:[%s250 + $0x14b0] sm:$0xff]
        %v965 = vld [vmem:[%s250 + $0x14b8] sm:$0xff]
        %v966 = vld [vmem:[%s250 + $0x14c0] sm:$0xff]
        %v967 = vld [vmem:[%s250 + $0x14c8] sm:$0xff]
        %v968 = vld [vmem:[%s250 + $0x14d0] sm:$0xff]
        %v969 = vld [vmem:[%s250 + $0x14d8] sm:$0xff]
        %v970 = vld [vmem:[%s250 + $0x14e0] sm:$0xff]
        %v971 = vld [vmem:[%s250 + $0x14e8] sm:$0xff]
        %v972 = vld [vmem:[%s250 + $0x14f0] sm:$0xff]
        %v973 = vld [vmem:[%s250 + $0x14f8] sm:$0xff]
        %v974 = vld [vmem:[%s250 + $0x1500] sm:$0xff]
        %v975 = vld [vmem:[%s250 + $0x1508] sm:$0xff]
        %v976 = vld [vmem:[%s250 + $0x1510] sm:$0xff]
        %v977 = vld [vmem:[%s250 + $0x1518] sm:$0xff]
        %v978 = vld [vmem:[%s250 + $0x1520] sm:$0xff]
        %v979 = vld [vmem:[%s250 + $0x1528] sm:$0xff]
        %v980 = vld [vmem:[%s250 + $0x1530] sm:$0xff]
        %v981 = vld [vmem:[%s250 + $0x1538] sm:$0xff]
        %v982 = vld [vmem:[%s250 + $0x1540] sm:$0xff]
        %v983 = vld [vmem:[%s250 + $0x1548] sm:$0xff]
        %v984 = vld [vmem:[%s250 + $0x1550] sm:$0xff]
        %v985 = vld [vmem:[%s250 + $0x1558] sm:$0xff]
        %v986 = vld [vmem:[%s250 + $0x1560] sm:$0xff]
        %v987 = vld [vmem:[%s250 + $0x1568] sm:$0xff]
        %v988 = vld [vmem:[%s250 + $0x1570] sm:$0xff]
        %v989 = vld [vmem:[%s250 + $0x1578] sm:$0xff]
        %v990 = vld [vmem:[%s250 + $0x1580] sm:$0xff]
        %v991 = vld [vmem:[%s250 + $0x1588] sm:$0xff]
        %v992 = vld [vmem:[%s250 + $0x1590] sm:$0xff]
        %v993 = vld [vmem:[%s250 + $0x1598] sm:$0xff]
        %v994 = vld [vmem:[%s250 + $0x15a0] sm:$0xff]
        %v995 = vld [vmem:[%s250 + $0x15a8] sm:$0xff]
        %v996 = vld [vmem:[%s250 + $0x15b0] sm:$0xff]
        %v997 = vld [vmem:[%s250 + $0x15b8] sm:$0xff]
        %v998 = vld [vmem:[%s250 + $0x15c0] sm:$0xff]
        %v999 = vld [vmem:[%s250 + $0x15c8] sm:$0xff]
        %v1000 = vld [vmem:[%s250 + $0x15d0] sm:$0xff]
        %v1001 = vld [vmem:[%s250 + $0x15d8] sm:$0xff]
        %v1002 = vld [vmem:[%s250 + $0x15e0] sm:$0xff]
        %v1003 = vld [vmem:[%s250 + $0x15e8] sm:$0xff]
        %v1004 = vld [vmem:[%s250 + $0x15f0] sm:$0xff]
        %v1005 = vld [vmem:[%s250 + $0x15f8] sm:$0xff]
        %v1006 = vld [vmem:[%s250 + $0x1600] sm:$0xff]
        %v1007 = vld [vmem:[%s250 + $0x1608] sm:$0xff]
        %v1008 = vld [vmem:[%s250 + $0x1610] sm:$0xff]
        %v1009 = vld [vmem:[%s250 + $0x1618] sm:$0xff]
        %v1010 = vld [vmem:[%s250 + $0x1620] sm:$0xff]
        %v1011 = vld [vmem:[%s250 + $0x1628] sm:$0xff]
        %v1012 = vld [vmem:[%s250 + $0x1630] sm:$0xff]
        %v1013 = vld [vmem:[%s250 + $0x1638] sm:$0xff]
        %v1014 = vld [vmem:[%s250 + $0x1640] sm:$0xff]
        %v1015 = vld [vmem:[%s250 + $0x1648] sm:$0xff]
        %v1016 = vld [vmem:[%s250 + $0x1650] sm:$0xff]
        %v1017 = vld [vmem:[%s250 + $0x1658] sm:$0xff]
        %v1018 = vld [vmem:[%s250 + $0x1660] sm:$0xff]
        %v1019 = vld [vmem:[%s250 + $0x1668] sm:$0xff]
        %v1020 = vld [vmem:[%s250 + $0x1670] sm:$0xff]
        %v1021 = vld [vmem:[%s250 + $0x1678] sm:$0xff]
        %v1022 = vld [vmem:[%s250 + $0x1680] sm:$0xff]
        %v1023 = vld [vmem:[%s250 + $0x1688] sm:$0xff]
        %v1024 = vld [vmem:[%s250 + $0x1690] sm:$0xff]
        %v1025 = vld [vmem:[%s250 + $0x1698] sm:$0xff]
        %v1026 = vld [vmem:[%s250 + $0x16a0] sm:$0xff]
        %v1027 = vld [vmem:[%s250 + $0x16a8] sm:$0xff]
        %v1028 = vld [vmem:[%s250 + $0x16b0] sm:$0xff]
        %v1029 = vld [vmem:[%s250 + $0x16b8] sm:$0xff]
        %v1030 = vld [vmem:[%s250 + $0x16c0] sm:$0xff]
        %v1031 = vld [vmem:[%s250 + $0x16c8] sm:$0xff]
        %v1032 = vld [vmem:[%s250 + $0x16d0] sm:$0xff]
        %v1033 = vld [vmem:[%s250 + $0x16d8] sm:$0xff]
        %v1034 = vld [vmem:[%s250 + $0x16e0] sm:$0xff]
        %v1035 = vld [vmem:[%s250 + $0x16e8] sm:$0xff]
        %v1036 = vld [vmem:[%s250 + $0x16f0] sm:$0xff]
        %v1037 = vld [vmem:[%s250 + $0x16f8] sm:$0xff]
        %v1038 = vld [vmem:[%s250 + $0x1700] sm:$0xff]
        %v1039 = vld [vmem:[%s250 + $0x1708] sm:$0xff]
        %v1040 = vld [vmem:[%s250 + $0x1710] sm:$0xff]
        %v1041 = vld [vmem:[%s250 + $0x1718] sm:$0xff]
        %v1042 = vld [vmem:[%s250 + $0x1720] sm:$0xff]
        %v1043 = vld [vmem:[%s250 + $0x1728] sm:$0xff]
        %v1044 = vld [vmem:[%s250 + $0x1730] sm:$0xff]
        %v1045 = vld [vmem:[%s250 + $0x1738] sm:$0xff]
        %v1046 = vld [vmem:[%s250 + $0x1740] sm:$0xff]
        %v1047 = vld [vmem:[%s250 + $0x1748] sm:$0xff]
        %v1048 = vld [vmem:[%s250 + $0x1750] sm:$0xff]
        %v1049 = vld [vmem:[%s250 + $0x1758] sm:$0xff]
        %v1050 = vld [vmem:[%s250 + $0x1760] sm:$0xff]
        %v1051 = vld [vmem:[%s250 + $0x1768] sm:$0xff]
        %v1052 = vld [vmem:[%s250 + $0x1770] sm:$0xff]
        %v1053 = vld [vmem:[%s250 + $0x1778] sm:$0xff]
        %v1054 = vld [vmem:[%s250 + $0x1780] sm:$0xff]
        %v1055 = vld [vmem:[%s250 + $0x1788] sm:$0xff]
        %v1056 = vld [vmem:[%s250 + $0x1790] sm:$0xff]
        %v1057 = vld [vmem:[%s250 + $0x1798] sm:$0xff]
        %v1058 = vld [vmem:[%s250 + $0x17a0] sm:$0xff]
        %v1059 = vld [vmem:[%s250 + $0x17a8] sm:$0xff]
        %v1060 = vld [vmem:[%s250 + $0x17b0] sm:$0xff]
        %v1061 = vld [vmem:[%s250 + $0x17b8] sm:$0xff]
        %v1062 = vld [vmem:[%s250 + $0x17c0] sm:$0xff]
        %v1063 = vld [vmem:[%s250 + $0x17c8] sm:$0xff]
        %v1064 = vld [vmem:[%s250 + $0x17d0] sm:$0xff]
        %v1065 = vld [vmem:[%s250 + $0x17d8] sm:$0xff]
        %v1066 = vld [vmem:[%s250 + $0x17e0] sm:$0xff]
        %v1067 = vld [vmem:[%s250 + $0x17e8] sm:$0xff]
        %v1068 = vld [vmem:[%s250 + $0x17f0] sm:$0xff]
        %v1069 = vld [vmem:[%s250 + $0x17f8] sm:$0xff]
        %v1070 = vld [vmem:[%s250 + $0x1800] sm:$0xff]
        %v1071 = vld [vmem:[%s250 + $0x1808] sm:$0xff]
        %v1072 = vld [vmem:[%s250 + $0x1810] sm:$0xff]
        %v1073 = vld [vmem:[%s250 + $0x1818] sm:$0xff]
        %v1074 = vld [vmem:[%s250 + $0x1820] sm:$0xff]
        %v1075 = vld [vmem:[%s250 + $0x1828] sm:$0xff]
        %v1076 = vld [vmem:[%s250 + $0x1830] sm:$0xff]
        %v1077 = vld [vmem:[%s250 + $0x1838] sm:$0xff]
        %v1078 = vld [vmem:[%s250 + $0x1840] sm:$0xff]
        %v1079 = vld [vmem:[%s250 + $0x1848] sm:$0xff]
        %v1080 = vld [vmem:[%s250 + $0x1850] sm:$0xff]
        %v1081 = vld [vmem:[%s250 + $0x1858] sm:$0xff]
        %v1082 = vld [vmem:[%s250 + $0x1860] sm:$0xff]
        %v1083 = vld [vmem:[%s250 + $0x1868] sm:$0xff]
        %v1084 = vld [vmem:[%s250 + $0x1870] sm:$0xff]
        %v1085 = vld [vmem:[%s250 + $0x1878] sm:$0xff]
        %v1086 = vld [vmem:[%s250 + $0x1880] sm:$0xff]
        %v1087 = vld [vmem:[%s250 + $0x1888] sm:$0xff]
        %v1088 = vld [vmem:[%s250 + $0x1890] sm:$0xff]
        %v1089 = vld [vmem:[%s250 + $0x1898] sm:$0xff]
        %v1090 = vld [vmem:[%s250 + $0x18a0] sm:$0xff]
        %v1091 = vld [vmem:[%s250 + $0x18a8] sm:$0xff]
        %v1092 = vld [vmem:[%s250 + $0x18b0] sm:$0xff]
        %v1093 = vld [vmem:[%s250 + $0x18b8] sm:$0xff]
        %v1094 = vld [vmem:[%s250 + $0x18c0] sm:$0xff]
        %v1095 = vld [vmem:[%s250 + $0x18c8] sm:$0xff]
        %v1096 = vld [vmem:[%s250 + $0x18d0] sm:$0xff]
        %v1097 = vld [vmem:[%s250 + $0x18d8] sm:$0xff]
        %v1098 = vld [vmem:[%s250 + $0x18e0] sm:$0xff]
        %v1099 = vld [vmem:[%s250 + $0x18e8] sm:$0xff]
        %v1100 = vld [vmem:[%s250 + $0x18f0] sm:$0xff]
        %v1101 = vld [vmem:[%s250 + $0x18f8] sm:$0xff]
        %v1102 = vld [vmem:[%s250 + $0x1900] sm:$0xff]
        %v1103 = vld [vmem:[%s250 + $0x1908] sm:$0xff]
        %v1104 = vld [vmem:[%s250 + $0x1910] sm:$0xff]
        %v1105 = vld [vmem:[%s250 + $0x1918] sm:$0xff]
        %v1106 = vld [vmem:[%s250 + $0x1920] sm:$0xff]
        %v1107 = vld [vmem:[%s250 + $0x1928] sm:$0xff]
        %v1108 = vld [vmem:[%s250 + $0x1930] sm:$0xff]
        %v1109 = vld [vmem:[%s250 + $0x1938] sm:$0xff]
        %v1110 = vld [vmem:[%s250 + $0x1940] sm:$0xff]
        %v1111 = vld [vmem:[%s250 + $0x1948] sm:$0xff]
        %v1112 = vld [vmem:[%s250 + $0x1950] sm:$0xff]
        %v1113 = vld [vmem:[%s250 + $0x1958] sm:$0xff]
        %v1114 = vld [vmem:[%s250 + $0x1960] sm:$0xff]
        %v1115 = vld [vmem:[%s250 + $0x1968] sm:$0xff]
        %v1116 = vld [vmem:[%s250 + $0x1970] sm:$0xff]
        %v1117 = vld [vmem:[%s250 + $0x1978] sm:$0xff]
        %v1118 = vld [vmem:[%s250 + $0x1980] sm:$0xff]
        %v1119 = vld [vmem:[%s250 + $0x1988] sm:$0xff]
        %v1120 = vld [vmem:[%s250 + $0x1990] sm:$0xff]
        %v1121 = vld [vmem:[%s250 + $0x1998] sm:$0xff]
        %v1122 = vld [vmem:[%s250 + $0x19a0] sm:$0xff]
        %v1123 = vld [vmem:[%s250 + $0x19a8] sm:$0xff]
        %v1124 = vld [vmem:[%s250 + $0x19b0] sm:$0xff]
        %v1125 = vld [vmem:[%s250 + $0x19b8] sm:$0xff]
        %v1126 = vld [vmem:[%s250 + $0x19c0] sm:$0xff]
        %v1127 = vld [vmem:[%s250 + $0x19c8] sm:$0xff]
        %v1128 = vld [vmem:[%s250 + $0x19d0] sm:$0xff]
        %v1129 = vld [vmem:[%s250 + $0x19d8] sm:$0xff]
        %v1130 = vld [vmem:[%s250 + $0x19e0] sm:$0xff]
        %v1131 = vld [vmem:[%s250 + $0x19e8] sm:$0xff]
        %v1132 = vld [vmem:[%s250 + $0x19f0] sm:$0xff]
        %v1133 = vld [vmem:[%s250 + $0x19f8] sm:$0xff]
        %v1134 = vld [vmem:[%s250 + $0x1a00] sm:$0xff]
        %v1135 = vld [vmem:[%s250 + $0x1a08] sm:$0xff]
        %v1136 = vld [vmem:[%s250 + $0x1a10] sm:$0xff]
        %v1137 = vld [vmem:[%s250 + $0x1a18] sm:$0xff]
        %v1138 = vld [vmem:[%s250 + $0x1a20] sm:$0xff]
        %v1139 = vld [vmem:[%s250 + $0x1a28] sm:$0xff]
        %v1140 = vld [vmem:[%s250 + $0x1a30] sm:$0xff]
        %v1141 = vld [vmem:[%s250 + $0x1a38] sm:$0xff]
        %v1142 = vld [vmem:[%s250 + $0x1a40] sm:$0xff]
        %v1143 = vld [vmem:[%s250 + $0x1a48] sm:$0xff]
        %v1144 = vld [vmem:[%s250 + $0x1a50] sm:$0xff]
        %v1145 = vld [vmem:[%s250 + $0x1a58] sm:$0xff]
        %v1146 = vld [vmem:[%s250 + $0x1a60] sm:$0xff]
        %v1147 = vld [vmem:[%s250 + $0x1a68] sm:$0xff]
        %v1148 = vld [vmem:[%s250 + $0x1a70] sm:$0xff]
        %v1149 = vld [vmem:[%s250 + $0x1a78] sm:$0xff]
        %v1150 = vld [vmem:[%s250 + $0x1a80] sm:$0xff]
        %v1151 = vld [vmem:[%s250 + $0x1a88] sm:$0xff]
        %v1152 = vld [vmem:[%s250 + $0x1a90] sm:$0xff]
        %v1153 = vld [vmem:[%s250 + $0x1a98] sm:$0xff]
        %v1154 = vld [vmem:[%s250 + $0x1aa0] sm:$0xff]
        %v1155 = vld [vmem:[%s250 + $0x1aa8] sm:$0xff]
        %v1156 = vld [vmem:[%s250 + $0x1ab0] sm:$0xff]
        %v1157 = vld [vmem:[%s250 + $0x1ab8] sm:$0xff]
        %v1158 = vld [vmem:[%s250 + $0x1ac0] sm:$0xff]
        %v1159 = vld [vmem:[%s250 + $0x1ac8] sm:$0xff]
        %v1160 = vld [vmem:[%s250 + $0x1ad0] sm:$0xff]
        %v1161 = vld [vmem:[%s250 + $0x1ad8] sm:$0xff]
        %v1162 = vld [vmem:[%s250 + $0x1ae0] sm:$0xff]
        %v1163 = vld [vmem:[%s250 + $0x1ae8] sm:$0xff]
        %v1164 = vld [vmem:[%s250 + $0x1af0] sm:$0xff]
        %v1165 = vld [vmem:[%s250 + $0x1af8] sm:$0xff]
        %v1166 = vld [vmem:[%s250 + $0x1b00] sm:$0xff]
        %v1167 = vld [vmem:[%s250 + $0x1b08] sm:$0xff]
        %v1168 = vld [vmem:[%s250 + $0x1b10] sm:$0xff]
        %v1169 = vld [vmem:[%s250 + $0x1b18] sm:$0xff]
        %v1170 = vld [vmem:[%s250 + $0x1b20] sm:$0xff]
        %v1171 = vld [vmem:[%s250 + $0x1b28] sm:$0xff]
        %v1172 = vld [vmem:[%s250 + $0x1b30] sm:$0xff]
        %v1173 = vld [vmem:[%s250 + $0x1b38] sm:$0xff]
        %v1174 = vld [vmem:[%s250 + $0x1b40] sm:$0xff]
        %v1175 = vld [vmem:[%s250 + $0x1b48] sm:$0xff]
        %v1176 = vld [vmem:[%s250 + $0x1b50] sm:$0xff]
        %v1177 = vld [vmem:[%s250 + $0x1b58] sm:$0xff]
        %v1178 = vld [vmem:[%s250 + $0x1b60] sm:$0xff]
        %v1179 = vld [vmem:[%s250 + $0x1b68] sm:$0xff]
        %v1180 = vld [vmem:[%s250 + $0x1b70] sm:$0xff]
        %v1181 = vld [vmem:[%s250 + $0x1b78] sm:$0xff]
        %v1182 = vld [vmem:[%s250 + $0x1b80] sm:$0xff]
        %v1183 = vld [vmem:[%s250 + $0x1b88] sm:$0xff]
        %v1184 = vld [vmem:[%s250 + $0x1b90] sm:$0xff]
        %v1185 = vld [vmem:[%s250 + $0x1b98] sm:$0xff]
        %v1186 = vld [vmem:[%s250 + $0x1ba0] sm:$0xff]
        %v1187 = vld [vmem:[%s250 + $0x1ba8] sm:$0xff]
        %v1188 = vld [vmem:[%s250 + $0x1bb0] sm:$0xff]
        %v1189 = vld [vmem:[%s250 + $0x1bb8] sm:$0xff]
        %v1190 = vld [vmem:[%s250 + $0x1bc0] sm:$0xff]
        %v1191 = vld [vmem:[%s250 + $0x1bc8] sm:$0xff]
        %v1192 = vld [vmem:[%s250 + $0x1bd0] sm:$0xff]
        %v1193 = vld [vmem:[%s250 + $0x1bd8] sm:$0xff]
        %v1194 = vld [vmem:[%s250 + $0x1be0] sm:$0xff]
        %v1195 = vld [vmem:[%s250 + $0x1be8] sm:$0xff]
        %v1196 = vld [vmem:[%s250 + $0x1bf0] sm:$0xff]
        %v1197 = vld [vmem:[%s250 + $0x1bf8] sm:$0xff]
        %v1198 = vld [vmem:[%s250 + $0x1c00] sm:$0xff]
        %v1199 = vld [vmem:[%s250 + $0x1c08] sm:$0xff]
        %v1200 = vld [vmem:[%s250 + $0x1c10] sm:$0xff]
        %v1201 = vld [vmem:[%s250 + $0x1c18] sm:$0xff]
        %v1202 = vld [vmem:[%s250 + $0x1c20] sm:$0xff]
        %v1203 = vld [vmem:[%s250 + $0x1c28] sm:$0xff]
        %v1204 = vld [vmem:[%s250 + $0x1c30] sm:$0xff]
        %v1205 = vld [vmem:[%s250 + $0x1c38] sm:$0xff]
        %v1206 = vld [vmem:[%s250 + $0x1c40] sm:$0xff]
        %v1207 = vld [vmem:[%s250 + $0x1c48] sm:$0xff]
        %v1208 = vld [vmem:[%s250 + $0x1c50] sm:$0xff]
        %v1209 = vld [vmem:[%s250 + $0x1c58] sm:$0xff]
        %v1210 = vld [vmem:[%s250 + $0x1c60] sm:$0xff]
        %v1211 = vld [vmem:[%s250 + $0x1c68] sm:$0xff]
        %v1212 = vld [vmem:[%s250 + $0x1c70] sm:$0xff]
        %v1213 = vld [vmem:[%s250 + $0x1c78] sm:$0xff]
        %v1214 = vld [vmem:[%s250 + $0x1c80] sm:$0xff]
        %v1215 = vld [vmem:[%s250 + $0x1c88] sm:$0xff]
        %v1216 = vld [vmem:[%s250 + $0x1c90] sm:$0xff]
        %v1217 = vld [vmem:[%s250 + $0x1c98] sm:$0xff]
        %v1218 = vld [vmem:[%s250 + $0x1ca0] sm:$0xff]
        %v1219 = vld [vmem:[%s250 + $0x1ca8] sm:$0xff]
        %v1220 = vld [vmem:[%s250 + $0x1cb0] sm:$0xff]
        %v1221 = vld [vmem:[%s250 + $0x1cb8] sm:$0xff]
        %v1222 = vld [vmem:[%s250 + $0x1cc0] sm:$0xff]
        %v1223 = vld [vmem:[%s250 + $0x1cc8] sm:$0xff]
        %v1224 = vld [vmem:[%s250 + $0x1cd0] sm:$0xff]
        %v1225 = vld [vmem:[%s250 + $0x1cd8] sm:$0xff]
        %v1226 = vld [vmem:[%s250 + $0x1ce0] sm:$0xff]
        %v1227 = vld [vmem:[%s250 + $0x1ce8] sm:$0xff]
        %v1228 = vld [vmem:[%s250 + $0x1cf0] sm:$0xff]
        %v1229 = vld [vmem:[%s250 + $0x1cf8] sm:$0xff]
        %v1230 = vld [vmem:[%s250 + $0x1d00] sm:$0xff]
        %v1231 = vld [vmem:[%s250 + $0x1d08] sm:$0xff]
        %v1232 = vld [vmem:[%s250 + $0x1d10] sm:$0xff]
        %v1233 = vld [vmem:[%s250 + $0x1d18] sm:$0xff]
        %v1234 = vld [vmem:[%s250 + $0x1d20] sm:$0xff]
        %v1235 = vld [vmem:[%s250 + $0x1d28] sm:$0xff]
        %v1236 = vld [vmem:[%s250 + $0x1d30] sm:$0xff]
        %v1237 = vld [vmem:[%s250 + $0x1d38] sm:$0xff]
        %v1238 = vld [vmem:[%s250 + $0x1d40] sm:$0xff]
        %v1239 = vld [vmem:[%s250 + $0x1d48] sm:$0xff]
        %v1240 = vld [vmem:[%s250 + $0x1d50] sm:$0xff]
        %v1241 = vld [vmem:[%s250 + $0x1d58] sm:$0xff]
        %v1242 = vld [vmem:[%s250 + $0x1d60] sm:$0xff]
        %v1243 = vld [vmem:[%s250 + $0x1d68] sm:$0xff]
        %v1244 = vld [vmem:[%s250 + $0x1d70] sm:$0xff]
        %v1245 = vld [vmem:[%s250 + $0x1d78] sm:$0xff]
        %v1246 = vld [vmem:[%s250 + $0x1d80] sm:$0xff]
        %v1247 = vld [vmem:[%s250 + $0x1d88] sm:$0xff]
        %v1248 = vld [vmem:[%s250 + $0x1d90] sm:$0xff]
        %v1249 = vld [vmem:[%s250 + $0x1d98] sm:$0xff]
        %v1250 = vld [vmem:[%s250 + $0x1da0] sm:$0xff]
        %v1251 = vld [vmem:[%s250 + $0x1da8] sm:$0xff]
        %v1252 = vld [vmem:[%s250 + $0x1db0] sm:$0xff]
        %v1253 = vld [vmem:[%s250 + $0x1db8] sm:$0xff]
        %v1254 = vld [vmem:[%s250 + $0x1dc0] sm:$0xff]
        %v1255 = vld [vmem:[%s250 + $0x1dc8] sm:$0xff]
        %v1256 = vld [vmem:[%s250 + $0x1dd0] sm:$0xff]
        %v1257 = vld [vmem:[%s250 + $0x1dd8] sm:$0xff]
        %v1258 = vld [vmem:[%s250 + $0x1de0] sm:$0xff]
        %v1259 = vld [vmem:[%s250 + $0x1de8] sm:$0xff]
        %v1260 = vld [vmem:[%s250 + $0x1df0] sm:$0xff]
        %v1261 = vld [vmem:[%s250 + $0x1df8] sm:$0xff]
        %v1262 = vld [vmem:[%s250 + $0x1e00] sm:$0xff]
        %v1263 = vld [vmem:[%s250 + $0x1e08] sm:$0xff]
        %v1264 = vld [vmem:[%s250 + $0x1e10] sm:$0xff]
        %v1265 = vld [vmem:[%s250 + $0x1e18] sm:$0xff]
        %v1266 = vld [vmem:[%s250 + $0x1e20] sm:$0xff]
        %v1267 = vld [vmem:[%s250 + $0x1e28] sm:$0xff]
        %v1268 = vld [vmem:[%s250 + $0x1e30] sm:$0xff]
        %v1269 = vld [vmem:[%s250 + $0x1e38] sm:$0xff]
        %v1270 = vld [vmem:[%s250 + $0x1e40] sm:$0xff]
        %v1271 = vld [vmem:[%s250 + $0x1e48] sm:$0xff]
        %v1272 = vld [vmem:[%s250 + $0x1e50] sm:$0xff]
        %v1273 = vld [vmem:[%s250 + $0x1e58] sm:$0xff]
        %v1274 = vld [vmem:[%s250 + $0x1e60] sm:$0xff]
        %v1275 = vld [vmem:[%s250 + $0x1e68] sm:$0xff]
        %v1276 = vld [vmem:[%s250 + $0x1e70] sm:$0xff]
        %v1277 = vld [vmem:[%s250 + $0x1e78] sm:$0xff]
        %v1278 = vld [vmem:[%s250 + $0x1e80] sm:$0xff]
        %v1279 = vld [vmem:[%s250 + $0x1e88] sm:$0xff]
        %v1280 = vld [vmem:[%s250 + $0x1e90] sm:$0xff]
        %v1281 = vld [vmem:[%s250 + $0x1e98] sm:$0xff]
        %v1282 = vld [vmem:[%s250 + $0x1ea0] sm:$0xff]
        %v1283 = vld [vmem:[%s250 + $0x1ea8] sm:$0xff]
        %v1284 = vld [vmem:[%s250 + $0x1eb0] sm:$0xff]
        %v1285 = vld [vmem:[%s250 + $0x1eb8] sm:$0xff]
        %v1286 = vld [vmem:[%s250 + $0x1ec0] sm:$0xff]
        %v1287 = vld [vmem:[%s250 + $0x1ec8] sm:$0xff]
        %v1288 = vld [vmem:[%s250 + $0x1ed0] sm:$0xff]
        %v1289 = vld [vmem:[%s250 + $0x1ed8] sm:$0xff]
        %v1290 = vld [vmem:[%s250 + $0x1ee0] sm:$0xff]
        %v1291 = vld [vmem:[%s250 + $0x1ee8] sm:$0xff]
        %v1292 = vld [vmem:[%s250 + $0x1ef0] sm:$0xff]
        %v1293 = vld [vmem:[%s250 + $0x1ef8] sm:$0xff]
        %v1294 = vld [vmem:[%s250 + $0x1f00] sm:$0xff]
        %v1295 = vld [vmem:[%s250 + $0x1f08] sm:$0xff]
        %v1296 = vld [vmem:[%s250 + $0x1f10] sm:$0xff]
        %v1297 = vld [vmem:[%s250 + $0x1f18] sm:$0xff]
        %v1298 = vld [vmem:[%s250 + $0x1f20] sm:$0xff]
        %v1299 = vld [vmem:[%s250 + $0x1f28] sm:$0xff]
        %v1300 = vld [vmem:[%s250 + $0x1f30] sm:$0xff]
        %v1301 = vld [vmem:[%s250 + $0x1f38] sm:$0xff]
        %v1302 = vld [vmem:[%s250 + $0x1f40] sm:$0xff]
        %v1303 = vld [vmem:[%s250 + $0x1f48] sm:$0xff]
        %v1304 = vld [vmem:[%s250 + $0x1f50] sm:$0xff]
        %v1305 = vld [vmem:[%s250 + $0x1f58] sm:$0xff]
        %v1306 = vld [vmem:[%s250 + $0x1f60] sm:$0xff]
        %v1307 = vld [vmem:[%s250 + $0x1f68] sm:$0xff]
        %v1308 = vld [vmem:[%s250 + $0x1f70] sm:$0xff]
        %v1309 = vld [vmem:[%s250 + $0x1f78] sm:$0xff]
        %v1310 = vld [vmem:[%s250 + $0x1f80] sm:$0xff]
        %v1311 = vld [vmem:[%s250 + $0x1f88] sm:$0xff]
        %v1312 = vld [vmem:[%s250 + $0x1f90] sm:$0xff]
        %v1313 = vld [vmem:[%s250 + $0x1f98] sm:$0xff]
        %v1314 = vld [vmem:[%s250 + $0x1fa0] sm:$0xff]
        %v1315 = vld [vmem:[%s250 + $0x1fa8] sm:$0xff]
        %v1316 = vld [vmem:[%s250 + $0x1fb0] sm:$0xff]
        %v1317 = vld [vmem:[%s250 + $0x1fb8] sm:$0xff]
        %v1318 = vld [vmem:[%s250 + $0x1fc0] sm:$0xff]
        %v1319 = vld [vmem:[%s250 + $0x1fc8] sm:$0xff]
        %v1320 = vld [vmem:[%s250 + $0x1fd0] sm:$0xff]
        %v1321 = vld [vmem:[%s250 + $0x1fd8] sm:$0xff]
        %v1322 = vld [vmem:[%s250 + $0x1fe0] sm:$0xff]
        %v1323 = vld [vmem:[%s250 + $0x1fe8] sm:$0xff]
        %v1324 = vld [vmem:[%s250 + $0x1ff0] sm:$0xff]
        %v1325 = vld [vmem:[%s250 + $0x1ff8] sm:$0xff]
        %1326 = vmatprep.subr.mxu0 %v423
        %1327 = vmatpush1.msra.mxu0 %v422
        %1328 = vmatprep.subr.mxu0 %v415
        %1329 = vmatpush1.msra.mxu0 %v414
        %1330 = vmatprep.subr.mxu0 %v407
        %1331 = vmatpush1.msra.mxu0 %v406
        %1332 = vmatprep.subr.mxu0 %v399
        %1333 = vmatpush1.msra.mxu0 %v398
        %1334 = vmatprep.subr.mxu0 %v391
        %1335 = vmatpush1.msra.mxu0 %v390
        %1336 = vmatprep.subr.mxu0 %v383
        %1337 = vmatpush1.msra.mxu0 %v382
        %1338 = vmatprep.subr.mxu0 %v375
        %1339 = vmatpush1.msra.mxu0 %v374
        %1340 = vmatprep.subr.mxu0 %v367
        %1341 = vmatpush1.msra.mxu0 %v366
        %1342 = vmatprep.subr.mxu0 %v359
        %1343 = vmatpush1.msra.mxu0 %v358
        %1344 = vmatprep.subr.mxu0 %v351
        %1345 = vmatpush1.msra.mxu0 %v350
        %1346 = vmatprep.subr.mxu0 %v343
        %1347 = vmatpush1.msra.mxu0 %v342
        %1348 = vmatprep.subr.mxu0 %v335
        %1349 = vmatpush1.msra.mxu0 %v334
        %1350 = vmatprep.subr.mxu0 %v327
        %1351 = vmatpush1.msra.mxu0 %v326
        %1352 = vmatprep.subr.mxu0 %v319
        %1353 = vmatpush1.msra.mxu0 %v318
        %1354 = vmatprep.subr.mxu0 %v311
        %1355 = vmatpush1.msra.mxu0 %v310
        %1356 = vmatprep.subr.mxu0 %v303
        %1357 = vmatpush1.msra.mxu0 %v302
        %1358 = vmatprep.subr.mxu0 %v551
        %1359 = vmatpush2.msra.mxu0 %v550
        %1360 = vmatprep.subr.mxu0 %v543
        %1361 = vmatpush2.msra.mxu0 %v542
        %1362 = vmatprep.subr.mxu0 %v535
        %1363 = vmatpush2.msra.mxu0 %v534
        %1364 = vmatprep.subr.mxu0 %v527
        %1365 = vmatpush2.msra.mxu0 %v526
        %1366 = vmatprep.subr.mxu0 %v519
        %1367 = vmatpush2.msra.mxu0 %v518
        %1368 = vmatprep.subr.mxu0 %v511
        %1369 = vmatpush2.msra.mxu0 %v510
        %1370 = vmatprep.subr.mxu0 %v503
        %1371 = vmatpush2.msra.mxu0 %v502
        %1372 = vmatprep.subr.mxu0 %v495
        %1373 = vmatpush2.msra.mxu0 %v494
        %1374 = vmatprep.subr.mxu0 %v487
        %1375 = vmatpush2.msra.mxu0 %v486
        %1376 = vmatprep.subr.mxu0 %v479
        %1377 = vmatpush2.msra.mxu0 %v478
        %1378 = vmatprep.subr.mxu0 %v471
        %1379 = vmatpush2.msra.mxu0 %v470
        %1380 = vmatprep.subr.mxu0 %v463
        %1381 = vmatpush2.msra.mxu0 %v462
        %1382 = vmatprep.subr.mxu0 %v455
        %1383 = vmatpush2.msra.mxu0 %v454
        %1384 = vmatprep.subr.mxu0 %v447
        %1385 = vmatpush2.msra.mxu0 %v446
        %1386 = vmatprep.subr.mxu0 %v439
        %1387 = vmatpush2.msra.mxu0 %v438
        %1388 = vmatprep.subr.mxu0 %v431
        %1389 = vmatpush2.msra.mxu0 %v430
        %1390 = vmatprep.mubr.f32.mxu0 %v295
        %1391 = vmatmul.mubr.f32.gmra.mxu0 %v294
        %v1392 = vpop.f32.mrf.mxu0
        %v1393 = vadd.f32 0.0, %v1392
        %v1394 = vpop.f32.mrf.mxu0
        %v1395 = vadd.f32 0.0, %v1394
        %1396 = vdwg.mxu0
        %1397 = vmatprep.subr.mxu0 %v679
        %1398 = vmatpush1.msra.mxu0 %v678
        %1399 = vmatprep.subr.mxu0 %v671
        %1400 = vmatpush1.msra.mxu0 %v670
        %1401 = vmatprep.subr.mxu0 %v663
        %1402 = vmatpush1.msra.mxu0 %v662
        %1403 = vmatprep.subr.mxu0 %v655
        %1404 = vmatpush1.msra.mxu0 %v654
        %1405 = vmatprep.subr.mxu0 %v647
        %1406 = vmatpush1.msra.mxu0 %v646
        %1407 = vmatprep.subr.mxu0 %v639
        %1408 = vmatpush1.msra.mxu0 %v638
        %1409 = vmatprep.subr.mxu0 %v631
        %1410 = vmatpush1.msra.mxu0 %v630
        %1411 = vmatprep.subr.mxu0 %v623
        %1412 = vmatpush1.msra.mxu0 %v622
        %1413 = vmatprep.subr.mxu0 %v615
        %1414 = vmatpush1.msra.mxu0 %v614
        %1415 = vmatprep.subr.mxu0 %v607
        %1416 = vmatpush1.msra.mxu0 %v606
        %1417 = vmatprep.subr.mxu0 %v599
        %1418 = vmatpush1.msra.mxu0 %v598
        %1419 = vmatprep.subr.mxu0 %v591
        %1420 = vmatpush1.msra.mxu0 %v590
        %1421 = vmatprep.subr.mxu0 %v583
        %1422 = vmatpush1.msra.mxu0 %v582
        %1423 = vmatprep.subr.mxu0 %v575
        %1424 = vmatpush1.msra.mxu0 %v574
        %1425 = vmatprep.subr.mxu0 %v567
        %1426 = vmatpush1.msra.mxu0 %v566
        %1427 = vmatprep.subr.mxu0 %v559
        %1428 = vmatpush1.msra.mxu0 %v558
        %1429 = vmatprep.subr.mxu0 %v807
        %1430 = vmatpush2.msra.mxu0 %v806
        %1431 = vmatprep.subr.mxu0 %v799
        %1432 = vmatpush2.msra.mxu0 %v798
        %1433 = vmatprep.subr.mxu0 %v791
        %1434 = vmatpush2.msra.mxu0 %v790
        %1435 = vmatprep.subr.mxu0 %v783
        %1436 = vmatpush2.msra.mxu0 %v782
        %1437 = vmatprep.subr.mxu0 %v775
        %1438 = vmatpush2.msra.mxu0 %v774
        %1439 = vmatprep.subr.mxu0 %v767
        %1440 = vmatpush2.msra.mxu0 %v766
        %1441 = vmatprep.subr.mxu0 %v759
        %1442 = vmatpush2.msra.mxu0 %v758
        %1443 = vmatprep.subr.mxu0 %v751
        %1444 = vmatpush2.msra.mxu0 %v750
        %1445 = vmatprep.subr.mxu0 %v743
        %1446 = vmatpush2.msra.mxu0 %v742
        %1447 = vmatprep.subr.mxu0 %v735
        %1448 = vmatpush2.msra.mxu0 %v734
        %1449 = vmatprep.subr.mxu0 %v727
        %1450 = vmatpush2.msra.mxu0 %v726
        %1451 = vmatprep.subr.mxu0 %v719
        %1452 = vmatpush2.msra.mxu0 %v718
        %1453 = vmatprep.subr.mxu0 %v711
        %1454 = vmatpush2.msra.mxu0 %v710
        %1455 = vmatprep.subr.mxu0 %v703
        %1456 = vmatpush2.msra.mxu0 %v702
        %1457 = vmatprep.subr.mxu0 %v695
        %1458 = vmatpush2.msra.mxu0 %v694
        %1459 = vmatprep.subr.mxu0 %v687
        %1460 = vmatpush2.msra.mxu0 %v686
        %1461 = vmatprep.mubr.f32.mxu0 %v297
        %1462 = vmatmul.mubr.f32.gmra.mxu0 %v296
        %v1463 = vpop.f32.mrf.mxu0
        %v1464 = vadd.f32 %v1393, %v1463
        %v1465 = vpop.f32.mrf.mxu0
        %v1466 = vadd.f32 %v1395, %v1465
        %1467 = vdwg.mxu0
        %1468 = vmatprep.subr.mxu0 %v935
        %1469 = vmatpush1.msra.mxu0 %v934
        %1470 = vmatprep.subr.mxu0 %v927
        %1471 = vmatpush1.msra.mxu0 %v926
        %1472 = vmatprep.subr.mxu0 %v919
        %1473 = vmatpush1.msra.mxu0 %v918
        %1474 = vmatprep.subr.mxu0 %v911
        %1475 = vmatpush1.msra.mxu0 %v910
        %1476 = vmatprep.subr.mxu0 %v903
        %1477 = vmatpush1.msra.mxu0 %v902
        %1478 = vmatprep.subr.mxu0 %v895
        %1479 = vmatpush1.msra.mxu0 %v894
        %1480 = vmatprep.subr.mxu0 %v887
        %1481 = vmatpush1.msra.mxu0 %v886
        %1482 = vmatprep.subr.mxu0 %v879
        %1483 = vmatpush1.msra.mxu0 %v878
        %1484 = vmatprep.subr.mxu0 %v871
        %1485 = vmatpush1.msra.mxu0 %v870
        %1486 = vmatprep.subr.mxu0 %v863
        %1487 = vmatpush1.msra.mxu0 %v862
        %1488 = vmatprep.subr.mxu0 %v855
        %1489 = vmatpush1.msra.mxu0 %v854
        %1490 = vmatprep.subr.mxu0 %v847
        %1491 = vmatpush1.msra.mxu0 %v846
        %1492 = vmatprep.subr.mxu0 %v839
        %1493 = vmatpush1.msra.mxu0 %v838
        %1494 = vmatprep.subr.mxu0 %v831
        %1495 = vmatpush1.msra.mxu0 %v830
        %1496 = vmatprep.subr.mxu0 %v823
        %1497 = vmatpush1.msra.mxu0 %v822
        %1498 = vmatprep.subr.mxu0 %v815
        %1499 = vmatpush1.msra.mxu0 %v814
        %1500 = vmatprep.subr.mxu0 %v1063
        %1501 = vmatpush2.msra.mxu0 %v1062
        %1502 = vmatprep.subr.mxu0 %v1055
        %1503 = vmatpush2.msra.mxu0 %v1054
        %1504 = vmatprep.subr.mxu0 %v1047
        %1505 = vmatpush2.msra.mxu0 %v1046
        %1506 = vmatprep.subr.mxu0 %v1039
        %1507 = vmatpush2.msra.mxu0 %v1038
        %1508 = vmatprep.subr.mxu0 %v1031
        %1509 = vmatpush2.msra.mxu0 %v1030
        %1510 = vmatprep.subr.mxu0 %v1023
        %1511 = vmatpush2.msra.mxu0 %v1022
        %1512 = vmatprep.subr.mxu0 %v1015
        %1513 = vmatpush2.msra.mxu0 %v1014
        %1514 = vmatprep.subr.mxu0 %v1007
        %1515 = vmatpush2.msra.mxu0 %v1006
        %1516 = vmatprep.subr.mxu0 %v999
        %1517 = vmatpush2.msra.mxu0 %v998
        %1518 = vmatprep.subr.mxu0 %v991
        %1519 = vmatpush2.msra.mxu0 %v990
        %1520 = vmatprep.subr.mxu0 %v983
        %1521 = vmatpush2.msra.mxu0 %v982
        %1522 = vmatprep.subr.mxu0 %v975
        %1523 = vmatpush2.msra.mxu0 %v974
        %1524 = vmatprep.subr.mxu0 %v967
        %1525 = vmatpush2.msra.mxu0 %v966
        %1526 = vmatprep.subr.mxu0 %v959
        %1527 = vmatpush2.msra.mxu0 %v958
        %1528 = vmatprep.subr.mxu0 %v951
        %1529 = vmatpush2.msra.mxu0 %v950
        %1530 = vmatprep.subr.mxu0 %v943
        %1531 = vmatpush2.msra.mxu0 %v942
        %1532 = vmatprep.mubr.f32.mxu0 %v299
        %1533 = vmatmul.mubr.f32.gmra.mxu0 %v298
        %v1534 = vpop.f32.mrf.mxu0
        %v1535 = vadd.f32 %v1464, %v1534
        %v1536 = vpop.f32.mrf.mxu0
        %v1537 = vadd.f32 %v1466, %v1536
        %1538 = vdwg.mxu0
        %1539 = vmatprep.subr.mxu0 %v1191
        %1540 = vmatpush1.msra.mxu0 %v1190
        %1541 = vmatprep.subr.mxu0 %v1183
        %1542 = vmatpush1.msra.mxu0 %v1182
        %1543 = vmatprep.subr.mxu0 %v1175
        %1544 = vmatpush1.msra.mxu0 %v1174
        %1545 = vmatprep.subr.mxu0 %v1167
        %1546 = vmatpush1.msra.mxu0 %v1166
        %1547 = vmatprep.subr.mxu0 %v1159
        %1548 = vmatpush1.msra.mxu0 %v1158
        %1549 = vmatprep.subr.mxu0 %v1151
        %1550 = vmatpush1.msra.mxu0 %v1150
        %1551 = vmatprep.subr.mxu0 %v1143
        %1552 = vmatpush1.msra.mxu0 %v1142
        %1553 = vmatprep.subr.mxu0 %v1135
        %1554 = vmatpush1.msra.mxu0 %v1134
        %1555 = vmatprep.subr.mxu0 %v1127
        %1556 = vmatpush1.msra.mxu0 %v1126
        %1557 = vmatprep.subr.mxu0 %v1119
        %1558 = vmatpush1.msra.mxu0 %v1118
        %1559 = vmatprep.subr.mxu0 %v1111
        %1560 = vmatpush1.msra.mxu0 %v1110
        %1561 = vmatprep.subr.mxu0 %v1103
        %1562 = vmatpush1.msra.mxu0 %v1102
        %1563 = vmatprep.subr.mxu0 %v1095
        %1564 = vmatpush1.msra.mxu0 %v1094
        %1565 = vmatprep.subr.mxu0 %v1087
        %1566 = vmatpush1.msra.mxu0 %v1086
        %1567 = vmatprep.subr.mxu0 %v1079
        %1568 = vmatpush1.msra.mxu0 %v1078
        %1569 = vmatprep.subr.mxu0 %v1071
        %1570 = vmatpush1.msra.mxu0 %v1070
        %1571 = vmatprep.subr.mxu0 %v1319
        %1572 = vmatpush2.msra.mxu0 %v1318
        %1573 = vmatprep.subr.mxu0 %v1311
        %1574 = vmatpush2.msra.mxu0 %v1310
        %1575 = vmatprep.subr.mxu0 %v1303
        %1576 = vmatpush2.msra.mxu0 %v1302
        %1577 = vmatprep.subr.mxu0 %v1295
        %1578 = vmatpush2.msra.mxu0 %v1294
        %1579 = vmatprep.subr.mxu0 %v1287
        %1580 = vmatpush2.msra.mxu0 %v1286
        %1581 = vmatprep.subr.mxu0 %v1279
        %1582 = vmatpush2.msra.mxu0 %v1278
        %1583 = vmatprep.subr.mxu0 %v1271
        %1584 = vmatpush2.msra.mxu0 %v1270
        %1585 = vmatprep.subr.mxu0 %v1263
        %1586 = vmatpush2.msra.mxu0 %v1262
        %1587 = vmatprep.subr.mxu0 %v1255
        %1588 = vmatpush2.msra.mxu0 %v1254
        %1589 = vmatprep.subr.mxu0 %v1247
        %1590 = vmatpush2.msra.mxu0 %v1246
        %1591 = vmatprep.subr.mxu0 %v1239
        %1592 = vmatpush2.msra.mxu0 %v1238
        %1593 = vmatprep.subr.mxu0 %v1231
        %1594 = vmatpush2.msra.mxu0 %v1230
        %1595 = vmatprep.subr.mxu0 %v1223
        %1596 = vmatpush2.msra.mxu0 %v1222
        %1597 = vmatprep.subr.mxu0 %v1215
        %1598 = vmatpush2.msra.mxu0 %v1214
        %1599 = vmatprep.subr.mxu0 %v1207
        %1600 = vmatpush2.msra.mxu0 %v1206
        %1601 = vmatprep.subr.mxu0 %v1199
        %1602 = vmatpush2.msra.mxu0 %v1198
        %1603 = vmatprep.mubr.f32.mxu0 %v301
        %1604 = vmatmul.mubr.f32.gmra.mxu0 %v300
        %v1605 = vpop.f32.mrf.mxu0
        %v1606 = vadd.f32 %v1535, %v1605
        %v1607 = vpop.f32.mrf.mxu0
        %v1608 = vadd.f32 %v1537, %v1607
        %1609 = vdwg.mxu0
        %1610 = vmatprep.subr.mxu0 %v425
        %1611 = vmatpush1.msra.mxu0 %v424
        %1612 = vmatprep.subr.mxu0 %v417
        %1613 = vmatpush1.msra.mxu0 %v416
        %1614 = vmatprep.subr.mxu0 %v409
        %1615 = vmatpush1.msra.mxu0 %v408
        %1616 = vmatprep.subr.mxu0 %v401
        %1617 = vmatpush1.msra.mxu0 %v400
        %1618 = vmatprep.subr.mxu0 %v393
        %1619 = vmatpush1.msra.mxu0 %v392
        %1620 = vmatprep.subr.mxu0 %v385
        %1621 = vmatpush1.msra.mxu0 %v384
        %1622 = vmatprep.subr.mxu0 %v377
        %1623 = vmatpush1.msra.mxu0 %v376
        %1624 = vmatprep.subr.mxu0 %v369
        %1625 = vmatpush1.msra.mxu0 %v368
        %1626 = vmatprep.subr.mxu0 %v361
        %1627 = vmatpush1.msra.mxu0 %v360
        %1628 = vmatprep.subr.mxu0 %v353
        %1629 = vmatpush1.msra.mxu0 %v352
        %1630 = vmatprep.subr.mxu0 %v345
        %1631 = vmatpush1.msra.mxu0 %v344
        %1632 = vmatprep.subr.mxu0 %v337
        %1633 = vmatpush1.msra.mxu0 %v336
        %1634 = vmatprep.subr.mxu0 %v329
        %1635 = vmatpush1.msra.mxu0 %v328
        %1636 = vmatprep.subr.mxu0 %v321
        %1637 = vmatpush1.msra.mxu0 %v320
        %1638 = vmatprep.subr.mxu0 %v313
        %1639 = vmatpush1.msra.mxu0 %v312
        %1640 = vmatprep.subr.mxu0 %v305
        %1641 = vmatpush1.msra.mxu0 %v304
        %1642 = vmatprep.subr.mxu0 %v553
        %1643 = vmatpush2.msra.mxu0 %v552
        %1644 = vmatprep.subr.mxu0 %v545
        %1645 = vmatpush2.msra.mxu0 %v544
        %1646 = vmatprep.subr.mxu0 %v537
        %1647 = vmatpush2.msra.mxu0 %v536
        %1648 = vmatprep.subr.mxu0 %v529
        %1649 = vmatpush2.msra.mxu0 %v528
        %1650 = vmatprep.subr.mxu0 %v521
        %1651 = vmatpush2.msra.mxu0 %v520
        %1652 = vmatprep.subr.mxu0 %v513
        %1653 = vmatpush2.msra.mxu0 %v512
        %1654 = vmatprep.subr.mxu0 %v505
        %1655 = vmatpush2.msra.mxu0 %v504
        %1656 = vmatprep.subr.mxu0 %v497
        %1657 = vmatpush2.msra.mxu0 %v496
        %1658 = vmatprep.subr.mxu0 %v489
        %1659 = vmatpush2.msra.mxu0 %v488
        %1660 = vmatprep.subr.mxu0 %v481
        %1661 = vmatpush2.msra.mxu0 %v480
        %1662 = vmatprep.subr.mxu0 %v473
        %1663 = vmatpush2.msra.mxu0 %v472
        %1664 = vmatprep.subr.mxu0 %v465
        %1665 = vmatpush2.msra.mxu0 %v464
        %1666 = vmatprep.subr.mxu0 %v457
        %1667 = vmatpush2.msra.mxu0 %v456
        %1668 = vmatprep.subr.mxu0 %v449
        %1669 = vmatpush2.msra.mxu0 %v448
        %1670 = vmatprep.subr.mxu0 %v441
        %1671 = vmatpush2.msra.mxu0 %v440
        %1672 = vmatprep.subr.mxu0 %v433
        %1673 = vmatpush2.msra.mxu0 %v432
        %1674 = vmatprep.mubr.f32.mxu0 %v295
        %1675 = vmatmul.mubr.f32.gmra.mxu0 %v294
        %v1676 = vpop.f32.mrf.mxu0
        %v1677 = vadd.f32 0.0, %v1676
        %v1678 = vpop.f32.mrf.mxu0
        %v1679 = vadd.f32 0.0, %v1678
        %1680 = vdwg.mxu0
        %1681 = vmatprep.subr.mxu0 %v681
        %1682 = vmatpush1.msra.mxu0 %v680
        %1683 = vmatprep.subr.mxu0 %v673
        %1684 = vmatpush1.msra.mxu0 %v672
        %1685 = vmatprep.subr.mxu0 %v665
        %1686 = vmatpush1.msra.mxu0 %v664
        %1687 = vmatprep.subr.mxu0 %v657
        %1688 = vmatpush1.msra.mxu0 %v656
        %1689 = vmatprep.subr.mxu0 %v649
        %1690 = vmatpush1.msra.mxu0 %v648
        %1691 = vmatprep.subr.mxu0 %v641
        %1692 = vmatpush1.msra.mxu0 %v640
        %1693 = vmatprep.subr.mxu0 %v633
        %1694 = vmatpush1.msra.mxu0 %v632
        %1695 = vmatprep.subr.mxu0 %v625
        %1696 = vmatpush1.msra.mxu0 %v624
        %1697 = vmatprep.subr.mxu0 %v617
        %1698 = vmatpush1.msra.mxu0 %v616
        %1699 = vmatprep.subr.mxu0 %v609
        %1700 = vmatpush1.msra.mxu0 %v608
        %1701 = vmatprep.subr.mxu0 %v601
        %1702 = vmatpush1.msra.mxu0 %v600
        %1703 = vmatprep.subr.mxu0 %v593
        %1704 = vmatpush1.msra.mxu0 %v592
        %1705 = vmatprep.subr.mxu0 %v585
        %1706 = vmatpush1.msra.mxu0 %v584
        %1707 = vmatprep.subr.mxu0 %v577
        %1708 = vmatpush1.msra.mxu0 %v576
        %1709 = vmatprep.subr.mxu0 %v569
        %1710 = vmatpush1.msra.mxu0 %v568
        %1711 = vmatprep.subr.mxu0 %v561
        %1712 = vmatpush1.msra.mxu0 %v560
        %1713 = vmatprep.subr.mxu0 %v809
        %1714 = vmatpush2.msra.mxu0 %v808
        %1715 = vmatprep.subr.mxu0 %v801
        %1716 = vmatpush2.msra.mxu0 %v800
        %1717 = vmatprep.subr.mxu0 %v793
        %1718 = vmatpush2.msra.mxu0 %v792
        %1719 = vmatprep.subr.mxu0 %v785
        %1720 = vmatpush2.msra.mxu0 %v784
        %1721 = vmatprep.subr.mxu0 %v777
        %1722 = vmatpush2.msra.mxu0 %v776
        %1723 = vmatprep.subr.mxu0 %v769
        %1724 = vmatpush2.msra.mxu0 %v768
        %1725 = vmatprep.subr.mxu0 %v761
        %1726 = vmatpush2.msra.mxu0 %v760
        %1727 = vmatprep.subr.mxu0 %v753
        %1728 = vmatpush2.msra.mxu0 %v752
        %1729 = vmatprep.subr.mxu0 %v745
        %1730 = vmatpush2.msra.mxu0 %v744
        %1731 = vmatprep.subr.mxu0 %v737
        %1732 = vmatpush2.msra.mxu0 %v736
        %1733 = vmatprep.subr.mxu0 %v729
        %1734 = vmatpush2.msra.mxu0 %v728
        %1735 = vmatprep.subr.mxu0 %v721
        %1736 = vmatpush2.msra.mxu0 %v720
        %1737 = vmatprep.subr.mxu0 %v713
        %1738 = vmatpush2.msra.mxu0 %v712
        %1739 = vmatprep.subr.mxu0 %v705
        %1740 = vmatpush2.msra.mxu0 %v704
        %1741 = vmatprep.subr.mxu0 %v697
        %1742 = vmatpush2.msra.mxu0 %v696
        %1743 = vmatprep.subr.mxu0 %v689
        %1744 = vmatpush2.msra.mxu0 %v688
        %1745 = vmatprep.mubr.f32.mxu0 %v297
        %1746 = vmatmul.mubr.f32.gmra.mxu0 %v296
        %v1747 = vpop.f32.mrf.mxu0
        %v1748 = vadd.f32 %v1677, %v1747
        %v1749 = vpop.f32.mrf.mxu0
        %v1750 = vadd.f32 %v1679, %v1749
        %1751 = vdwg.mxu0
        %1752 = vmatprep.subr.mxu0 %v937
        %1753 = vmatpush1.msra.mxu0 %v936
        %1754 = vmatprep.subr.mxu0 %v929
        %1755 = vmatpush1.msra.mxu0 %v928
        %1756 = vmatprep.subr.mxu0 %v921
        %1757 = vmatpush1.msra.mxu0 %v920
        %1758 = vmatprep.subr.mxu0 %v913
        %1759 = vmatpush1.msra.mxu0 %v912
        %1760 = vmatprep.subr.mxu0 %v905
        %1761 = vmatpush1.msra.mxu0 %v904
        %1762 = vmatprep.subr.mxu0 %v897
        %1763 = vmatpush1.msra.mxu0 %v896
        %1764 = vmatprep.subr.mxu0 %v889
        %1765 = vmatpush1.msra.mxu0 %v888
        %1766 = vmatprep.subr.mxu0 %v881
        %1767 = vmatpush1.msra.mxu0 %v880
        %1768 = vmatprep.subr.mxu0 %v873
        %1769 = vmatpush1.msra.mxu0 %v872
        %1770 = vmatprep.subr.mxu0 %v865
        %1771 = vmatpush1.msra.mxu0 %v864
        %1772 = vmatprep.subr.mxu0 %v857
        %1773 = vmatpush1.msra.mxu0 %v856
        %1774 = vmatprep.subr.mxu0 %v849
        %1775 = vmatpush1.msra.mxu0 %v848
        %1776 = vmatprep.subr.mxu0 %v841
        %1777 = vmatpush1.msra.mxu0 %v840
        %1778 = vmatprep.subr.mxu0 %v833
        %1779 = vmatpush1.msra.mxu0 %v832
        %1780 = vmatprep.subr.mxu0 %v825
        %1781 = vmatpush1.msra.mxu0 %v824
        %1782 = vmatprep.subr.mxu0 %v817
        %1783 = vmatpush1.msra.mxu0 %v816
        %1784 = vmatprep.subr.mxu0 %v1065
        %1785 = vmatpush2.msra.mxu0 %v1064
        %1786 = vmatprep.subr.mxu0 %v1057
        %1787 = vmatpush2.msra.mxu0 %v1056
        %1788 = vmatprep.subr.mxu0 %v1049
        %1789 = vmatpush2.msra.mxu0 %v1048
        %1790 = vmatprep.subr.mxu0 %v1041
        %1791 = vmatpush2.msra.mxu0 %v1040
        %1792 = vmatprep.subr.mxu0 %v1033
        %1793 = vmatpush2.msra.mxu0 %v1032
        %1794 = vmatprep.subr.mxu0 %v1025
        %1795 = vmatpush2.msra.mxu0 %v1024
        %1796 = vmatprep.subr.mxu0 %v1017
        %1797 = vmatpush2.msra.mxu0 %v1016
        %1798 = vmatprep.subr.mxu0 %v1009
        %1799 = vmatpush2.msra.mxu0 %v1008
        %1800 = vmatprep.subr.mxu0 %v1001
        %1801 = vmatpush2.msra.mxu0 %v1000
        %1802 = vmatprep.subr.mxu0 %v993
        %1803 = vmatpush2.msra.mxu0 %v992
        %1804 = vmatprep.subr.mxu0 %v985
        %1805 = vmatpush2.msra.mxu0 %v984
        %1806 = vmatprep.subr.mxu0 %v977
        %1807 = vmatpush2.msra.mxu0 %v976
        %1808 = vmatprep.subr.mxu0 %v969
        %1809 = vmatpush2.msra.mxu0 %v968
        %1810 = vmatprep.subr.mxu0 %v961
        %1811 = vmatpush2.msra.mxu0 %v960
        %1812 = vmatprep.subr.mxu0 %v953
        %1813 = vmatpush2.msra.mxu0 %v952
        %1814 = vmatprep.subr.mxu0 %v945
        %1815 = vmatpush2.msra.mxu0 %v944
        %1816 = vmatprep.mubr.f32.mxu0 %v299
        %1817 = vmatmul.mubr.f32.gmra.mxu0 %v298
        %v1818 = vpop.f32.mrf.mxu0
        %v1819 = vadd.f32 %v1748, %v1818
        %v1820 = vpop.f32.mrf.mxu0
        %v1821 = vadd.f32 %v1750, %v1820
        %1822 = vdwg.mxu0
        %1823 = vmatprep.subr.mxu0 %v1193
        %1824 = vmatpush1.msra.mxu0 %v1192
        %1825 = vmatprep.subr.mxu0 %v1185
        %1826 = vmatpush1.msra.mxu0 %v1184
        %1827 = vmatprep.subr.mxu0 %v1177
        %1828 = vmatpush1.msra.mxu0 %v1176
        %1829 = vmatprep.subr.mxu0 %v1169
        %1830 = vmatpush1.msra.mxu0 %v1168
        %1831 = vmatprep.subr.mxu0 %v1161
        %1832 = vmatpush1.msra.mxu0 %v1160
        %1833 = vmatprep.subr.mxu0 %v1153
        %1834 = vmatpush1.msra.mxu0 %v1152
        %1835 = vmatprep.subr.mxu0 %v1145
        %1836 = vmatpush1.msra.mxu0 %v1144
        %1837 = vmatprep.subr.mxu0 %v1137
        %1838 = vmatpush1.msra.mxu0 %v1136
        %1839 = vmatprep.subr.mxu0 %v1129
        %1840 = vmatpush1.msra.mxu0 %v1128
        %1841 = vmatprep.subr.mxu0 %v1121
        %1842 = vmatpush1.msra.mxu0 %v1120
        %1843 = vmatprep.subr.mxu0 %v1113
        %1844 = vmatpush1.msra.mxu0 %v1112
        %1845 = vmatprep.subr.mxu0 %v1105
        %1846 = vmatpush1.msra.mxu0 %v1104
        %1847 = vmatprep.subr.mxu0 %v1097
        %1848 = vmatpush1.msra.mxu0 %v1096
        %1849 = vmatprep.subr.mxu0 %v1089
        %1850 = vmatpush1.msra.mxu0 %v1088
        %1851 = vmatprep.subr.mxu0 %v1081
        %1852 = vmatpush1.msra.mxu0 %v1080
        %1853 = vmatprep.subr.mxu0 %v1073
        %1854 = vmatpush1.msra.mxu0 %v1072
        %1855 = vmatprep.subr.mxu0 %v1321
        %1856 = vmatpush2.msra.mxu0 %v1320
        %1857 = vmatprep.subr.mxu0 %v1313
        %1858 = vmatpush2.msra.mxu0 %v1312
        %1859 = vmatprep.subr.mxu0 %v1305
        %1860 = vmatpush2.msra.mxu0 %v1304
        %1861 = vmatprep.subr.mxu0 %v1297
        %1862 = vmatpush2.msra.mxu0 %v1296
        %1863 = vmatprep.subr.mxu0 %v1289
        %1864 = vmatpush2.msra.mxu0 %v1288
        %1865 = vmatprep.subr.mxu0 %v1281
        %1866 = vmatpush2.msra.mxu0 %v1280
        %1867 = vmatprep.subr.mxu0 %v1273
        %1868 = vmatpush2.msra.mxu0 %v1272
        %1869 = vmatprep.subr.mxu0 %v1265
        %1870 = vmatpush2.msra.mxu0 %v1264
        %1871 = vmatprep.subr.mxu0 %v1257
        %1872 = vmatpush2.msra.mxu0 %v1256
        %1873 = vmatprep.subr.mxu0 %v1249
        %1874 = vmatpush2.msra.mxu0 %v1248
        %1875 = vmatprep.subr.mxu0 %v1241
        %1876 = vmatpush2.msra.mxu0 %v1240
        %1877 = vmatprep.subr.mxu0 %v1233
        %1878 = vmatpush2.msra.mxu0 %v1232
        %1879 = vmatprep.subr.mxu0 %v1225
        %1880 = vmatpush2.msra.mxu0 %v1224
        %1881 = vmatprep.subr.mxu0 %v1217
        %1882 = vmatpush2.msra.mxu0 %v1216
        %1883 = vmatprep.subr.mxu0 %v1209
        %1884 = vmatpush2.msra.mxu0 %v1208
        %1885 = vmatprep.subr.mxu0 %v1201
        %1886 = vmatpush2.msra.mxu0 %v1200
        %1887 = vmatprep.mubr.f32.mxu0 %v301
        %1888 = vmatmul.mubr.f32.gmra.mxu0 %v300
        %v1889 = vpop.f32.mrf.mxu0
        %v1890 = vadd.f32 %v1819, %v1889
        %v1891 = vpop.f32.mrf.mxu0
        %v1892 = vadd.f32 %v1821, %v1891
        %1893 = vdwg.mxu0
        %1894 = vmatprep.subr.mxu0 %v427
        %1895 = vmatpush1.msra.mxu0 %v426
        %1896 = vmatprep.subr.mxu0 %v419
        %1897 = vmatpush1.msra.mxu0 %v418
        %1898 = vmatprep.subr.mxu0 %v411
        %1899 = vmatpush1.msra.mxu0 %v410
        %1900 = vmatprep.subr.mxu0 %v403
        %1901 = vmatpush1.msra.mxu0 %v402
        %1902 = vmatprep.subr.mxu0 %v395
        %1903 = vmatpush1.msra.mxu0 %v394
        %1904 = vmatprep.subr.mxu0 %v387
        %1905 = vmatpush1.msra.mxu0 %v386
        %1906 = vmatprep.subr.mxu0 %v379
        %1907 = vmatpush1.msra.mxu0 %v378
        %1908 = vmatprep.subr.mxu0 %v371
        %1909 = vmatpush1.msra.mxu0 %v370
        %1910 = vmatprep.subr.mxu0 %v363
        %1911 = vmatpush1.msra.mxu0 %v362
        %1912 = vmatprep.subr.mxu0 %v355
        %1913 = vmatpush1.msra.mxu0 %v354
        %1914 = vmatprep.subr.mxu0 %v347
        %1915 = vmatpush1.msra.mxu0 %v346
        %1916 = vmatprep.subr.mxu0 %v339
        %1917 = vmatpush1.msra.mxu0 %v338
        %1918 = vmatprep.subr.mxu0 %v331
        %1919 = vmatpush1.msra.mxu0 %v330
        %1920 = vmatprep.subr.mxu0 %v323
        %1921 = vmatpush1.msra.mxu0 %v322
        %1922 = vmatprep.subr.mxu0 %v315
        %1923 = vmatpush1.msra.mxu0 %v314
        %1924 = vmatprep.subr.mxu0 %v307
        %1925 = vmatpush1.msra.mxu0 %v306
        %1926 = vmatprep.subr.mxu0 %v555
        %1927 = vmatpush2.msra.mxu0 %v554
        %1928 = vmatprep.subr.mxu0 %v547
        %1929 = vmatpush2.msra.mxu0 %v546
        %1930 = vmatprep.subr.mxu0 %v539
        %1931 = vmatpush2.msra.mxu0 %v538
        %1932 = vmatprep.subr.mxu0 %v531
        %1933 = vmatpush2.msra.mxu0 %v530
        %1934 = vmatprep.subr.mxu0 %v523
        %1935 = vmatpush2.msra.mxu0 %v522
        %1936 = vmatprep.subr.mxu0 %v515
        %1937 = vmatpush2.msra.mxu0 %v514
        %1938 = vmatprep.subr.mxu0 %v507
        %1939 = vmatpush2.msra.mxu0 %v506
        %1940 = vmatprep.subr.mxu0 %v499
        %1941 = vmatpush2.msra.mxu0 %v498
        %1942 = vmatprep.subr.mxu0 %v491
        %1943 = vmatpush2.msra.mxu0 %v490
        %1944 = vmatprep.subr.mxu0 %v483
        %1945 = vmatpush2.msra.mxu0 %v482
        %1946 = vmatprep.subr.mxu0 %v475
        %1947 = vmatpush2.msra.mxu0 %v474
        %1948 = vmatprep.subr.mxu0 %v467
        %1949 = vmatpush2.msra.mxu0 %v466
        %1950 = vmatprep.subr.mxu0 %v459
        %1951 = vmatpush2.msra.mxu0 %v458
        %1952 = vmatprep.subr.mxu0 %v451
        %1953 = vmatpush2.msra.mxu0 %v450
        %1954 = vmatprep.subr.mxu0 %v443
        %1955 = vmatpush2.msra.mxu0 %v442
        %1956 = vmatprep.subr.mxu0 %v435
        %1957 = vmatpush2.msra.mxu0 %v434
        %1958 = vmatprep.mubr.f32.mxu0 %v295
        %1959 = vmatmul.mubr.f32.gmra.mxu0 %v294
        %v1960 = vpop.f32.mrf.mxu0
        %v1961 = vadd.f32 0.0, %v1960
        %v1962 = vpop.f32.mrf.mxu0
        %v1963 = vadd.f32 0.0, %v1962
        %1964 = vdwg.mxu0
        %1965 = vmatprep.subr.mxu0 %v683
        %1966 = vmatpush1.msra.mxu0 %v682
        %1967 = vmatprep.subr.mxu0 %v675
        %1968 = vmatpush1.msra.mxu0 %v674
        %1969 = vmatprep.subr.mxu0 %v667
        %1970 = vmatpush1.msra.mxu0 %v666
        %1971 = vmatprep.subr.mxu0 %v659
        %1972 = vmatpush1.msra.mxu0 %v658
        %1973 = vmatprep.subr.mxu0 %v651
        %1974 = vmatpush1.msra.mxu0 %v650
        %1975 = vmatprep.subr.mxu0 %v643
        %1976 = vmatpush1.msra.mxu0 %v642
        %1977 = vmatprep.subr.mxu0 %v635
        %1978 = vmatpush1.msra.mxu0 %v634
        %1979 = vmatprep.subr.mxu0 %v627
        %1980 = vmatpush1.msra.mxu0 %v626
        %1981 = vmatprep.subr.mxu0 %v619
        %1982 = vmatpush1.msra.mxu0 %v618
        %1983 = vmatprep.subr.mxu0 %v611
        %1984 = vmatpush1.msra.mxu0 %v610
        %1985 = vmatprep.subr.mxu0 %v603
        %1986 = vmatpush1.msra.mxu0 %v602
        %1987 = vmatprep.subr.mxu0 %v595
        %1988 = vmatpush1.msra.mxu0 %v594
        %1989 = vmatprep.subr.mxu0 %v587
        %1990 = vmatpush1.msra.mxu0 %v586
        %1991 = vmatprep.subr.mxu0 %v579
        %1992 = vmatpush1.msra.mxu0 %v578
        %1993 = vmatprep.subr.mxu0 %v571
        %1994 = vmatpush1.msra.mxu0 %v570
        %1995 = vmatprep.subr.mxu0 %v563
        %1996 = vmatpush1.msra.mxu0 %v562
        %1997 = vmatprep.subr.mxu0 %v811
        %1998 = vmatpush2.msra.mxu0 %v810
        %1999 = vmatprep.subr.mxu0 %v803
        %2000 = vmatpush2.msra.mxu0 %v802
        %2001 = vmatprep.subr.mxu0 %v795
        %2002 = vmatpush2.msra.mxu0 %v794
        %2003 = vmatprep.subr.mxu0 %v787
        %2004 = vmatpush2.msra.mxu0 %v786
        %2005 = vmatprep.subr.mxu0 %v779
        %2006 = vmatpush2.msra.mxu0 %v778
        %2007 = vmatprep.subr.mxu0 %v771
        %2008 = vmatpush2.msra.mxu0 %v770
        %2009 = vmatprep.subr.mxu0 %v763
        %2010 = vmatpush2.msra.mxu0 %v762
        %2011 = vmatprep.subr.mxu0 %v755
        %2012 = vmatpush2.msra.mxu0 %v754
        %2013 = vmatprep.subr.mxu0 %v747
        %2014 = vmatpush2.msra.mxu0 %v746
        %2015 = vmatprep.subr.mxu0 %v739
        %2016 = vmatpush2.msra.mxu0 %v738
        %2017 = vmatprep.subr.mxu0 %v731
        %2018 = vmatpush2.msra.mxu0 %v730
        %2019 = vmatprep.subr.mxu0 %v723
        %2020 = vmatpush2.msra.mxu0 %v722
        %2021 = vmatprep.subr.mxu0 %v715
        %2022 = vmatpush2.msra.mxu0 %v714
        %2023 = vmatprep.subr.mxu0 %v707
        %2024 = vmatpush2.msra.mxu0 %v706
        %2025 = vmatprep.subr.mxu0 %v699
        %2026 = vmatpush2.msra.mxu0 %v698
        %2027 = vmatprep.subr.mxu0 %v691
        %2028 = vmatpush2.msra.mxu0 %v690
        %2029 = vmatprep.mubr.f32.mxu0 %v297
        %2030 = vmatmul.mubr.f32.gmra.mxu0 %v296
        %v2031 = vpop.f32.mrf.mxu0
        %v2032 = vadd.f32 %v1961, %v2031
        %v2033 = vpop.f32.mrf.mxu0
        %v2034 = vadd.f32 %v1963, %v2033
        %2035 = vdwg.mxu0
        %2036 = vmatprep.subr.mxu0 %v939
        %2037 = vmatpush1.msra.mxu0 %v938
        %2038 = vmatprep.subr.mxu0 %v931
        %2039 = vmatpush1.msra.mxu0 %v930
        %2040 = vmatprep.subr.mxu0 %v923
        %2041 = vmatpush1.msra.mxu0 %v922
        %2042 = vmatprep.subr.mxu0 %v915
        %2043 = vmatpush1.msra.mxu0 %v914
        %2044 = vmatprep.subr.mxu0 %v907
        %2045 = vmatpush1.msra.mxu0 %v906
        %2046 = vmatprep.subr.mxu0 %v899
        %2047 = vmatpush1.msra.mxu0 %v898
        %2048 = vmatprep.subr.mxu0 %v891
        %2049 = vmatpush1.msra.mxu0 %v890
        %2050 = vmatprep.subr.mxu0 %v883
        %2051 = vmatpush1.msra.mxu0 %v882
        %2052 = vmatprep.subr.mxu0 %v875
        %2053 = vmatpush1.msra.mxu0 %v874
        %2054 = vmatprep.subr.mxu0 %v867
        %2055 = vmatpush1.msra.mxu0 %v866
        %2056 = vmatprep.subr.mxu0 %v859
        %2057 = vmatpush1.msra.mxu0 %v858
        %2058 = vmatprep.subr.mxu0 %v851
        %2059 = vmatpush1.msra.mxu0 %v850
        %2060 = vmatprep.subr.mxu0 %v843
        %2061 = vmatpush1.msra.mxu0 %v842
        %2062 = vmatprep.subr.mxu0 %v835
        %2063 = vmatpush1.msra.mxu0 %v834
        %2064 = vmatprep.subr.mxu0 %v827
        %2065 = vmatpush1.msra.mxu0 %v826
        %2066 = vmatprep.subr.mxu0 %v819
        %2067 = vmatpush1.msra.mxu0 %v818
        %2068 = vmatprep.subr.mxu0 %v1067
        %2069 = vmatpush2.msra.mxu0 %v1066
        %2070 = vmatprep.subr.mxu0 %v1059
        %2071 = vmatpush2.msra.mxu0 %v1058
        %2072 = vmatprep.subr.mxu0 %v1051
        %2073 = vmatpush2.msra.mxu0 %v1050
        %2074 = vmatprep.subr.mxu0 %v1043
        %2075 = vmatpush2.msra.mxu0 %v1042
        %2076 = vmatprep.subr.mxu0 %v1035
        %2077 = vmatpush2.msra.mxu0 %v1034
        %2078 = vmatprep.subr.mxu0 %v1027
        %2079 = vmatpush2.msra.mxu0 %v1026
        %2080 = vmatprep.subr.mxu0 %v1019
        %2081 = vmatpush2.msra.mxu0 %v1018
        %2082 = vmatprep.subr.mxu0 %v1011
        %2083 = vmatpush2.msra.mxu0 %v1010
        %2084 = vmatprep.subr.mxu0 %v1003
        %2085 = vmatpush2.msra.mxu0 %v1002
        %2086 = vmatprep.subr.mxu0 %v995
        %2087 = vmatpush2.msra.mxu0 %v994
        %2088 = vmatprep.subr.mxu0 %v987
        %2089 = vmatpush2.msra.mxu0 %v986
        %2090 = vmatprep.subr.mxu0 %v979
        %2091 = vmatpush2.msra.mxu0 %v978
        %2092 = vmatprep.subr.mxu0 %v971
        %2093 = vmatpush2.msra.mxu0 %v970
        %2094 = vmatprep.subr.mxu0 %v963
        %2095 = vmatpush2.msra.mxu0 %v962
        %2096 = vmatprep.subr.mxu0 %v955
        %2097 = vmatpush2.msra.mxu0 %v954
        %2098 = vmatprep.subr.mxu0 %v947
        %2099 = vmatpush2.msra.mxu0 %v946
        %2100 = vmatprep.mubr.f32.mxu0 %v299
        %2101 = vmatmul.mubr.f32.gmra.mxu0 %v298
        %v2102 = vpop.f32.mrf.mxu0
        %v2103 = vadd.f32 %v2032, %v2102
        %v2104 = vpop.f32.mrf.mxu0
        %v2105 = vadd.f32 %v2034, %v2104
        %2106 = vdwg.mxu0
        %2107 = vmatprep.subr.mxu0 %v1195
        %2108 = vmatpush1.msra.mxu0 %v1194
        %2109 = vmatprep.subr.mxu0 %v1187
        %2110 = vmatpush1.msra.mxu0 %v1186
        %2111 = vmatprep.subr.mxu0 %v1179
        %2112 = vmatpush1.msra.mxu0 %v1178
        %2113 = vmatprep.subr.mxu0 %v1171
        %2114 = vmatpush1.msra.mxu0 %v1170
        %2115 = vmatprep.subr.mxu0 %v1163
        %2116 = vmatpush1.msra.mxu0 %v1162
        %2117 = vmatprep.subr.mxu0 %v1155
        %2118 = vmatpush1.msra.mxu0 %v1154
        %2119 = vmatprep.subr.mxu0 %v1147
        %2120 = vmatpush1.msra.mxu0 %v1146
        %2121 = vmatprep.subr.mxu0 %v1139
        %2122 = vmatpush1.msra.mxu0 %v1138
        %2123 = vmatprep.subr.mxu0 %v1131
        %2124 = vmatpush1.msra.mxu0 %v1130
        %2125 = vmatprep.subr.mxu0 %v1123
        %2126 = vmatpush1.msra.mxu0 %v1122
        %2127 = vmatprep.subr.mxu0 %v1115
        %2128 = vmatpush1.msra.mxu0 %v1114
        %2129 = vmatprep.subr.mxu0 %v1107
        %2130 = vmatpush1.msra.mxu0 %v1106
        %2131 = vmatprep.subr.mxu0 %v1099
        %2132 = vmatpush1.msra.mxu0 %v1098
        %2133 = vmatprep.subr.mxu0 %v1091
        %2134 = vmatpush1.msra.mxu0 %v1090
        %2135 = vmatprep.subr.mxu0 %v1083
        %2136 = vmatpush1.msra.mxu0 %v1082
        %2137 = vmatprep.subr.mxu0 %v1075
        %2138 = vmatpush1.msra.mxu0 %v1074
        %2139 = vmatprep.subr.mxu0 %v1323
        %2140 = vmatpush2.msra.mxu0 %v1322
        %2141 = vmatprep.subr.mxu0 %v1315
        %2142 = vmatpush2.msra.mxu0 %v1314
        %2143 = vmatprep.subr.mxu0 %v1307
        %2144 = vmatpush2.msra.mxu0 %v1306
        %2145 = vmatprep.subr.mxu0 %v1299
        %2146 = vmatpush2.msra.mxu0 %v1298
        %2147 = vmatprep.subr.mxu0 %v1291
        %2148 = vmatpush2.msra.mxu0 %v1290
        %2149 = vmatprep.subr.mxu0 %v1283
        %2150 = vmatpush2.msra.mxu0 %v1282
        %2151 = vmatprep.subr.mxu0 %v1275
        %2152 = vmatpush2.msra.mxu0 %v1274
        %2153 = vmatprep.subr.mxu0 %v1267
        %2154 = vmatpush2.msra.mxu0 %v1266
        %2155 = vmatprep.subr.mxu0 %v1259
        %2156 = vmatpush2.msra.mxu0 %v1258
        %2157 = vmatprep.subr.mxu0 %v1251
        %2158 = vmatpush2.msra.mxu0 %v1250
        %2159 = vmatprep.subr.mxu0 %v1243
        %2160 = vmatpush2.msra.mxu0 %v1242
        %2161 = vmatprep.subr.mxu0 %v1235
        %2162 = vmatpush2.msra.mxu0 %v1234
        %2163 = vmatprep.subr.mxu0 %v1227
        %2164 = vmatpush2.msra.mxu0 %v1226
        %2165 = vmatprep.subr.mxu0 %v1219
        %2166 = vmatpush2.msra.mxu0 %v1218
        %2167 = vmatprep.subr.mxu0 %v1211
        %2168 = vmatpush2.msra.mxu0 %v1210
        %2169 = vmatprep.subr.mxu0 %v1203
        %2170 = vmatpush2.msra.mxu0 %v1202
        %2171 = vmatprep.mubr.f32.mxu0 %v301
        %2172 = vmatmul.mubr.f32.gmra.mxu0 %v300
        %v2173 = vpop.f32.mrf.mxu0
        %v2174 = vadd.f32 %v2103, %v2173
        %v2175 = vpop.f32.mrf.mxu0
        %v2176 = vadd.f32 %v2105, %v2175
        %2177 = vdwg.mxu0
        %2178 = vmatprep.subr.mxu0 %v429
        %2179 = vmatpush1.msra.mxu0 %v428
        %2180 = vmatprep.subr.mxu0 %v421
        %2181 = vmatpush1.msra.mxu0 %v420
        %2182 = vmatprep.subr.mxu0 %v413
        %2183 = vmatpush1.msra.mxu0 %v412
        %2184 = vmatprep.subr.mxu0 %v405
        %2185 = vmatpush1.msra.mxu0 %v404
        %2186 = vmatprep.subr.mxu0 %v397
        %2187 = vmatpush1.msra.mxu0 %v396
        %2188 = vmatprep.subr.mxu0 %v389
        %2189 = vmatpush1.msra.mxu0 %v388
        %2190 = vmatprep.subr.mxu0 %v381
        %2191 = vmatpush1.msra.mxu0 %v380
        %2192 = vmatprep.subr.mxu0 %v373
        %2193 = vmatpush1.msra.mxu0 %v372
        %2194 = vmatprep.subr.mxu0 %v365
        %2195 = vmatpush1.msra.mxu0 %v364
        %2196 = vmatprep.subr.mxu0 %v357
        %2197 = vmatpush1.msra.mxu0 %v356
        %2198 = vmatprep.subr.mxu0 %v349
        %2199 = vmatpush1.msra.mxu0 %v348
        %2200 = vmatprep.subr.mxu0 %v341
        %2201 = vmatpush1.msra.mxu0 %v340
        %2202 = vmatprep.subr.mxu0 %v333
        %2203 = vmatpush1.msra.mxu0 %v332
        %2204 = vmatprep.subr.mxu0 %v325
        %2205 = vmatpush1.msra.mxu0 %v324
        %2206 = vmatprep.subr.mxu0 %v317
        %2207 = vmatpush1.msra.mxu0 %v316
        %2208 = vmatprep.subr.mxu0 %v309
        %2209 = vmatpush1.msra.mxu0 %v308
        %2210 = vmatprep.subr.mxu0 %v557
        %2211 = vmatpush2.msra.mxu0 %v556
        %2212 = vmatprep.subr.mxu0 %v549
        %2213 = vmatpush2.msra.mxu0 %v548
        %2214 = vmatprep.subr.mxu0 %v541
        %2215 = vmatpush2.msra.mxu0 %v540
        %2216 = vmatprep.subr.mxu0 %v533
        %2217 = vmatpush2.msra.mxu0 %v532
        %2218 = vmatprep.subr.mxu0 %v525
        %2219 = vmatpush2.msra.mxu0 %v524
        %2220 = vmatprep.subr.mxu0 %v517
        %2221 = vmatpush2.msra.mxu0 %v516
        %2222 = vmatprep.subr.mxu0 %v509
        %2223 = vmatpush2.msra.mxu0 %v508
        %2224 = vmatprep.subr.mxu0 %v501
        %2225 = vmatpush2.msra.mxu0 %v500
        %2226 = vmatprep.subr.mxu0 %v493
        %2227 = vmatpush2.msra.mxu0 %v492
        %2228 = vmatprep.subr.mxu0 %v485
        %2229 = vmatpush2.msra.mxu0 %v484
        %2230 = vmatprep.subr.mxu0 %v477
        %2231 = vmatpush2.msra.mxu0 %v476
        %2232 = vmatprep.subr.mxu0 %v469
        %2233 = vmatpush2.msra.mxu0 %v468
        %2234 = vmatprep.subr.mxu0 %v461
        %2235 = vmatpush2.msra.mxu0 %v460
        %2236 = vmatprep.subr.mxu0 %v453
        %2237 = vmatpush2.msra.mxu0 %v452
        %2238 = vmatprep.subr.mxu0 %v445
        %2239 = vmatpush2.msra.mxu0 %v444
        %2240 = vmatprep.subr.mxu0 %v437
        %2241 = vmatpush2.msra.mxu0 %v436
        %2242 = vmatprep.mubr.f32.mxu0 %v295
        %2243 = vmatmul.mubr.f32.gmra.mxu0 %v294
        %v2244 = vpop.f32.mrf.mxu0
        %v2245 = vadd.f32 0.0, %v2244
        %v2246 = vpop.f32.mrf.mxu0
        %v2247 = vadd.f32 0.0, %v2246
        %2248 = vdwg.mxu0
        %2249 = vmatprep.subr.mxu0 %v685
        %2250 = vmatpush1.msra.mxu0 %v684
        %2251 = vmatprep.subr.mxu0 %v677
        %2252 = vmatpush1.msra.mxu0 %v676
        %2253 = vmatprep.subr.mxu0 %v669
        %2254 = vmatpush1.msra.mxu0 %v668
        %2255 = vmatprep.subr.mxu0 %v661
        %2256 = vmatpush1.msra.mxu0 %v660
        %2257 = vmatprep.subr.mxu0 %v653
        %2258 = vmatpush1.msra.mxu0 %v652
        %2259 = vmatprep.subr.mxu0 %v645
        %2260 = vmatpush1.msra.mxu0 %v644
        %2261 = vmatprep.subr.mxu0 %v637
        %2262 = vmatpush1.msra.mxu0 %v636
        %2263 = vmatprep.subr.mxu0 %v629
        %2264 = vmatpush1.msra.mxu0 %v628
        %2265 = vmatprep.subr.mxu0 %v621
        %2266 = vmatpush1.msra.mxu0 %v620
        %2267 = vmatprep.subr.mxu0 %v613
        %2268 = vmatpush1.msra.mxu0 %v612
        %2269 = vmatprep.subr.mxu0 %v605
        %2270 = vmatpush1.msra.mxu0 %v604
        %2271 = vmatprep.subr.mxu0 %v597
        %2272 = vmatpush1.msra.mxu0 %v596
        %2273 = vmatprep.subr.mxu0 %v589
        %2274 = vmatpush1.msra.mxu0 %v588
        %2275 = vmatprep.subr.mxu0 %v581
        %2276 = vmatpush1.msra.mxu0 %v580
        %2277 = vmatprep.subr.mxu0 %v573
        %2278 = vmatpush1.msra.mxu0 %v572
        %2279 = vmatprep.subr.mxu0 %v565
        %2280 = vmatpush1.msra.mxu0 %v564
        %2281 = vmatprep.subr.mxu0 %v813
        %2282 = vmatpush2.msra.mxu0 %v812
        %2283 = vmatprep.subr.mxu0 %v805
        %2284 = vmatpush2.msra.mxu0 %v804
        %2285 = vmatprep.subr.mxu0 %v797
        %2286 = vmatpush2.msra.mxu0 %v796
        %2287 = vmatprep.subr.mxu0 %v789
        %2288 = vmatpush2.msra.mxu0 %v788
        %2289 = vmatprep.subr.mxu0 %v781
        %2290 = vmatpush2.msra.mxu0 %v780
        %2291 = vmatprep.subr.mxu0 %v773
        %2292 = vmatpush2.msra.mxu0 %v772
        %2293 = vmatprep.subr.mxu0 %v765
        %2294 = vmatpush2.msra.mxu0 %v764
        %2295 = vmatprep.subr.mxu0 %v757
        %2296 = vmatpush2.msra.mxu0 %v756
        %2297 = vmatprep.subr.mxu0 %v749
        %2298 = vmatpush2.msra.mxu0 %v748
        %2299 = vmatprep.subr.mxu0 %v741
        %2300 = vmatpush2.msra.mxu0 %v740
        %2301 = vmatprep.subr.mxu0 %v733
        %2302 = vmatpush2.msra.mxu0 %v732
        %2303 = vmatprep.subr.mxu0 %v725
        %2304 = vmatpush2.msra.mxu0 %v724
        %2305 = vmatprep.subr.mxu0 %v717
        %2306 = vmatpush2.msra.mxu0 %v716
        %2307 = vmatprep.subr.mxu0 %v709
        %2308 = vmatpush2.msra.mxu0 %v708
        %2309 = vmatprep.subr.mxu0 %v701
        %2310 = vmatpush2.msra.mxu0 %v700
        %2311 = vmatprep.subr.mxu0 %v693
        %2312 = vmatpush2.msra.mxu0 %v692
        %2313 = vmatprep.mubr.f32.mxu0 %v297
        %2314 = vmatmul.mubr.f32.gmra.mxu0 %v296
        %v2315 = vpop.f32.mrf.mxu0
        %v2316 = vadd.f32 %v2245, %v2315
        %v2317 = vpop.f32.mrf.mxu0
        %v2318 = vadd.f32 %v2247, %v2317
        %2319 = vdwg.mxu0
        %2320 = vmatprep.subr.mxu0 %v941
        %2321 = vmatpush1.msra.mxu0 %v940
        %2322 = vmatprep.subr.mxu0 %v933
        %2323 = vmatpush1.msra.mxu0 %v932
        %2324 = vmatprep.subr.mxu0 %v925
        %2325 = vmatpush1.msra.mxu0 %v924
        %2326 = vmatprep.subr.mxu0 %v917
        %2327 = vmatpush1.msra.mxu0 %v916
        %2328 = vmatprep.subr.mxu0 %v909
        %2329 = vmatpush1.msra.mxu0 %v908
        %2330 = vmatprep.subr.mxu0 %v901
        %2331 = vmatpush1.msra.mxu0 %v900
        %2332 = vmatprep.subr.mxu0 %v893
        %2333 = vmatpush1.msra.mxu0 %v892
        %2334 = vmatprep.subr.mxu0 %v885
        %2335 = vmatpush1.msra.mxu0 %v884
        %2336 = vmatprep.subr.mxu0 %v877
        %2337 = vmatpush1.msra.mxu0 %v876
        %2338 = vmatprep.subr.mxu0 %v869
        %2339 = vmatpush1.msra.mxu0 %v868
        %2340 = vmatprep.subr.mxu0 %v861
        %2341 = vmatpush1.msra.mxu0 %v860
        %2342 = vmatprep.subr.mxu0 %v853
        %2343 = vmatpush1.msra.mxu0 %v852
        %2344 = vmatprep.subr.mxu0 %v845
        %2345 = vmatpush1.msra.mxu0 %v844
        %2346 = vmatprep.subr.mxu0 %v837
        %2347 = vmatpush1.msra.mxu0 %v836
        %2348 = vmatprep.subr.mxu0 %v829
        %2349 = vmatpush1.msra.mxu0 %v828
        %2350 = vmatprep.subr.mxu0 %v821
        %2351 = vmatpush1.msra.mxu0 %v820
        %2352 = vmatprep.subr.mxu0 %v1069
        %2353 = vmatpush2.msra.mxu0 %v1068
        %2354 = vmatprep.subr.mxu0 %v1061
        %2355 = vmatpush2.msra.mxu0 %v1060
        %2356 = vmatprep.subr.mxu0 %v1053
        %2357 = vmatpush2.msra.mxu0 %v1052
        %2358 = vmatprep.subr.mxu0 %v1045
        %2359 = vmatpush2.msra.mxu0 %v1044
        %2360 = vmatprep.subr.mxu0 %v1037
        %2361 = vmatpush2.msra.mxu0 %v1036
        %2362 = vmatprep.subr.mxu0 %v1029
        %2363 = vmatpush2.msra.mxu0 %v1028
        %2364 = vmatprep.subr.mxu0 %v1021
        %2365 = vmatpush2.msra.mxu0 %v1020
        %2366 = vmatprep.subr.mxu0 %v1013
        %2367 = vmatpush2.msra.mxu0 %v1012
        %2368 = vmatprep.subr.mxu0 %v1005
        %2369 = vmatpush2.msra.mxu0 %v1004
        %2370 = vmatprep.subr.mxu0 %v997
        %2371 = vmatpush2.msra.mxu0 %v996
        %2372 = vmatprep.subr.mxu0 %v989
        %2373 = vmatpush2.msra.mxu0 %v988
        %2374 = vmatprep.subr.mxu0 %v981
        %2375 = vmatpush2.msra.mxu0 %v980
        %2376 = vmatprep.subr.mxu0 %v973
        %2377 = vmatpush2.msra.mxu0 %v972
        %2378 = vmatprep.subr.mxu0 %v965
        %2379 = vmatpush2.msra.mxu0 %v964
        %2380 = vmatprep.subr.mxu0 %v957
        %2381 = vmatpush2.msra.mxu0 %v956
        %2382 = vmatprep.subr.mxu0 %v949
        %2383 = vmatpush2.msra.mxu0 %v948
        %2384 = vmatprep.mubr.f32.mxu0 %v299
        %2385 = vmatmul.mubr.f32.gmra.mxu0 %v298
        %v2386 = vpop.f32.mrf.mxu0
        %v2387 = vadd.f32 %v2316, %v2386
        %v2388 = vpop.f32.mrf.mxu0
        %v2389 = vadd.f32 %v2318, %v2388
        %2390 = vdwg.mxu0
        %2391 = vmatprep.subr.mxu0 %v1197
        %2392 = vmatpush1.msra.mxu0 %v1196
        %2393 = vmatprep.subr.mxu0 %v1189
        %2394 = vmatpush1.msra.mxu0 %v1188
        %2395 = vmatprep.subr.mxu0 %v1181
        %2396 = vmatpush1.msra.mxu0 %v1180
        %2397 = vmatprep.subr.mxu0 %v1173
        %2398 = vmatpush1.msra.mxu0 %v1172
        %2399 = vmatprep.subr.mxu0 %v1165
        %2400 = vmatpush1.msra.mxu0 %v1164
        %2401 = vmatprep.subr.mxu0 %v1157
        %2402 = vmatpush1.msra.mxu0 %v1156
        %2403 = vmatprep.subr.mxu0 %v1149
        %2404 = vmatpush1.msra.mxu0 %v1148
        %2405 = vmatprep.subr.mxu0 %v1141
        %2406 = vmatpush1.msra.mxu0 %v1140
        %2407 = vmatprep.subr.mxu0 %v1133
        %2408 = vmatpush1.msra.mxu0 %v1132
        %2409 = vmatprep.subr.mxu0 %v1125
        %2410 = vmatpush1.msra.mxu0 %v1124
        %2411 = vmatprep.subr.mxu0 %v1117
        %2412 = vmatpush1.msra.mxu0 %v1116
        %2413 = vmatprep.subr.mxu0 %v1109
        %2414 = vmatpush1.msra.mxu0 %v1108
        %2415 = vmatprep.subr.mxu0 %v1101
        %2416 = vmatpush1.msra.mxu0 %v1100
        %2417 = vmatprep.subr.mxu0 %v1093
        %2418 = vmatpush1.msra.mxu0 %v1092
        %2419 = vmatprep.subr.mxu0 %v1085
        %2420 = vmatpush1.msra.mxu0 %v1084
        %2421 = vmatprep.subr.mxu0 %v1077
        %2422 = vmatpush1.msra.mxu0 %v1076
        %2423 = vmatprep.subr.mxu0 %v1325
        %2424 = vmatpush2.msra.mxu0 %v1324
        %2425 = vmatprep.subr.mxu0 %v1317
        %2426 = vmatpush2.msra.mxu0 %v1316
        %2427 = vmatprep.subr.mxu0 %v1309
        %2428 = vmatpush2.msra.mxu0 %v1308
        %2429 = vmatprep.subr.mxu0 %v1301
        %2430 = vmatpush2.msra.mxu0 %v1300
        %2431 = vmatprep.subr.mxu0 %v1293
        %2432 = vmatpush2.msra.mxu0 %v1292
        %2433 = vmatprep.subr.mxu0 %v1285
        %2434 = vmatpush2.msra.mxu0 %v1284
        %2435 = vmatprep.subr.mxu0 %v1277
        %2436 = vmatpush2.msra.mxu0 %v1276
        %2437 = vmatprep.subr.mxu0 %v1269
        %2438 = vmatpush2.msra.mxu0 %v1268
        %2439 = vmatprep.subr.mxu0 %v1261
        %2440 = vmatpush2.msra.mxu0 %v1260
        %2441 = vmatprep.subr.mxu0 %v1253
        %2442 = vmatpush2.msra.mxu0 %v1252
        %2443 = vmatprep.subr.mxu0 %v1245
        %2444 = vmatpush2.msra.mxu0 %v1244
        %2445 = vmatprep.subr.mxu0 %v1237
        %2446 = vmatpush2.msra.mxu0 %v1236
        %2447 = vmatprep.subr.mxu0 %v1229
        %2448 = vmatpush2.msra.mxu0 %v1228
        %2449 = vmatprep.subr.mxu0 %v1221
        %2450 = vmatpush2.msra.mxu0 %v1220
        %2451 = vmatprep.subr.mxu0 %v1213
        %2452 = vmatpush2.msra.mxu0 %v1212
        %2453 = vmatprep.subr.mxu0 %v1205
        %2454 = vmatpush2.msra.mxu0 %v1204
        %2455 = vmatprep.mubr.f32.mxu0 %v301
        %2456 = vmatmul.mubr.f32.gmra.mxu0 %v300
        %v2457 = vpop.f32.mrf.mxu0
        %v2458 = vadd.f32 %v2387, %v2457
        %v2459 = vpop.f32.mrf.mxu0
        %v2460 = vadd.f32 %v2389, %v2459
        %2461 = vdwg.mxu0
        %v2462 = vld [vmem:[%s3] sm:$0xff]
        %2464 = vset.pattern.permute.xlu0 0
        %2465 = vperm.xlu0 %2464, %v2462
        %v2466 = vpop.permute.xlu0 %2465
        %v2468 = vmul.f32 %v1606, %v2466
        %v2469 = vmul.f32 %v1608, %v2466
        %v2470 = vmul.f32 %v1890, %v2466
        %v2471 = vmul.f32 %v1892, %v2466
        %v2472 = vmul.f32 %v2174, %v2466
        %v2473 = vmul.f32 %v2176, %v2466
        %v2474 = vmul.f32 %v2458, %v2466
        %v2475 = vmul.f32 %v2460, %v2466
        %v2476 = vld [vmem:[%s259] sm:$0xff]
        %v2478 = vlaneseq
        %v2479 = vshrl.u32 %v2478, 7
        %v2480 = vsub.s32 0, %v2479
        %v2481 = vrot.slane %v2476, %v2480
        %v2482 = vlaneseq
        %v2483 = vshrl.u32 %v2482, 7
        %v2484 = vsub.s32 1, %v2483
        %v2485 = vrot.slane %v2476, %v2484
        %v2486 = vlaneseq
        %v2487 = vshrl.u32 %v2486, 7
        %v2488 = vsub.s32 2, %v2487
        %v2489 = vrot.slane %v2476, %v2488
        %v2490 = vlaneseq
        %v2491 = vshrl.u32 %v2490, 7
        %v2492 = vsub.s32 3, %v2491
        %v2493 = vrot.slane %v2476, %v2492
        %v2494 = vlaneseq
        %v2495 = vshrl.u32 %v2494, 7
        %v2496 = vsub.s32 4, %v2495
        %v2497 = vrot.slane %v2476, %v2496
        %v2498 = vlaneseq
        %v2499 = vshrl.u32 %v2498, 7
        %v2500 = vsub.s32 5, %v2499
        %v2501 = vrot.slane %v2476, %v2500
        %v2502 = vlaneseq
        %v2503 = vshrl.u32 %v2502, 7
        %v2504 = vsub.s32 6, %v2503
        %v2505 = vrot.slane %v2476, %v2504
        %v2506 = vlaneseq
        %v2507 = vshrl.u32 %v2506, 7
        %v2508 = vsub.s32 7, %v2507
        %v2509 = vrot.slane %v2476, %v2508
        %v2518 = vmul.f32 %v2468, %v2481
        %v2519 = vmul.f32 %v2469, %v2485
        %v2520 = vmul.f32 %v2470, %v2489
        %v2521 = vmul.f32 %v2471, %v2493
        %v2522 = vmul.f32 %v2472, %v2497
        %v2523 = vmul.f32 %v2473, %v2501
        %v2524 = vmul.f32 %v2474, %v2505
        %v2525 = vmul.f32 %v2475, %v2509
        %s2526 = smul.u32 %s23, 1024
        %v2527 = vlaneseq
        %v2528 = vand.u32 %v2527, 127
        %v2529 = vadd.s32 %v2528, 128
        %v2530 = vadd.s32 %v2528, 256
        %v2531 = vadd.s32 %v2528, 384
        %v2532 = vadd.s32 %v2528, 512
        %v2533 = vadd.s32 %v2528, 640
        %v2534 = vadd.s32 %v2528, 768
        %v2535 = vadd.s32 %v2528, 896
        %v2536 = vstv %s2526
        %v2537 = vadd.s32 %v2536, %v2528
        %v2538 = vadd.s32 %v2536, %v2529
        %v2539 = vadd.s32 %v2536, %v2530
        %v2540 = vadd.s32 %v2536, %v2531
        %v2541 = vadd.s32 %v2536, %v2532
        %v2542 = vadd.s32 %v2536, %v2533
        %v2543 = vadd.s32 %v2536, %v2534
        %v2544 = vadd.s32 %v2536, %v2535
        %v2545 = vld [vmem:[%s4] sm:$0xff]
        %2546 = vset.pattern.permute.xlu0 0
        %2547 = vperm.xlu0 %2546, %v2545
        %v2548 = vpop.permute.xlu0 %2547
        %vm2549 = vcmp.eq.s32.totalorder %v2537, %v2548
        %vm2550 = vcmp.eq.s32.totalorder %v2538, %v2548
        %vm2551 = vcmp.eq.s32.totalorder %v2539, %v2548
        %vm2552 = vcmp.eq.s32.totalorder %v2540, %v2548
        %vm2553 = vcmp.eq.s32.totalorder %v2541, %v2548
        %vm2554 = vcmp.eq.s32.totalorder %v2542, %v2548
        %vm2555 = vcmp.eq.s32.totalorder %v2543, %v2548
        %vm2556 = vcmp.eq.s32.totalorder %v2544, %v2548
        %v2557 = vsel %vm2549, 1, 0
        %v2558 = vsel %vm2550, 1, 0
        %v2559 = vsel %vm2551, 1, 0
        %v2560 = vsel %vm2552, 1, 0
        %v2561 = vsel %vm2553, 1, 0
        %v2562 = vsel %vm2554, 1, 0
        %v2563 = vsel %vm2555, 1, 0
        %v2564 = vsel %vm2556, 1, 0
        %v2565 = vcvt.s32.f32 %v2557
        %v2566 = vcvt.s32.f32 %v2558
        %v2567 = vcvt.s32.f32 %v2559
        %v2568 = vcvt.s32.f32 %v2560
        %v2569 = vcvt.s32.f32 %v2561
        %v2570 = vcvt.s32.f32 %v2562
        %v2571 = vcvt.s32.f32 %v2563
        %v2572 = vcvt.s32.f32 %v2564
        %v2573 = vmul.f32 %v2518, %v2518
        %v2574 = vmul.f32 %v2519, %v2519
        %v2575 = vmul.f32 %v2520, %v2520
        %v2576 = vmul.f32 %v2521, %v2521
        %v2577 = vmul.f32 %v2522, %v2522
        %v2578 = vmul.f32 %v2523, %v2523
        %v2579 = vmul.f32 %v2524, %v2524
        %v2580 = vmul.f32 %v2525, %v2525
        %v2581 = vsub.f32 1.0, %v2573
        %v2582 = vsub.f32 1.0, %v2574
        %v2583 = vsub.f32 1.0, %v2575
        %v2584 = vsub.f32 1.0, %v2576
        %v2585 = vsub.f32 1.0, %v2577
        %v2586 = vsub.f32 1.0, %v2578
        %v2587 = vsub.f32 1.0, %v2579
        %v2588 = vsub.f32 1.0, %v2580
        %v2589 = vmax.f32 %v2581, 0.0
        %v2590 = vmax.f32 %v2582, 0.0
        %v2591 = vmax.f32 %v2583, 0.0
        %v2592 = vmax.f32 %v2584, 0.0
        %v2593 = vmax.f32 %v2585, 0.0
        %v2594 = vmax.f32 %v2586, 0.0
        %v2595 = vmax.f32 %v2587, 0.0
        %v2596 = vmax.f32 %v2588, 0.0
        %v2597 = vrsqrt.pop %v2589
        %v2598 = vmul.f32 %v2589, %v2597
        %vm2599 = vcmp.eq.f32.partialorder %v2589, inf
        %v2600 = vsel %vm2599, %v2589, %v2598
        %vm2601 = vcmp.eq.f32.partialorder %v2589, 0.0
        %v2602 = vand.u32 %v2589, 2147483648
        %v2603 = vsel %vm2601, %v2602, %v2600
        %v2604 = vrsqrt.pop %v2590
        %v2605 = vmul.f32 %v2590, %v2604
        %vm2606 = vcmp.eq.f32.partialorder %v2590, inf
        %v2607 = vsel %vm2606, %v2590, %v2605
        %vm2608 = vcmp.eq.f32.partialorder %v2590, 0.0
        %v2609 = vand.u32 %v2590, 2147483648
        %v2610 = vsel %vm2608, %v2609, %v2607
        %v2611 = vrsqrt.pop %v2591
        %v2612 = vmul.f32 %v2591, %v2611
        %vm2613 = vcmp.eq.f32.partialorder %v2591, inf
        %v2614 = vsel %vm2613, %v2591, %v2612
        %vm2615 = vcmp.eq.f32.partialorder %v2591, 0.0
        %v2616 = vand.u32 %v2591, 2147483648
        %v2617 = vsel %vm2615, %v2616, %v2614
        %v2618 = vrsqrt.pop %v2592
        %v2619 = vmul.f32 %v2592, %v2618
        %vm2620 = vcmp.eq.f32.partialorder %v2592, inf
        %v2621 = vsel %vm2620, %v2592, %v2619
        %vm2622 = vcmp.eq.f32.partialorder %v2592, 0.0
        %v2623 = vand.u32 %v2592, 2147483648
        %v2624 = vsel %vm2622, %v2623, %v2621
        %v2625 = vrsqrt.pop %v2593
        %v2626 = vmul.f32 %v2593, %v2625
        %vm2627 = vcmp.eq.f32.partialorder %v2593, inf
        %v2628 = vsel %vm2627, %v2593, %v2626
        %vm2629 = vcmp.eq.f32.partialorder %v2593, 0.0
        %v2630 = vand.u32 %v2593, 2147483648
        %v2631 = vsel %vm2629, %v2630, %v2628
        %v2632 = vrsqrt.pop %v2594
        %v2633 = vmul.f32 %v2594, %v2632
        %vm2634 = vcmp.eq.f32.partialorder %v2594, inf
        %v2635 = vsel %vm2634, %v2594, %v2633
        %vm2636 = vcmp.eq.f32.partialorder %v2594, 0.0
        %v2637 = vand.u32 %v2594, 2147483648
        %v2638 = vsel %vm2636, %v2637, %v2635
        %v2639 = vrsqrt.pop %v2595
        %v2640 = vmul.f32 %v2595, %v2639
        %vm2641 = vcmp.eq.f32.partialorder %v2595, inf
        %v2642 = vsel %vm2641, %v2595, %v2640
        %vm2643 = vcmp.eq.f32.partialorder %v2595, 0.0
        %v2644 = vand.u32 %v2595, 2147483648
        %v2645 = vsel %vm2643, %v2644, %v2642
        %v2646 = vrsqrt.pop %v2596
        %v2647 = vmul.f32 %v2596, %v2646
        %vm2648 = vcmp.eq.f32.partialorder %v2596, inf
        %v2649 = vsel %vm2648, %v2596, %v2647
        %vm2650 = vcmp.eq.f32.partialorder %v2596, 0.0
        %v2651 = vand.u32 %v2596, 2147483648
        %v2652 = vsel %vm2650, %v2651, %v2649
        %v2653 = vmul.f32 %v2518, 0.9553365
        %v2654 = vmul.f32 %v2519, 0.9553365
        %v2655 = vmul.f32 %v2520, 0.9553365
        %v2656 = vmul.f32 %v2521, 0.9553365
        %v2657 = vmul.f32 %v2522, 0.9553365
        %v2658 = vmul.f32 %v2523, 0.9553365
        %v2659 = vmul.f32 %v2524, 0.9553365
        %v2660 = vmul.f32 %v2525, 0.9553365
        %v2661 = vmul.f32 %v2603, 0.29552022
        %v2662 = vmul.f32 %v2610, 0.29552022
        %v2663 = vmul.f32 %v2617, 0.29552022
        %v2664 = vmul.f32 %v2624, 0.29552022
        %v2665 = vmul.f32 %v2631, 0.29552022
        %v2666 = vmul.f32 %v2638, 0.29552022
        %v2667 = vmul.f32 %v2645, 0.29552022
        %v2668 = vmul.f32 %v2652, 0.29552022
        %v2669 = vsub.f32 %v2653, %v2661
        %v2670 = vsub.f32 %v2654, %v2662
        %v2671 = vsub.f32 %v2655, %v2663
        %v2672 = vsub.f32 %v2656, %v2664
        %v2673 = vsub.f32 %v2657, %v2665
        %v2674 = vsub.f32 %v2658, %v2666
        %v2675 = vsub.f32 %v2659, %v2667
        %v2676 = vsub.f32 %v2660, %v2668
        %v2677 = vmul.f32 %v2669, %v2565
        %v2678 = vmul.f32 %v2670, %v2566
        %v2679 = vmul.f32 %v2671, %v2567
        %v2680 = vmul.f32 %v2672, %v2568
        %v2681 = vmul.f32 %v2673, %v2569
        %v2682 = vmul.f32 %v2674, %v2570
        %v2683 = vmul.f32 %v2675, %v2571
        %v2684 = vmul.f32 %v2676, %v2572
        %v2685 = vsub.f32 1.0, %v2565
        %v2686 = vsub.f32 1.0, %v2566
        %v2687 = vsub.f32 1.0, %v2567
        %v2688 = vsub.f32 1.0, %v2568
        %v2689 = vsub.f32 1.0, %v2569
        %v2690 = vsub.f32 1.0, %v2570
        %v2691 = vsub.f32 1.0, %v2571
        %v2692 = vsub.f32 1.0, %v2572
        %v2693 = vmul.f32 %v2518, %v2685
        %v2694 = vmul.f32 %v2519, %v2686
        %v2695 = vmul.f32 %v2520, %v2687
        %v2696 = vmul.f32 %v2521, %v2688
        %v2697 = vmul.f32 %v2522, %v2689
        %v2698 = vmul.f32 %v2523, %v2690
        %v2699 = vmul.f32 %v2524, %v2691
        %v2700 = vmul.f32 %v2525, %v2692
        %v2701 = vadd.f32 %v2677, %v2693
        %v2702 = vadd.f32 %v2678, %v2694
        %v2703 = vadd.f32 %v2679, %v2695
        %v2704 = vadd.f32 %v2680, %v2696
        %v2705 = vadd.f32 %v2681, %v2697
        %v2706 = vadd.f32 %v2682, %v2698
        %v2707 = vadd.f32 %v2683, %v2699
        %v2708 = vadd.f32 %v2684, %v2700
        %v2709 = vmul.f32 %v2701, 30.0
        %v2710 = vmul.f32 %v2702, 30.0
        %v2711 = vmul.f32 %v2703, 30.0
        %v2712 = vmul.f32 %v2704, 30.0
        %v2713 = vmul.f32 %v2705, 30.0
        %v2714 = vmul.f32 %v2706, 30.0
        %v2715 = vmul.f32 %v2707, 30.0
        %v2716 = vmul.f32 %v2708, 30.0
        %2717 = vst [vmem:[%s290] sm:$0xff] %v2709
        %2718 = vst [vmem:[%s290 + $0x8] sm:$0xff] %v2710
        %2719 = vst [vmem:[%s290 + $0x10] sm:$0xff] %v2711
        %2720 = vst [vmem:[%s290 + $0x18] sm:$0xff] %v2712
        %2721 = vst [vmem:[%s290 + $0x20] sm:$0xff] %v2713
        %2722 = vst [vmem:[%s290 + $0x28] sm:$0xff] %v2714
        %2723 = vst [vmem:[%s290 + $0x30] sm:$0xff] %v2715
        %2724 = vst [vmem:[%s290 + $0x38] sm:$0xff] %v2716
        %s2725 = sand.u32 %s146, 1
        %s2726 = scalar_lea.sflag [#allocation4], %s2725
        %s2727 = sand.u32 %s146, 1
        %s2728 = smul.addr %s2727, 64
        %s2729 = scalar_lea.vmem [#allocation8], %s2728
        // Predicated region
        $region53: #{tpu_custom_call.1} parent=39 // pred_check
          %p2730 = pneg %p156
        $region54: #{tpu_custom_call.1} parent=39 // pred_check_branch
          %2732 = sbr.rel (%p2730) target = $region56
        $region55: #{tpu_custom_call.1} parent=39 // pred_region
          %s2733 = smul.u32 8, %s23
          %s2735 = ssub.s32 1024, 1024
          %2736 = vsyncadd %s2726, %s2735
          %s2737 = smul.addr %s2733, 128
          %s2738 = scalar_lea.hbm %s5, %s2737
          %s2740 = sshll.u32 %s2729, 4
          %s2741 = int_to_ptr.vmem [resolvable:$true] %s2740
          %2743 = dma.vmem_to_hbm [thread:$0]  %s2741, 1024, %s2738, %s2726
        $region56: #{tpu_custom_call.1} parent=39 // pred_fallthru
          _
      $region40: #{tpu_custom_call.1} parent=5 // pred_fallthru
        _
      %p2744 = scmp.le.s32.totalorder 2, %s18
      // Predicated region
      $region57: #{tpu_custom_call.1} parent=5 // pred_check
        %p2745 = pneg %p2744
      $region58: #{tpu_custom_call.1} parent=5 // pred_check_branch
        %2747 = sbr.rel (%p2745) target = $region60
      $region59: #{tpu_custom_call.1} parent=5 // pred_region
        %s2748 = ssub.s32 %s18, 2
        // Predicated region
        $region61: #{tpu_custom_call.1} parent=59 // pred_check
          %p2749 = pneg %p162
        $region62: #{tpu_custom_call.1} parent=59 // pred_check_branch
          %2751 = sbr.rel (%p2749) target = $region64
        $region63: #{tpu_custom_call.1} parent=59 // pred_region
          %s2752 = sand.u32 %s147, 1
          %s2753 = scalar_lea.sflag [#allocation4], %s2752
          %s2754 = sand.u32 %s147, 1
          %s2755 = smul.addr %s2754, 64
          %s2756 = scalar_lea.vmem [#allocation8], %s2755
          %2757 = dma.done %s2753, 1024
        $region64: #{tpu_custom_call.1} parent=59 // pred_fallthru
          _
      $region60: #{tpu_custom_call.1} parent=5 // pred_fallthru
        _
    $region6: #{tpu_custom_call.1} parent=1 // loop_footer
      %s22 = sadd.s32 1, %s18
    $region7: #{tpu_custom_call.1} parent=1 // loop_footer_branch
      %17 = sbr.rel target = $region3
    $region8: #{tpu_custom_call.1} parent=1 // loop_exit
      _
    %2758 = vsyncpa [#allocation3], 1
    %s2759 = scalar_lea.sflag [#allocation3], 1
    %2760 = vsyncpa %s2759, 1
    %2761 = vsyncpa [#allocation6], 1
    %s2762 = scalar_lea.sflag [#allocation6], 1
    %2763 = vsyncpa %s2762, 1
    %2764 = vsyncpa [#allocation4], 1
    %s2765 = scalar_lea.sflag [#allocation4], 1
    %2766 = vsyncpa %s2765, 1

</llo_original>
